<compile_context>
chip_gen: v7x
topology: tpu7x:2x2x1
jax: 0.10.0
libtpu: 0.0.40
codegen_flags: <defaults>
</compile_context>

<pallas_src>
import functools

import jax
import jax.numpy as jnp
from jax import lax
from jax.experimental import pallas as pl
from jax.experimental.pallas import tpu as pltpu


# ------------------------------- helpers ------------------------------------ #

def _round_up(n, m):
    return ((n + m - 1) // m) * m


def _pad_gate_weight(w_t, h, h_pad, rows_pad):
    """w_t: (rows, 4*h) input-major weight.  Returns (rows_pad, 4*h_pad) with each
    of the 4 gate blocks placed lane-aligned at column g*h_pad (zeros elsewhere)."""
    rows = w_t.shape[0]
    out = jnp.zeros((rows_pad, 4 * h_pad), w_t.dtype)
    for g in range(4):
        out = out.at[:rows, g * h_pad:g * h_pad + h].set(w_t[:, g * h:(g + 1) * h])
    return out


def _pad_gate_bias(b, h, h_pad):
    out = jnp.zeros((1, 4 * h_pad), b.dtype)
    for g in range(4):
        out = out.at[0, g * h_pad:g * h_pad + h].set(b[g * h:(g + 1) * h])
    return out


def prepare_params(params, input_dim, hidden_dim):
    """One-time conversion of torch-layout params into padded, transposed,
    gate-lane-aligned kernel weights (hoisted out of the per-call path)."""
    H = hidden_dim
    Hp = _round_up(H, 128)
    layers = []
    d_in = input_dim
    for layer in params["lstm"]:
        d_in_p = _round_up(d_in, 128)
        wih_t = jnp.transpose(layer["w_ih"])          # (d_in, 4H)
        whh_t = jnp.transpose(layer["w_hh"])          # (H, 4H)
        bias = layer["b_ih"] + layer["b_hh"]          # (4H,)
        layers.append({
            "wih": _pad_gate_weight(wih_t, H, Hp, d_in_p),   # (d_in_p, 4Hp)
            "whh": _pad_gate_weight(whh_t, H, Hp, Hp),       # (Hp, 4Hp)
            "b":   _pad_gate_bias(bias, H, Hp),              # (1, 4Hp)
        })
        d_in = hidden_dim
    O = params["fc_w"].shape[0]
    Op = _round_up(O, 128)
    fcw = jnp.zeros((Hp, Op), jnp.float32).at[:H, :O].set(jnp.transpose(params["fc_w"]))
    fcb = jnp.zeros((1, Op), jnp.float32).at[0, :O].set(params["fc_b"])
    return {"layers": layers, "fcw": fcw, "fcb": fcb}


# ----------------------------- fused Pallas kernel --------------------------- #

def _fused_lstm_fc_kernel(*refs, num_layers):
    """All LSTM layers + FC head in one kernel.

    refs = [x_flat,
            (wih_0, whh_0, b_0), ..., (wih_{L-1}, whh_{L-1}, b_{L-1}),
            fcw, fcb,                       # inputs
            out,                            # output  (B_pad, O_pad)
            hseq, gates, h, c]              # VMEM scratch
    x_flat : (T*B_pad, D_pad)  time-major, batch/feature padded, flattened.
    hseq   : (T*B_pad, H_pad)  inter-layer hidden sequence (never hits HBM).
    gates  : (T*B_pad, 4*H_pad) pre-computed input-projection for the whole sequence.
    """
    x_ref = refs[0]
    layer_refs = refs[1:1 + 3 * num_layers]
    fcw_ref, fcb_ref, out_ref, hseq_scr, gates_scr, h_scr, c_scr = refs[1 + 3 * num_layers:]

    Bp = h_scr.shape[0]
    Hp = h_scr.shape[1]
    T = x_ref.shape[0] // Bp

    for l in range(num_layers):
        wih = layer_refs[3 * l][...]       # (D_in_pad, 4Hp)
        whh = layer_refs[3 * l + 1][...]   # (Hp, 4Hp)
        b = layer_refs[3 * l + 2][...]     # (1, 4Hp)

        # ---- hoisted input projection: one MXU-shaped GEMM for the whole sequence
        src = x_ref if l == 0 else hseq_scr
        gates_scr[...] = (jnp.dot(src[...], wih,
                                  preferred_element_type=jnp.float32) + b)

        h_scr[...] = jnp.zeros_like(h_scr)
        c_scr[...] = jnp.zeros_like(c_scr)

        keep_seq = l < num_layers - 1      # last layer's sequence is dead data

        def step(t, carry):
            row = pl.multiple_of(t * Bp, Bp)
            h = h_scr[...]
            c = c_scr[...]
            # only the unavoidable recurrent matmul stays inside the time loop
            gates = (gates_scr[pl.ds(row, Bp), :]
                     + jnp.dot(h, whh, preferred_element_type=jnp.float32))
            # gate slices are lane-aligned (each gate = one 128-lane block)
            i_g = jax.nn.sigmoid(gates[:, 0 * Hp:1 * Hp])
            f_g = jax.nn.sigmoid(gates[:, 1 * Hp:2 * Hp])
            g_g = jnp.tanh(gates[:, 2 * Hp:3 * Hp])
            o_g = jax.nn.sigmoid(gates[:, 3 * Hp:4 * Hp])
            c_new = f_g * c + i_g * g_g
            h_new = o_g * jnp.tanh(c_new)
            h_scr[...] = h_new
            c_scr[...] = c_new
            if keep_seq:
                hseq_scr[pl.ds(row, Bp), :] = h_new
            return carry

        # short static trip count -> fully unrolled for LLO scheduling visibility
        lax.fori_loop(0, T, step, 0, unroll=True)

    # FC head fused in-kernel on the final hidden state; lane-dense (Bp, O_pad) store.
    out_ref[...] = (jnp.dot(h_scr[...], fcw_ref[...],
                            preferred_element_type=jnp.float32)
                    + fcb_ref[...]).astype(out_ref.dtype)


# ------------------------------ JAX wrapper ---------------------------------- #

@functools.partial(jax.jit, static_argnames=("out_dim",))
def lstm_classifier_forward(x, prepped, *, out_dim):
    """x: (B, T, input_dim) batch-first, like the PyTorch module."""
    B, T, D = x.shape
    layers = prepped["layers"]
    L = len(layers)
    Hp = layers[0]["whh"].shape[0]
    Dp = layers[0]["wih"].shape[0]
    Op = prepped["fcw"].shape[1]
    Bp = max(8, _round_up(B, 8))           # f32 sublane multiple

    # batch-first -> time-major, pad batch/features, flatten (T, Bp) so the kernel
    # sees a sublane/lane-aligned 2D slab (no in-kernel reshapes needed).
    x_tm = jnp.transpose(x, (1, 0, 2))                                  # (T, B, D)
    x_pad = jnp.zeros((T, Bp, Dp), jnp.float32).at[:, :B, :D].set(x_tm)
    x_flat = x_pad.reshape(T * Bp, Dp)                                  # (T*Bp, Dp)

    flat_w = []
    in_specs = [pl.BlockSpec((T * Bp, Dp), lambda i: (0, 0))]
    for lyr in layers:
        flat_w += [lyr["wih"], lyr["whh"], lyr["b"]]
        in_specs += [
            pl.BlockSpec(lyr["wih"].shape, lambda i: (0, 0)),
            pl.BlockSpec(lyr["whh"].shape, lambda i: (0, 0)),
            pl.BlockSpec(lyr["b"].shape, lambda i: (0, 0)),
        ]
    in_specs += [
        pl.BlockSpec(prepped["fcw"].shape, lambda i: (0, 0)),
        pl.BlockSpec(prepped["fcb"].shape, lambda i: (0, 0)),
    ]

    # NOTE: everything here is VMEM-resident by design (the recurrence needs the
    # whole sequence anyway); at these shapes total VMEM use is < 2 MiB, well
    # under the 32 MiB default scoped limit on v5e/v6e/v7x.
    # TODO(synk): for large T/B, tile the batch over a "parallel" grid axis
    # (2 TensorCores on v7x) and stream T-chunks of the input projection.
    out_pad = pl.pallas_call(
        functools.partial(_fused_lstm_fc_kernel, num_layers=L),
        out_shape=jax.ShapeDtypeStruct((Bp, Op), jnp.float32),
        grid=(1,),
        in_specs=in_specs,
        out_specs=pl.BlockSpec((Bp, Op), lambda i: (0, 0)),
        scratch_shapes=[
            pltpu.VMEM((T * Bp, Hp), jnp.float32),       # inter-layer hidden sequence
            pltpu.VMEM((T * Bp, 4 * Hp), jnp.float32),   # precomputed input-proj gates
            pltpu.VMEM((Bp, Hp), jnp.float32),           # h state
            pltpu.VMEM((Bp, Hp), jnp.float32),           # c state
        ],
        compiler_params=pltpu.CompilerParams(
            dimension_semantics=("arbitrary",)),
    )(x_flat, *flat_w, prepped["fcw"], prepped["fcb"])

    return out_pad[:B, :out_dim]


# ------------------------- deterministic init & reference -------------------- #

def init_params(key, input_dim, hidden_dim, layer_dim, output_dim):
    params = {"lstm": []}
    bound = 1.0 / jnp.sqrt(hidden_dim)
    for l in range(layer_dim):
        d_in = input_dim if l == 0 else hidden_dim
        key, k1, k2, k3, k4 = jax.random.split(key, 5)
        params["lstm"].append({
            "w_ih": jax.random.uniform(k1, (4 * hidden_dim, d_in),
                                       minval=-bound, maxval=bound, dtype=jnp.float32),
            "w_hh": jax.random.uniform(k2, (4 * hidden_dim, hidden_dim),
                                       minval=-bound, maxval=bound, dtype=jnp.float32),
            "b_ih": jax.random.uniform(k3, (4 * hidden_dim,),
                                       minval=-bound, maxval=bound, dtype=jnp.float32),
            "b_hh": jax.random.uniform(k4, (4 * hidden_dim,),
                                       minval=-bound, maxval=bound, dtype=jnp.float32),
        })
    key, k5, k6 = jax.random.split(key, 3)
    fc_bound = 1.0 / jnp.sqrt(hidden_dim)
    params["fc_w"] = jax.random.uniform(k5, (output_dim, hidden_dim),
                                        minval=-fc_bound, maxval=fc_bound, dtype=jnp.float32)
    params["fc_b"] = jax.random.uniform(k6, (output_dim,),
                                        minval=-fc_bound, maxval=fc_bound, dtype=jnp.float32)
    return params


def reference_forward(x, params):
    """Pure-JAX reference matching torch.nn.LSTM + Linear semantics."""
    h_seq = jnp.transpose(x, (1, 0, 2))  # (T, B, D)
    for layer in params["lstm"]:
        wih_t = layer["w_ih"].T
        whh_t = layer["w_hh"].T
        bias = layer["b_ih"] + layer["b_hh"]
        H = layer["w_hh"].shape[1]
        B = h_seq.shape[1]

        def step(carry, x_t):
            h, c = carry
            gates = x_t @ wih_t + h @ whh_t + bias
            i_g = jax.nn.sigmoid(gates[:, 0 * H:1 * H])
            f_g = jax.nn.sigmoid(gates[:, 1 * H:2 * H])
            g_g = jnp.tanh(gates[:, 2 * H:3 * H])
            o_g = jax.nn.sigmoid(gates[:, 3 * H:4 * H])
            c_new = f_g * c + i_g * g_g
            h_new = o_g * jnp.tanh(c_new)
            return (h_new, c_new), h_new

        init = (jnp.zeros((B, H), jnp.float32), jnp.zeros((B, H), jnp.float32))
        _, h_seq = lax.scan(step, init, h_seq)
    h_last = h_seq[-1]
    return h_last @ params["fc_w"].T + params["fc_b"]


# ---------------------------------- main ------------------------------------- #

if __name__ == "__main__":
    # batch=2, seq_len=8, input_dim=16, hidden_dim=32, layer_dim=2, output_dim=4
    B, T, D, H, L, O = 2, 8, 16, 32, 2, 4

    key = jax.random.PRNGKey(0)
    key, xk = jax.random.split(key)
    x = jax.random.normal(xk, (B, T, D), dtype=jnp.float32)

    params = init_params(key, D, H, L, O)
    prepped = prepare_params(params, D, H)   # one-time transpose / pad / bias-combine

    out = lstm_classifier_forward(x, prepped, out_dim=O)
    out = jax.block_until_ready(out)

    ref = reference_forward(x, params)
    assert out.shape == (B, O), out.shape
    assert jnp.allclose(out, ref, atol=2e-4, rtol=2e-4), (out, ref)

    print("KERNEL_OK")
</pallas_src>

<mosaic_0001>
module attributes {stable_mosaic.version = 11 : i64} {
  func.func @_fused_lstm_fc_kernel(%arg0: i32, %arg1: memref<64x128xf32, #tpu.memory_space<vmem>>, %arg2: memref<128x512xf32, #tpu.memory_space<vmem>>, %arg3: memref<128x512xf32, #tpu.memory_space<vmem>>, %arg4: memref<1x512xf32, #tpu.memory_space<vmem>>, %arg5: memref<128x512xf32, #tpu.memory_space<vmem>>, %arg6: memref<128x512xf32, #tpu.memory_space<vmem>>, %arg7: memref<1x512xf32, #tpu.memory_space<vmem>>, %arg8: memref<128x128xf32, #tpu.memory_space<vmem>>, %arg9: memref<1x128xf32, #tpu.memory_space<vmem>>, %arg10: memref<8x128xf32, #tpu.memory_space<vmem>>, %arg11: memref<64x128xf32, #tpu.memory_space<vmem>>, %arg12: memref<64x512xf32, #tpu.memory_space<vmem>>, %arg13: memref<8x128xf32, #tpu.memory_space<vmem>>, %arg14: memref<8x128xf32, #tpu.memory_space<vmem>>) attributes {dimension_semantics = [#tpu.dimension_semantics<arbitrary>], iteration_bounds = array<i64: 1>, scalar_prefetch = 0 : i64, scratch_operands = 4 : i64, tpu.core_type = #tpu.core_type<tc>, window_params = [{pipeline_mode = #tpu.pipeline_mode<synchronous>, transform_indices = @transform_0, window_bounds = array<i64: 64, 128>}, {pipeline_mode = #tpu.pipeline_mode<synchronous>, transform_indices = @transform_1, window_bounds = array<i64: 128, 512>}, {pipeline_mode = #tpu.pipeline_mode<synchronous>, transform_indices = @transform_2, window_bounds = array<i64: 128, 512>}, {pipeline_mode = #tpu.pipeline_mode<synchronous>, transform_indices = @transform_3, window_bounds = array<i64: 1, 512>}, {pipeline_mode = #tpu.pipeline_mode<synchronous>, transform_indices = @transform_4, window_bounds = array<i64: 128, 512>}, {pipeline_mode = #tpu.pipeline_mode<synchronous>, transform_indices = @transform_5, window_bounds = array<i64: 128, 512>}, {pipeline_mode = #tpu.pipeline_mode<synchronous>, transform_indices = @transform_6, window_bounds = array<i64: 1, 512>}, {pipeline_mode = #tpu.pipeline_mode<synchronous>, transform_indices = @transform_7, window_bounds = array<i64: 128, 128>}, {pipeline_mode = #tpu.pipeline_mode<synchronous>, transform_indices = @transform_8, window_bounds = array<i64: 1, 128>}, {pipeline_mode = #tpu.pipeline_mode<synchronous>, transform_indices = @transform_9, window_bounds = array<i64: 8, 128>}]} {
    %c0 = arith.constant 0 : index
    %c0_0 = arith.constant 0 : index
    %0 = vector.load %arg2[%c0, %c0_0] : memref<128x512xf32, #tpu.memory_space<vmem>>, vector<128x512xf32>
    %c0_1 = arith.constant 0 : index
    %c0_2 = arith.constant 0 : index
    %1 = vector.load %arg3[%c0_1, %c0_2] : memref<128x512xf32, #tpu.memory_space<vmem>>, vector<128x512xf32>
    %c0_3 = arith.constant 0 : index
    %c0_4 = arith.constant 0 : index
    %2 = vector.load %arg4[%c0_3, %c0_4] : memref<1x512xf32, #tpu.memory_space<vmem>>, vector<1x512xf32>
    %c0_5 = arith.constant 0 : index
    %c0_6 = arith.constant 0 : index
    %3 = vector.load %arg1[%c0_5, %c0_6] : memref<64x128xf32, #tpu.memory_space<vmem>>, vector<64x128xf32>
    %cst = arith.constant dense<0.000000e+00> : vector<64x512xf32>
    %4 = tpu.matmul %3, %0, %cst {dimension_numbers = #tpu.dot_dimension_numbers<[1], [0], [0], [1], [0, 0, 1, 1], [], []>} : vector<64x128xf32>, vector<128x512xf32>, vector<64x512xf32> -> vector<64x512xf32>
    %5 = vector.broadcast %2 : vector<1x512xf32> to vector<64x512xf32>
    %6 = arith.addf %4, %5 : vector<64x512xf32>
    %c0_7 = arith.constant 0 : index
    %c0_8 = arith.constant 0 : index
    %7 = vector.load %arg12[%c0_7, %c0_8] : memref<64x512xf32, #tpu.memory_space<vmem>>, vector<64x512xf32>
    tpu.vector_store %arg12[%c0_7, %c0_8], %6 {strides = array<i32>} : memref<64x512xf32, #tpu.memory_space<vmem>>, vector<64x512xf32>,
    %cst_9 = arith.constant 0.000000e+00 : f32
    %8 = vector.broadcast %cst_9 : f32 to vector<8x128xf32>
    %c0_10 = arith.constant 0 : index
    %c0_11 = arith.constant 0 : index
    %9 = vector.load %arg13[%c0_10, %c0_11] : memref<8x128xf32, #tpu.memory_space<vmem>>, vector<8x128xf32>
    tpu.vector_store %arg13[%c0_10, %c0_11], %8 {strides = array<i32>} : memref<8x128xf32, #tpu.memory_space<vmem>>, vector<8x128xf32>,
    %cst_12 = arith.constant 0.000000e+00 : f32
    %10 = vector.broadcast %cst_12 : f32 to vector<8x128xf32>
    %c0_13 = arith.constant 0 : index
    %c0_14 = arith.constant 0 : index
    %11 = vector.load %arg14[%c0_13, %c0_14] : memref<8x128xf32, #tpu.memory_space<vmem>>, vector<8x128xf32>
    tpu.vector_store %arg14[%c0_13, %c0_14], %10 {strides = array<i32>} : memref<8x128xf32, #tpu.memory_space<vmem>>, vector<8x128xf32>,
    %c0_i32 = arith.constant 0 : i32
    %c8_i32 = arith.constant 8 : i32
    %12 = arith.muli %c0_i32, %c8_i32 : i32
    %13 = tpu.assume_multiple %12, 8 : i32
    %c0_15 = arith.constant 0 : index
    %c0_16 = arith.constant 0 : index
    %14 = vector.load %arg13[%c0_15, %c0_16] : memref<8x128xf32, #tpu.memory_space<vmem>>, vector<8x128xf32>
    %c0_17 = arith.constant 0 : index
    %c0_18 = arith.constant 0 : index
    %15 = vector.load %arg14[%c0_17, %c0_18] : memref<8x128xf32, #tpu.memory_space<vmem>>, vector<8x128xf32>
    %16 = arith.index_cast %13 : i32 to index
    %c0_19 = arith.constant 0 : index
    %17 = vector.load %arg12[%16, %c0_19] : memref<64x512xf32, #tpu.memory_space<vmem>>, vector<8x512xf32>
    %cst_20 = arith.constant dense<0.000000e+00> : vector<8x512xf32>
    %18 = tpu.matmul %14, %1, %cst_20 {dimension_numbers = #tpu.dot_dimension_numbers<[1], [0], [0], [1], [0, 0, 1, 1], [], []>} : vector<8x128xf32>, vector<128x512xf32>, vector<8x512xf32> -> vector<8x512xf32>
    %19 = arith.addf %17, %18 : vector<8x512xf32>
    %20 = vector.extract_strided_slice %19 {offsets = [0, 0], sizes = [8, 128], strides = [1, 1]} : vector<8x512xf32> to vector<8x128xf32>
    %21 = arith.negf %20 : vector<8x128xf32>
    %22 = math.exp %21 : vector<8x128xf32>
    %cst_21 = arith.constant 1.000000e+00 : f32
    %23 = vector.broadcast %cst_21 : f32 to vector<8x128xf32>
    %24 = arith.addf %23, %22 : vector<8x128xf32>
    %25 = arith.divf %23, %24 : vector<8x128xf32>
    %26 = vector.extract_strided_slice %19 {offsets = [0, 128], sizes = [8, 128], strides = [1, 1]} : vector<8x512xf32> to vector<8x128xf32>
    %27 = arith.negf %26 : vector<8x128xf32>
    %28 = math.exp %27 : vector<8x128xf32>
    %cst_22 = arith.constant 1.000000e+00 : f32
    %29 = vector.broadcast %cst_22 : f32 to vector<8x128xf32>
    %30 = arith.addf %29, %28 : vector<8x128xf32>
    %31 = arith.divf %29, %30 : vector<8x128xf32>
    %32 = vector.extract_strided_slice %19 {offsets = [0, 256], sizes = [8, 128], strides = [1, 1]} : vector<8x512xf32> to vector<8x128xf32>
    %33 = math.tanh %32 : vector<8x128xf32>
    %34 = vector.extract_strided_slice %19 {offsets = [0, 384], sizes = [8, 128], strides = [1, 1]} : vector<8x512xf32> to vector<8x128xf32>
    %35 = arith.negf %34 : vector<8x128xf32>
    %36 = math.exp %35 : vector<8x128xf32>
    %cst_23 = arith.constant 1.000000e+00 : f32
    %37 = vector.broadcast %cst_23 : f32 to vector<8x128xf32>
    %38 = arith.addf %37, %36 : vector<8x128xf32>
    %39 = arith.divf %37, %38 : vector<8x128xf32>
    %40 = arith.mulf %31, %15 : vector<8x128xf32>
    %41 = arith.mulf %25, %33 : vector<8x128xf32>
    %42 = arith.addf %40, %41 : vector<8x128xf32>
    %43 = math.tanh %42 : vector<8x128xf32>
    %44 = arith.mulf %39, %43 : vector<8x128xf32>
    %c0_24 = arith.constant 0 : index
    %c0_25 = arith.constant 0 : index
    %45 = vector.load %arg13[%c0_24, %c0_25] : memref<8x128xf32, #tpu.memory_space<vmem>>, vector<8x128xf32>
    tpu.vector_store %arg13[%c0_24, %c0_25], %44 {strides = array<i32>} : memref<8x128xf32, #tpu.memory_space<vmem>>, vector<8x128xf32>,
    %c0_26 = arith.constant 0 : index
    %c0_27 = arith.constant 0 : index
    %46 = vector.load %arg14[%c0_26, %c0_27] : memref<8x128xf32, #tpu.memory_space<vmem>>, vector<8x128xf32>
    tpu.vector_store %arg14[%c0_26, %c0_27], %42 {strides = array<i32>} : memref<8x128xf32, #tpu.memory_space<vmem>>, vector<8x128xf32>,
    %47 = arith.index_cast %13 : i32 to index
    %c0_28 = arith.constant 0 : index
    %48 = vector.load %arg11[%47, %c0_28] : memref<64x128xf32, #tpu.memory_space<vmem>>, vector<8x128xf32>
    tpu.vector_store %arg11[%47, %c0_28], %44 {strides = array<i32>} : memref<64x128xf32, #tpu.memory_space<vmem>>, vector<8x128xf32>,
    %c1_i32 = arith.constant 1 : i32
    %c8_i32_29 = arith.constant 8 : i32
    %49 = arith.muli %c1_i32, %c8_i32_29 : i32
    %50 = tpu.assume_multiple %49, 8 : i32
    %c0_30 = arith.constant 0 : index
    %c0_31 = arith.constant 0 : index
    %51 = vector.load %arg13[%c0_30, %c0_31] : memref<8x128xf32, #tpu.memory_space<vmem>>, vector<8x128xf32>
    %c0_32 = arith.constant 0 : index
    %c0_33 = arith.constant 0 : index
    %52 = vector.load %arg14[%c0_32, %c0_33] : memref<8x128xf32, #tpu.memory_space<vmem>>, vector<8x128xf32>
    %53 = arith.index_cast %50 : i32 to index
    %c0_34 = arith.constant 0 : index
    %54 = vector.load %arg12[%53, %c0_34] : memref<64x512xf32, #tpu.memory_space<vmem>>, vector<8x512xf32>
    %cst_35 = arith.constant dense<0.000000e+00> : vector<8x512xf32>
    %55 = tpu.matmul %51, %1, %cst_35 {dimension_numbers = #tpu.dot_dimension_numbers<[1], [0], [0], [1], [0, 0, 1, 1], [], []>} : vector<8x128xf32>, vector<128x512xf32>, vector<8x512xf32> -> vector<8x512xf32>
    %56 = arith.addf %54, %55 : vector<8x512xf32>
    %57 = vector.extract_strided_slice %56 {offsets = [0, 0], sizes = [8, 128], strides = [1, 1]} : vector<8x512xf32> to vector<8x128xf32>
    %58 = arith.negf %57 : vector<8x128xf32>
    %59 = math.exp %58 : vector<8x128xf32>
    %cst_36 = arith.constant 1.000000e+00 : f32
    %60 = vector.broadcast %cst_36 : f32 to vector<8x128xf32>
    %61 = arith.addf %60, %59 : vector<8x128xf32>
    %62 = arith.divf %60, %61 : vector<8x128xf32>
    %63 = vector.extract_strided_slice %56 {offsets = [0, 128], sizes = [8, 128], strides = [1, 1]} : vector<8x512xf32> to vector<8x128xf32>
    %64 = arith.negf %63 : vector<8x128xf32>
    %65 = math.exp %64 : vector<8x128xf32>
    %cst_37 = arith.constant 1.000000e+00 : f32
    %66 = vector.broadcast %cst_37 : f32 to vector<8x128xf32>
    %67 = arith.addf %66, %65 : vector<8x128xf32>
    %68 = arith.divf %66, %67 : vector<8x128xf32>
    %69 = vector.extract_strided_slice %56 {offsets = [0, 256], sizes = [8, 128], strides = [1, 1]} : vector<8x512xf32> to vector<8x128xf32>
    %70 = math.tanh %69 : vector<8x128xf32>
    %71 = vector.extract_strided_slice %56 {offsets = [0, 384], sizes = [8, 128], strides = [1, 1]} : vector<8x512xf32> to vector<8x128xf32>
    %72 = arith.negf %71 : vector<8x128xf32>
    %73 = math.exp %72 : vector<8x128xf32>
    %cst_38 = arith.constant 1.000000e+00 : f32
    %74 = vector.broadcast %cst_38 : f32 to vector<8x128xf32>
    %75 = arith.addf %74, %73 : vector<8x128xf32>
    %76 = arith.divf %74, %75 : vector<8x128xf32>
    %77 = arith.mulf %68, %52 : vector<8x128xf32>
    %78 = arith.mulf %62, %70 : vector<8x128xf32>
    %79 = arith.addf %77, %78 : vector<8x128xf32>
    %80 = math.tanh %79 : vector<8x128xf32>
    %81 = arith.mulf %76, %80 : vector<8x128xf32>
    %c0_39 = arith.constant 0 : index
    %c0_40 = arith.constant 0 : index
    %82 = vector.load %arg13[%c0_39, %c0_40] : memref<8x128xf32, #tpu.memory_space<vmem>>, vector<8x128xf32>
    tpu.vector_store %arg13[%c0_39, %c0_40], %81 {strides = array<i32>} : memref<8x128xf32, #tpu.memory_space<vmem>>, vector<8x128xf32>,
    %c0_41 = arith.constant 0 : index
    %c0_42 = arith.constant 0 : index
    %83 = vector.load %arg14[%c0_41, %c0_42] : memref<8x128xf32, #tpu.memory_space<vmem>>, vector<8x128xf32>
    tpu.vector_store %arg14[%c0_41, %c0_42], %79 {strides = array<i32>} : memref<8x128xf32, #tpu.memory_space<vmem>>, vector<8x128xf32>,
    %84 = arith.index_cast %50 : i32 to index
    %c0_43 = arith.constant 0 : index
    %85 = vector.load %arg11[%84, %c0_43] : memref<64x128xf32, #tpu.memory_space<vmem>>, vector<8x128xf32>
    tpu.vector_store %arg11[%84, %c0_43], %81 {strides = array<i32>} : memref<64x128xf32, #tpu.memory_space<vmem>>, vector<8x128xf32>,
    %c2_i32 = arith.constant 2 : i32
    %c8_i32_44 = arith.constant 8 : i32
    %86 = arith.muli %c2_i32, %c8_i32_44 : i32
    %87 = tpu.assume_multiple %86, 8 : i32
    %c0_45 = arith.constant 0 : index
    %c0_46 = arith.constant 0 : index
    %88 = vector.load %arg13[%c0_45, %c0_46] : memref<8x128xf32, #tpu.memory_space<vmem>>, vector<8x128xf32>
    %c0_47 = arith.constant 0 : index
    %c0_48 = arith.constant 0 : index
    %89 = vector.load %arg14[%c0_47, %c0_48] : memref<8x128xf32, #tpu.memory_space<vmem>>, vector<8x128xf32>
    %90 = arith.index_cast %87 : i32 to index
    %c0_49 = arith.constant 0 : index
    %91 = vector.load %arg12[%90, %c0_49] : memref<64x512xf32, #tpu.memory_space<vmem>>, vector<8x512xf32>
    %cst_50 = arith.constant dense<0.000000e+00> : vector<8x512xf32>
    %92 = tpu.matmul %88, %1, %cst_50 {dimension_numbers = #tpu.dot_dimension_numbers<[1], [0], [0], [1], [0, 0, 1, 1], [], []>} : vector<8x128xf32>, vector<128x512xf32>, vector<8x512xf32> -> vector<8x512xf32>
    %93 = arith.addf %91, %92 : vector<8x512xf32>
    %94 = vector.extract_strided_slice %93 {offsets = [0, 0], sizes = [8, 128], strides = [1, 1]} : vector<8x512xf32> to vector<8x128xf32>
    %95 = arith.negf %94 : vector<8x128xf32>
    %96 = math.exp %95 : vector<8x128xf32>
    %cst_51 = arith.constant 1.000000e+00 : f32
    %97 = vector.broadcast %cst_51 : f32 to vector<8x128xf32>
    %98 = arith.addf %97, %96 : vector<8x128xf32>
    %99 = arith.divf %97, %98 : vector<8x128xf32>
    %100 = vector.extract_strided_slice %93 {offsets = [0, 128], sizes = [8, 128], strides = [1, 1]} : vector<8x512xf32> to vector<8x128xf32>
    %101 = arith.negf %100 : vector<8x128xf32>
    %102 = math.exp %101 : vector<8x128xf32>
    %cst_52 = arith.constant 1.000000e+00 : f32
    %103 = vector.broadcast %cst_52 : f32 to vector<8x128xf32>
    %104 = arith.addf %103, %102 : vector<8x128xf32>
    %105 = arith.divf %103, %104 : vector<8x128xf32>
    %106 = vector.extract_strided_slice %93 {offsets = [0, 256], sizes = [8, 128], strides = [1, 1]} : vector<8x512xf32> to vector<8x128xf32>
    %107 = math.tanh %106 : vector<8x128xf32>
    %108 = vector.extract_strided_slice %93 {offsets = [0, 384], sizes = [8, 128], strides = [1, 1]} : vector<8x512xf32> to vector<8x128xf32>
    %109 = arith.negf %108 : vector<8x128xf32>
    %110 = math.exp %109 : vector<8x128xf32>
    %cst_53 = arith.constant 1.000000e+00 : f32
    %111 = vector.broadcast %cst_53 : f32 to vector<8x128xf32>
    %112 = arith.addf %111, %110 : vector<8x128xf32>
    %113 = arith.divf %111, %112 : vector<8x128xf32>
    %114 = arith.mulf %105, %89 : vector<8x128xf32>
    %115 = arith.mulf %99, %107 : vector<8x128xf32>
    %116 = arith.addf %114, %115 : vector<8x128xf32>
    %117 = math.tanh %116 : vector<8x128xf32>
    %118 = arith.mulf %113, %117 : vector<8x128xf32>
    %c0_54 = arith.constant 0 : index
    %c0_55 = arith.constant 0 : index
    %119 = vector.load %arg13[%c0_54, %c0_55] : memref<8x128xf32, #tpu.memory_space<vmem>>, vector<8x128xf32>
    tpu.vector_store %arg13[%c0_54, %c0_55], %118 {strides = array<i32>} : memref<8x128xf32, #tpu.memory_space<vmem>>, vector<8x128xf32>,
    %c0_56 = arith.constant 0 : index
    %c0_57 = arith.constant 0 : index
    %120 = vector.load %arg14[%c0_56, %c0_57] : memref<8x128xf32, #tpu.memory_space<vmem>>, vector<8x128xf32>
    tpu.vector_store %arg14[%c0_56, %c0_57], %116 {strides = array<i32>} : memref<8x128xf32, #tpu.memory_space<vmem>>, vector<8x128xf32>,
    %121 = arith.index_cast %87 : i32 to index
    %c0_58 = arith.constant 0 : index
    %122 = vector.load %arg11[%121, %c0_58] : memref<64x128xf32, #tpu.memory_space<vmem>>, vector<8x128xf32>
    tpu.vector_store %arg11[%121, %c0_58], %118 {strides = array<i32>} : memref<64x128xf32, #tpu.memory_space<vmem>>, vector<8x128xf32>,
    %c3_i32 = arith.constant 3 : i32
    %c8_i32_59 = arith.constant 8 : i32
    %123 = arith.muli %c3_i32, %c8_i32_59 : i32
    %124 = tpu.assume_multiple %123, 8 : i32
    %c0_60 = arith.constant 0 : index
    %c0_61 = arith.constant 0 : index
    %125 = vector.load %arg13[%c0_60, %c0_61] : memref<8x128xf32, #tpu.memory_space<vmem>>, vector<8x128xf32>
    %c0_62 = arith.constant 0 : index
    %c0_63 = arith.constant 0 : index
    %126 = vector.load %arg14[%c0_62, %c0_63] : memref<8x128xf32, #tpu.memory_space<vmem>>, vector<8x128xf32>
    %127 = arith.index_cast %124 : i32 to index
    %c0_64 = arith.constant 0 : index
    %128 = vector.load %arg12[%127, %c0_64] : memref<64x512xf32, #tpu.memory_space<vmem>>, vector<8x512xf32>
    %cst_65 = arith.constant dense<0.000000e+00> : vector<8x512xf32>
    %129 = tpu.matmul %125, %1, %cst_65 {dimension_numbers = #tpu.dot_dimension_numbers<[1], [0], [0], [1], [0, 0, 1, 1], [], []>} : vector<8x128xf32>, vector<128x512xf32>, vector<8x512xf32> -> vector<8x512xf32>
    %130 = arith.addf %128, %129 : vector<8x512xf32>
    %131 = vector.extract_strided_slice %130 {offsets = [0, 0], sizes = [8, 128], strides = [1, 1]} : vector<8x512xf32> to vector<8x128xf32>
    %132 = arith.negf %131 : vector<8x128xf32>
    %133 = math.exp %132 : vector<8x128xf32>
    %cst_66 = arith.constant 1.000000e+00 : f32
    %134 = vector.broadcast %cst_66 : f32 to vector<8x128xf32>
    %135 = arith.addf %134, %133 : vector<8x128xf32>
    %136 = arith.divf %134, %135 : vector<8x128xf32>
    %137 = vector.extract_strided_slice %130 {offsets = [0, 128], sizes = [8, 128], strides = [1, 1]} : vector<8x512xf32> to vector<8x128xf32>
    %138 = arith.negf %137 : vector<8x128xf32>
    %139 = math.exp %138 : vector<8x128xf32>
    %cst_67 = arith.constant 1.000000e+00 : f32
    %140 = vector.broadcast %cst_67 : f32 to vector<8x128xf32>
    %141 = arith.addf %140, %139 : vector<8x128xf32>
    %142 = arith.divf %140, %141 : vector<8x128xf32>
    %143 = vector.extract_strided_slice %130 {offsets = [0, 256], sizes = [8, 128], strides = [1, 1]} : vector<8x512xf32> to vector<8x128xf32>
    %144 = math.tanh %143 : vector<8x128xf32>
    %145 = vector.extract_strided_slice %130 {offsets = [0, 384], sizes = [8, 128], strides = [1, 1]} : vector<8x512xf32> to vector<8x128xf32>
    %146 = arith.negf %145 : vector<8x128xf32>
    %147 = math.exp %146 : vector<8x128xf32>
    %cst_68 = arith.constant 1.000000e+00 : f32
    %148 = vector.broadcast %cst_68 : f32 to vector<8x128xf32>
    %149 = arith.addf %148, %147 : vector<8x128xf32>
    %150 = arith.divf %148, %149 : vector<8x128xf32>
    %151 = arith.mulf %142, %126 : vector<8x128xf32>
    %152 = arith.mulf %136, %144 : vector<8x128xf32>
    %153 = arith.addf %151, %152 : vector<8x128xf32>
    %154 = math.tanh %153 : vector<8x128xf32>
    %155 = arith.mulf %150, %154 : vector<8x128xf32>
    %c0_69 = arith.constant 0 : index
    %c0_70 = arith.constant 0 : index
    %156 = vector.load %arg13[%c0_69, %c0_70] : memref<8x128xf32, #tpu.memory_space<vmem>>, vector<8x128xf32>
    tpu.vector_store %arg13[%c0_69, %c0_70], %155 {strides = array<i32>} : memref<8x128xf32, #tpu.memory_space<vmem>>, vector<8x128xf32>,
    %c0_71 = arith.constant 0 : index
    %c0_72 = arith.constant 0 : index
    %157 = vector.load %arg14[%c0_71, %c0_72] : memref<8x128xf32, #tpu.memory_space<vmem>>, vector<8x128xf32>
    tpu.vector_store %arg14[%c0_71, %c0_72], %153 {strides = array<i32>} : memref<8x128xf32, #tpu.memory_space<vmem>>, vector<8x128xf32>,
    %158 = arith.index_cast %124 : i32 to index
    %c0_73 = arith.constant 0 : index
    %159 = vector.load %arg11[%158, %c0_73] : memref<64x128xf32, #tpu.memory_space<vmem>>, vector<8x128xf32>
    tpu.vector_store %arg11[%158, %c0_73], %155 {strides = array<i32>} : memref<64x128xf32, #tpu.memory_space<vmem>>, vector<8x128xf32>,
    %c4_i32 = arith.constant 4 : i32
    %c8_i32_74 = arith.constant 8 : i32
    %160 = arith.muli %c4_i32, %c8_i32_74 : i32
    %161 = tpu.assume_multiple %160, 8 : i32
    %c0_75 = arith.constant 0 : index
    %c0_76 = arith.constant 0 : index
    %162 = vector.load %arg13[%c0_75, %c0_76] : memref<8x128xf32, #tpu.memory_space<vmem>>, vector<8x128xf32>
    %c0_77 = arith.constant 0 : index
    %c0_78 = arith.constant 0 : index
    %163 = vector.load %arg14[%c0_77, %c0_78] : memref<8x128xf32, #tpu.memory_space<vmem>>, vector<8x128xf32>
    %164 = arith.index_cast %161 : i32 to index
    %c0_79 = arith.constant 0 : index
    %165 = vector.load %arg12[%164, %c0_79] : memref<64x512xf32, #tpu.memory_space<vmem>>, vector<8x512xf32>
    %cst_80 = arith.constant dense<0.000000e+00> : vector<8x512xf32>
    %166 = tpu.matmul %162, %1, %cst_80 {dimension_numbers = #tpu.dot_dimension_numbers<[1], [0], [0], [1], [0, 0, 1, 1], [], []>} : vector<8x128xf32>, vector<128x512xf32>, vector<8x512xf32> -> vector<8x512xf32>
    %167 = arith.addf %165, %166 : vector<8x512xf32>
    %168 = vector.extract_strided_slice %167 {offsets = [0, 0], sizes = [8, 128], strides = [1, 1]} : vector<8x512xf32> to vector<8x128xf32>
    %169 = arith.negf %168 : vector<8x128xf32>
    %170 = math.exp %169 : vector<8x128xf32>
    %cst_81 = arith.constant 1.000000e+00 : f32
    %171 = vector.broadcast %cst_81 : f32 to vector<8x128xf32>
    %172 = arith.addf %171, %170 : vector<8x128xf32>
    %173 = arith.divf %171, %172 : vector<8x128xf32>
    %174 = vector.extract_strided_slice %167 {offsets = [0, 128], sizes = [8, 128], strides = [1, 1]} : vector<8x512xf32> to vector<8x128xf32>
    %175 = arith.negf %174 : vector<8x128xf32>
    %176 = math.exp %175 : vector<8x128xf32>
    %cst_82 = arith.constant 1.000000e+00 : f32
    %177 = vector.broadcast %cst_82 : f32 to vector<8x128xf32>
    %178 = arith.addf %177, %176 : vector<8x128xf32>
    %179 = arith.divf %177, %178 : vector<8x128xf32>
    %180 = vector.extract_strided_slice %167 {offsets = [0, 256], sizes = [8, 128], strides = [1, 1]} : vector<8x512xf32> to vector<8x128xf32>
    %181 = math.tanh %180 : vector<8x128xf32>
    %182 = vector.extract_strided_slice %167 {offsets = [0, 384], sizes = [8, 128], strides = [1, 1]} : vector<8x512xf32> to vector<8x128xf32>
    %183 = arith.negf %182 : vector<8x128xf32>
    %184 = math.exp %183 : vector<8x128xf32>
    %cst_83 = arith.constant 1.000000e+00 : f32
    %185 = vector.broadcast %cst_83 : f32 to vector<8x128xf32>
    %186 = arith.addf %185, %184 : vector<8x128xf32>
    %187 = arith.divf %185, %186 : vector<8x128xf32>
    %188 = arith.mulf %179, %163 : vector<8x128xf32>
    %189 = arith.mulf %173, %181 : vector<8x128xf32>
    %190 = arith.addf %188, %189 : vector<8x128xf32>
    %191 = math.tanh %190 : vector<8x128xf32>
    %192 = arith.mulf %187, %191 : vector<8x128xf32>
    %c0_84 = arith.constant 0 : index
    %c0_85 = arith.constant 0 : index
    %193 = vector.load %arg13[%c0_84, %c0_85] : memref<8x128xf32, #tpu.memory_space<vmem>>, vector<8x128xf32>
    tpu.vector_store %arg13[%c0_84, %c0_85], %192 {strides = array<i32>} : memref<8x128xf32, #tpu.memory_space<vmem>>, vector<8x128xf32>,
    %c0_86 = arith.constant 0 : index
    %c0_87 = arith.constant 0 : index
    %194 = vector.load %arg14[%c0_86, %c0_87] : memref<8x128xf32, #tpu.memory_space<vmem>>, vector<8x128xf32>
    tpu.vector_store %arg14[%c0_86, %c0_87], %190 {strides = array<i32>} : memref<8x128xf32, #tpu.memory_space<vmem>>, vector<8x128xf32>,
    %195 = arith.index_cast %161 : i32 to index
    %c0_88 = arith.constant 0 : index
    %196 = vector.load %arg11[%195, %c0_88] : memref<64x128xf32, #tpu.memory_space<vmem>>, vector<8x128xf32>
    tpu.vector_store %arg11[%195, %c0_88], %192 {strides = array<i32>} : memref<64x128xf32, #tpu.memory_space<vmem>>, vector<8x128xf32>,
    %c5_i32 = arith.constant 5 : i32
    %c8_i32_89 = arith.constant 8 : i32
    %197 = arith.muli %c5_i32, %c8_i32_89 : i32
    %198 = tpu.assume_multiple %197, 8 : i32
    %c0_90 = arith.constant 0 : index
    %c0_91 = arith.constant 0 : index
    %199 = vector.load %arg13[%c0_90, %c0_91] : memref<8x128xf32, #tpu.memory_space<vmem>>, vector<8x128xf32>
    %c0_92 = arith.constant 0 : index
    %c0_93 = arith.constant 0 : index
    %200 = vector.load %arg14[%c0_92, %c0_93] : memref<8x128xf32, #tpu.memory_space<vmem>>, vector<8x128xf32>
    %201 = arith.index_cast %198 : i32 to index
    %c0_94 = arith.constant 0 : index
    %202 = vector.load %arg12[%201, %c0_94] : memref<64x512xf32, #tpu.memory_space<vmem>>, vector<8x512xf32>
    %cst_95 = arith.constant dense<0.000000e+00> : vector<8x512xf32>
    %203 = tpu.matmul %199, %1, %cst_95 {dimension_numbers = #tpu.dot_dimension_numbers<[1], [0], [0], [1], [0, 0, 1, 1], [], []>} : vector<8x128xf32>, vector<128x512xf32>, vector<8x512xf32> -> vector<8x512xf32>
    %204 = arith.addf %202, %203 : vector<8x512xf32>
    %205 = vector.extract_strided_slice %204 {offsets = [0, 0], sizes = [8, 128], strides = [1, 1]} : vector<8x512xf32> to vector<8x128xf32>
    %206 = arith.negf %205 : vector<8x128xf32>
    %207 = math.exp %206 : vector<8x128xf32>
    %cst_96 = arith.constant 1.000000e+00 : f32
    %208 = vector.broadcast %cst_96 : f32 to vector<8x128xf32>
    %209 = arith.addf %208, %207 : vector<8x128xf32>
    %210 = arith.divf %208, %209 : vector<8x128xf32>
    %211 = vector.extract_strided_slice %204 {offsets = [0, 128], sizes = [8, 128], strides = [1, 1]} : vector<8x512xf32> to vector<8x128xf32>
    %212 = arith.negf %211 : vector<8x128xf32>
    %213 = math.exp %212 : vector<8x128xf32>
    %cst_97 = arith.constant 1.000000e+00 : f32
    %214 = vector.broadcast %cst_97 : f32 to vector<8x128xf32>
    %215 = arith.addf %214, %213 : vector<8x128xf32>
    %216 = arith.divf %214, %215 : vector<8x128xf32>
    %217 = vector.extract_strided_slice %204 {offsets = [0, 256], sizes = [8, 128], strides = [1, 1]} : vector<8x512xf32> to vector<8x128xf32>
    %218 = math.tanh %217 : vector<8x128xf32>
    %219 = vector.extract_strided_slice %204 {offsets = [0, 384], sizes = [8, 128], strides = [1, 1]} : vector<8x512xf32> to vector<8x128xf32>
    %220 = arith.negf %219 : vector<8x128xf32>
    %221 = math.exp %220 : vector<8x128xf32>
    %cst_98 = arith.constant 1.000000e+00 : f32
    %222 = vector.broadcast %cst_98 : f32 to vector<8x128xf32>
    %223 = arith.addf %222, %221 : vector<8x128xf32>
    %224 = arith.divf %222, %223 : vector<8x128xf32>
    %225 = arith.mulf %216, %200 : vector<8x128xf32>
    %226 = arith.mulf %210, %218 : vector<8x128xf32>
    %227 = arith.addf %225, %226 : vector<8x128xf32>
    %228 = math.tanh %227 : vector<8x128xf32>
    %229 = arith.mulf %224, %228 : vector<8x128xf32>
    %c0_99 = arith.constant 0 : index
    %c0_100 = arith.constant 0 : index
    %230 = vector.load %arg13[%c0_99, %c0_100] : memref<8x128xf32, #tpu.memory_space<vmem>>, vector<8x128xf32>
    tpu.vector_store %arg13[%c0_99, %c0_100], %229 {strides = array<i32>} : memref<8x128xf32, #tpu.memory_space<vmem>>, vector<8x128xf32>,
    %c0_101 = arith.constant 0 : index
    %c0_102 = arith.constant 0 : index
    %231 = vector.load %arg14[%c0_101, %c0_102] : memref<8x128xf32, #tpu.memory_space<vmem>>, vector<8x128xf32>
    tpu.vector_store %arg14[%c0_101, %c0_102], %227 {strides = array<i32>} : memref<8x128xf32, #tpu.memory_space<vmem>>, vector<8x128xf32>,
    %232 = arith.index_cast %198 : i32 to index
    %c0_103 = arith.constant 0 : index
    %233 = vector.load %arg11[%232, %c0_103] : memref<64x128xf32, #tpu.memory_space<vmem>>, vector<8x128xf32>
    tpu.vector_store %arg11[%232, %c0_103], %229 {strides = array<i32>} : memref<64x128xf32, #tpu.memory_space<vmem>>, vector<8x128xf32>,
    %c6_i32 = arith.constant 6 : i32
    %c8_i32_104 = arith.constant 8 : i32
    %234 = arith.muli %c6_i32, %c8_i32_104 : i32
    %235 = tpu.assume_multiple %234, 8 : i32
    %c0_105 = arith.constant 0 : index
    %c0_106 = arith.constant 0 : index
    %236 = vector.load %arg13[%c0_105, %c0_106] : memref<8x128xf32, #tpu.memory_space<vmem>>, vector<8x128xf32>
    %c0_107 = arith.constant 0 : index
    %c0_108 = arith.constant 0 : index
    %237 = vector.load %arg14[%c0_107, %c0_108] : memref<8x128xf32, #tpu.memory_space<vmem>>, vector<8x128xf32>
    %238 = arith.index_cast %235 : i32 to index
    %c0_109 = arith.constant 0 : index
    %239 = vector.load %arg12[%238, %c0_109] : memref<64x512xf32, #tpu.memory_space<vmem>>, vector<8x512xf32>
    %cst_110 = arith.constant dense<0.000000e+00> : vector<8x512xf32>
    %240 = tpu.matmul %236, %1, %cst_110 {dimension_numbers = #tpu.dot_dimension_numbers<[1], [0], [0], [1], [0, 0, 1, 1], [], []>} : vector<8x128xf32>, vector<128x512xf32>, vector<8x512xf32> -> vector<8x512xf32>
    %241 = arith.addf %239, %240 : vector<8x512xf32>
    %242 = vector.extract_strided_slice %241 {offsets = [0, 0], sizes = [8, 128], strides = [1, 1]} : vector<8x512xf32> to vector<8x128xf32>
    %243 = arith.negf %242 : vector<8x128xf32>
    %244 = math.exp %243 : vector<8x128xf32>
    %cst_111 = arith.constant 1.000000e+00 : f32
    %245 = vector.broadcast %cst_111 : f32 to vector<8x128xf32>
    %246 = arith.addf %245, %244 : vector<8x128xf32>
    %247 = arith.divf %245, %246 : vector<8x128xf32>
    %248 = vector.extract_strided_slice %241 {offsets = [0, 128], sizes = [8, 128], strides = [1, 1]} : vector<8x512xf32> to vector<8x128xf32>
    %249 = arith.negf %248 : vector<8x128xf32>
    %250 = math.exp %249 : vector<8x128xf32>
    %cst_112 = arith.constant 1.000000e+00 : f32
    %251 = vector.broadcast %cst_112 : f32 to vector<8x128xf32>
    %252 = arith.addf %251, %250 : vector<8x128xf32>
    %253 = arith.divf %251, %252 : vector<8x128xf32>
    %254 = vector.extract_strided_slice %241 {offsets = [0, 256], sizes = [8, 128], strides = [1, 1]} : vector<8x512xf32> to vector<8x128xf32>
    %255 = math.tanh %254 : vector<8x128xf32>
    %256 = vector.extract_strided_slice %241 {offsets = [0, 384], sizes = [8, 128], strides = [1, 1]} : vector<8x512xf32> to vector<8x128xf32>
    %257 = arith.negf %256 : vector<8x128xf32>
    %258 = math.exp %257 : vector<8x128xf32>
    %cst_113 = arith.constant 1.000000e+00 : f32
    %259 = vector.broadcast %cst_113 : f32 to vector<8x128xf32>
    %260 = arith.addf %259, %258 : vector<8x128xf32>
    %261 = arith.divf %259, %260 : vector<8x128xf32>
    %262 = arith.mulf %253, %237 : vector<8x128xf32>
    %263 = arith.mulf %247, %255 : vector<8x128xf32>
    %264 = arith.addf %262, %263 : vector<8x128xf32>
    %265 = math.tanh %264 : vector<8x128xf32>
    %266 = arith.mulf %261, %265 : vector<8x128xf32>
    %c0_114 = arith.constant 0 : index
    %c0_115 = arith.constant 0 : index
    %267 = vector.load %arg13[%c0_114, %c0_115] : memref<8x128xf32, #tpu.memory_space<vmem>>, vector<8x128xf32>
    tpu.vector_store %arg13[%c0_114, %c0_115], %266 {strides = array<i32>} : memref<8x128xf32, #tpu.memory_space<vmem>>, vector<8x128xf32>,
    %c0_116 = arith.constant 0 : index
    %c0_117 = arith.constant 0 : index
    %268 = vector.load %arg14[%c0_116, %c0_117] : memref<8x128xf32, #tpu.memory_space<vmem>>, vector<8x128xf32>
    tpu.vector_store %arg14[%c0_116, %c0_117], %264 {strides = array<i32>} : memref<8x128xf32, #tpu.memory_space<vmem>>, vector<8x128xf32>,
    %269 = arith.index_cast %235 : i32 to index
    %c0_118 = arith.constant 0 : index
    %270 = vector.load %arg11[%269, %c0_118] : memref<64x128xf32, #tpu.memory_space<vmem>>, vector<8x128xf32>
    tpu.vector_store %arg11[%269, %c0_118], %266 {strides = array<i32>} : memref<64x128xf32, #tpu.memory_space<vmem>>, vector<8x128xf32>,
    %c7_i32 = arith.constant 7 : i32
    %c8_i32_119 = arith.constant 8 : i32
    %271 = arith.muli %c7_i32, %c8_i32_119 : i32
    %272 = tpu.assume_multiple %271, 8 : i32
    %c0_120 = arith.constant 0 : index
    %c0_121 = arith.constant 0 : index
    %273 = vector.load %arg13[%c0_120, %c0_121] : memref<8x128xf32, #tpu.memory_space<vmem>>, vector<8x128xf32>
    %c0_122 = arith.constant 0 : index
    %c0_123 = arith.constant 0 : index
    %274 = vector.load %arg14[%c0_122, %c0_123] : memref<8x128xf32, #tpu.memory_space<vmem>>, vector<8x128xf32>
    %275 = arith.index_cast %272 : i32 to index
    %c0_124 = arith.constant 0 : index
    %276 = vector.load %arg12[%275, %c0_124] : memref<64x512xf32, #tpu.memory_space<vmem>>, vector<8x512xf32>
    %cst_125 = arith.constant dense<0.000000e+00> : vector<8x512xf32>
    %277 = tpu.matmul %273, %1, %cst_125 {dimension_numbers = #tpu.dot_dimension_numbers<[1], [0], [0], [1], [0, 0, 1, 1], [], []>} : vector<8x128xf32>, vector<128x512xf32>, vector<8x512xf32> -> vector<8x512xf32>
    %278 = arith.addf %276, %277 : vector<8x512xf32>
    %279 = vector.extract_strided_slice %278 {offsets = [0, 0], sizes = [8, 128], strides = [1, 1]} : vector<8x512xf32> to vector<8x128xf32>
    %280 = arith.negf %279 : vector<8x128xf32>
    %281 = math.exp %280 : vector<8x128xf32>
    %cst_126 = arith.constant 1.000000e+00 : f32
    %282 = vector.broadcast %cst_126 : f32 to vector<8x128xf32>
    %283 = arith.addf %282, %281 : vector<8x128xf32>
    %284 = arith.divf %282, %283 : vector<8x128xf32>
    %285 = vector.extract_strided_slice %278 {offsets = [0, 128], sizes = [8, 128], strides = [1, 1]} : vector<8x512xf32> to vector<8x128xf32>
    %286 = arith.negf %285 : vector<8x128xf32>
    %287 = math.exp %286 : vector<8x128xf32>
    %cst_127 = arith.constant 1.000000e+00 : f32
    %288 = vector.broadcast %cst_127 : f32 to vector<8x128xf32>
    %289 = arith.addf %288, %287 : vector<8x128xf32>
    %290 = arith.divf %288, %289 : vector<8x128xf32>
    %291 = vector.extract_strided_slice %278 {offsets = [0, 256], sizes = [8, 128], strides = [1, 1]} : vector<8x512xf32> to vector<8x128xf32>
    %292 = math.tanh %291 : vector<8x128xf32>
    %293 = vector.extract_strided_slice %278 {offsets = [0, 384], sizes = [8, 128], strides = [1, 1]} : vector<8x512xf32> to vector<8x128xf32>
    %294 = arith.negf %293 : vector<8x128xf32>
    %295 = math.exp %294 : vector<8x128xf32>
    %cst_128 = arith.constant 1.000000e+00 : f32
    %296 = vector.broadcast %cst_128 : f32 to vector<8x128xf32>
    %297 = arith.addf %296, %295 : vector<8x128xf32>
    %298 = arith.divf %296, %297 : vector<8x128xf32>
    %299 = arith.mulf %290, %274 : vector<8x128xf32>
    %300 = arith.mulf %284, %292 : vector<8x128xf32>
    %301 = arith.addf %299, %300 : vector<8x128xf32>
    %302 = math.tanh %301 : vector<8x128xf32>
    %303 = arith.mulf %298, %302 : vector<8x128xf32>
    %c0_129 = arith.constant 0 : index
    %c0_130 = arith.constant 0 : index
    %304 = vector.load %arg13[%c0_129, %c0_130] : memref<8x128xf32, #tpu.memory_space<vmem>>, vector<8x128xf32>
    tpu.vector_store %arg13[%c0_129, %c0_130], %303 {strides = array<i32>} : memref<8x128xf32, #tpu.memory_space<vmem>>, vector<8x128xf32>,
    %c0_131 = arith.constant 0 : index
    %c0_132 = arith.constant 0 : index
    %305 = vector.load %arg14[%c0_131, %c0_132] : memref<8x128xf32, #tpu.memory_space<vmem>>, vector<8x128xf32>
    tpu.vector_store %arg14[%c0_131, %c0_132], %301 {strides = array<i32>} : memref<8x128xf32, #tpu.memory_space<vmem>>, vector<8x128xf32>,
    %306 = arith.index_cast %272 : i32 to index
    %c0_133 = arith.constant 0 : index
    %307 = vector.load %arg11[%306, %c0_133] : memref<64x128xf32, #tpu.memory_space<vmem>>, vector<8x128xf32>
    tpu.vector_store %arg11[%306, %c0_133], %303 {strides = array<i32>} : memref<64x128xf32, #tpu.memory_space<vmem>>, vector<8x128xf32>,
    %c8_i32_134 = arith.constant 8 : i32
    %c0_135 = arith.constant 0 : index
    %c0_136 = arith.constant 0 : index
    %308 = vector.load %arg5[%c0_135, %c0_136] : memref<128x512xf32, #tpu.memory_space<vmem>>, vector<128x512xf32>
    %c0_137 = arith.constant 0 : index
    %c0_138 = arith.constant 0 : index
    %309 = vector.load %arg6[%c0_137, %c0_138] : memref<128x512xf32, #tpu.memory_space<vmem>>, vector<128x512xf32>
    %c0_139 = arith.constant 0 : index
    %c0_140 = arith.constant 0 : index
    %310 = vector.load %arg7[%c0_139, %c0_140] : memref<1x512xf32, #tpu.memory_space<vmem>>, vector<1x512xf32>
    %c0_141 = arith.constant 0 : index
    %c0_142 = arith.constant 0 : index
    %311 = vector.load %arg11[%c0_141, %c0_142] : memref<64x128xf32, #tpu.memory_space<vmem>>, vector<64x128xf32>
    %cst_143 = arith.constant dense<0.000000e+00> : vector<64x512xf32>
    %312 = tpu.matmul %311, %308, %cst_143 {dimension_numbers = #tpu.dot_dimension_numbers<[1], [0], [0], [1], [0, 0, 1, 1], [], []>} : vector<64x128xf32>, vector<128x512xf32>, vector<64x512xf32> -> vector<64x512xf32>
    %313 = vector.broadcast %310 : vector<1x512xf32> to vector<64x512xf32>
    %314 = arith.addf %312, %313 : vector<64x512xf32>
    %c0_144 = arith.constant 0 : index
    %c0_145 = arith.constant 0 : index
    %315 = vector.load %arg12[%c0_144, %c0_145] : memref<64x512xf32, #tpu.memory_space<vmem>>, vector<64x512xf32>
    tpu.vector_store %arg12[%c0_144, %c0_145], %314 {strides = array<i32>} : memref<64x512xf32, #tpu.memory_space<vmem>>, vector<64x512xf32>,
    %cst_146 = arith.constant 0.000000e+00 : f32
    %316 = vector.broadcast %cst_146 : f32 to vector<8x128xf32>
    %c0_147 = arith.constant 0 : index
    %c0_148 = arith.constant 0 : index
    %317 = vector.load %arg13[%c0_147, %c0_148] : memref<8x128xf32, #tpu.memory_space<vmem>>, vector<8x128xf32>
    tpu.vector_store %arg13[%c0_147, %c0_148], %316 {strides = array<i32>} : memref<8x128xf32, #tpu.memory_space<vmem>>, vector<8x128xf32>,
    %cst_149 = arith.constant 0.000000e+00 : f32
    %318 = vector.broadcast %cst_149 : f32 to vector<8x128xf32>
    %c0_150 = arith.constant 0 : index
    %c0_151 = arith.constant 0 : index
    %319 = vector.load %arg14[%c0_150, %c0_151] : memref<8x128xf32, #tpu.memory_space<vmem>>, vector<8x128xf32>
    tpu.vector_store %arg14[%c0_150, %c0_151], %318 {strides = array<i32>} : memref<8x128xf32, #tpu.memory_space<vmem>>, vector<8x128xf32>,
    %c0_i32_152 = arith.constant 0 : i32
    %c8_i32_153 = arith.constant 8 : i32
    %320 = arith.muli %c0_i32_152, %c8_i32_153 : i32
    %321 = tpu.assume_multiple %320, 8 : i32
    %c0_154 = arith.constant 0 : index
    %c0_155 = arith.constant 0 : index
    %322 = vector.load %arg13[%c0_154, %c0_155] : memref<8x128xf32, #tpu.memory_space<vmem>>, vector<8x128xf32>
    %c0_156 = arith.constant 0 : index
    %c0_157 = arith.constant 0 : index
    %323 = vector.load %arg14[%c0_156, %c0_157] : memref<8x128xf32, #tpu.memory_space<vmem>>, vector<8x128xf32>
    %324 = arith.index_cast %321 : i32 to index
    %c0_158 = arith.constant 0 : index
    %325 = vector.load %arg12[%324, %c0_158] : memref<64x512xf32, #tpu.memory_space<vmem>>, vector<8x512xf32>
    %cst_159 = arith.constant dense<0.000000e+00> : vector<8x512xf32>
    %326 = tpu.matmul %322, %309, %cst_159 {dimension_numbers = #tpu.dot_dimension_numbers<[1], [0], [0], [1], [0, 0, 1, 1], [], []>} : vector<8x128xf32>, vector<128x512xf32>, vector<8x512xf32> -> vector<8x512xf32>
    %327 = arith.addf %325, %326 : vector<8x512xf32>
    %328 = vector.extract_strided_slice %327 {offsets = [0, 0], sizes = [8, 128], strides = [1, 1]} : vector<8x512xf32> to vector<8x128xf32>
    %329 = arith.negf %328 : vector<8x128xf32>
    %330 = math.exp %329 : vector<8x128xf32>
    %cst_160 = arith.constant 1.000000e+00 : f32
    %331 = vector.broadcast %cst_160 : f32 to vector<8x128xf32>
    %332 = arith.addf %331, %330 : vector<8x128xf32>
    %333 = arith.divf %331, %332 : vector<8x128xf32>
    %334 = vector.extract_strided_slice %327 {offsets = [0, 128], sizes = [8, 128], strides = [1, 1]} : vector<8x512xf32> to vector<8x128xf32>
    %335 = arith.negf %334 : vector<8x128xf32>
    %336 = math.exp %335 : vector<8x128xf32>
    %cst_161 = arith.constant 1.000000e+00 : f32
    %337 = vector.broadcast %cst_161 : f32 to vector<8x128xf32>
    %338 = arith.addf %337, %336 : vector<8x128xf32>
    %339 = arith.divf %337, %338 : vector<8x128xf32>
    %340 = vector.extract_strided_slice %327 {offsets = [0, 256], sizes = [8, 128], strides = [1, 1]} : vector<8x512xf32> to vector<8x128xf32>
    %341 = math.tanh %340 : vector<8x128xf32>
    %342 = vector.extract_strided_slice %327 {offsets = [0, 384], sizes = [8, 128], strides = [1, 1]} : vector<8x512xf32> to vector<8x128xf32>
    %343 = arith.negf %342 : vector<8x128xf32>
    %344 = math.exp %343 : vector<8x128xf32>
    %cst_162 = arith.constant 1.000000e+00 : f32
    %345 = vector.broadcast %cst_162 : f32 to vector<8x128xf32>
    %346 = arith.addf %345, %344 : vector<8x128xf32>
    %347 = arith.divf %345, %346 : vector<8x128xf32>
    %348 = arith.mulf %339, %323 : vector<8x128xf32>
    %349 = arith.mulf %333, %341 : vector<8x128xf32>
    %350 = arith.addf %348, %349 : vector<8x128xf32>
    %351 = math.tanh %350 : vector<8x128xf32>
    %352 = arith.mulf %347, %351 : vector<8x128xf32>
    %c0_163 = arith.constant 0 : index
    %c0_164 = arith.constant 0 : index
    %353 = vector.load %arg13[%c0_163, %c0_164] : memref<8x128xf32, #tpu.memory_space<vmem>>, vector<8x128xf32>
    tpu.vector_store %arg13[%c0_163, %c0_164], %352 {strides = array<i32>} : memref<8x128xf32, #tpu.memory_space<vmem>>, vector<8x128xf32>,
    %c0_165 = arith.constant 0 : index
    %c0_166 = arith.constant 0 : index
    %354 = vector.load %arg14[%c0_165, %c0_166] : memref<8x128xf32, #tpu.memory_space<vmem>>, vector<8x128xf32>
    tpu.vector_store %arg14[%c0_165, %c0_166], %350 {strides = array<i32>} : memref<8x128xf32, #tpu.memory_space<vmem>>, vector<8x128xf32>,
    %c1_i32_167 = arith.constant 1 : i32
    %c8_i32_168 = arith.constant 8 : i32
    %355 = arith.muli %c1_i32_167, %c8_i32_168 : i32
    %356 = tpu.assume_multiple %355, 8 : i32
    %c0_169 = arith.constant 0 : index
    %c0_170 = arith.constant 0 : index
    %357 = vector.load %arg13[%c0_169, %c0_170] : memref<8x128xf32, #tpu.memory_space<vmem>>, vector<8x128xf32>
    %c0_171 = arith.constant 0 : index
    %c0_172 = arith.constant 0 : index
    %358 = vector.load %arg14[%c0_171, %c0_172] : memref<8x128xf32, #tpu.memory_space<vmem>>, vector<8x128xf32>
    %359 = arith.index_cast %356 : i32 to index
    %c0_173 = arith.constant 0 : index
    %360 = vector.load %arg12[%359, %c0_173] : memref<64x512xf32, #tpu.memory_space<vmem>>, vector<8x512xf32>
    %cst_174 = arith.constant dense<0.000000e+00> : vector<8x512xf32>
    %361 = tpu.matmul %357, %309, %cst_174 {dimension_numbers = #tpu.dot_dimension_numbers<[1], [0], [0], [1], [0, 0, 1, 1], [], []>} : vector<8x128xf32>, vector<128x512xf32>, vector<8x512xf32> -> vector<8x512xf32>
    %362 = arith.addf %360, %361 : vector<8x512xf32>
    %363 = vector.extract_strided_slice %362 {offsets = [0, 0], sizes = [8, 128], strides = [1, 1]} : vector<8x512xf32> to vector<8x128xf32>
    %364 = arith.negf %363 : vector<8x128xf32>
    %365 = math.exp %364 : vector<8x128xf32>
    %cst_175 = arith.constant 1.000000e+00 : f32
    %366 = vector.broadcast %cst_175 : f32 to vector<8x128xf32>
    %367 = arith.addf %366, %365 : vector<8x128xf32>
    %368 = arith.divf %366, %367 : vector<8x128xf32>
    %369 = vector.extract_strided_slice %362 {offsets = [0, 128], sizes = [8, 128], strides = [1, 1]} : vector<8x512xf32> to vector<8x128xf32>
    %370 = arith.negf %369 : vector<8x128xf32>
    %371 = math.exp %370 : vector<8x128xf32>
    %cst_176 = arith.constant 1.000000e+00 : f32
    %372 = vector.broadcast %cst_176 : f32 to vector<8x128xf32>
    %373 = arith.addf %372, %371 : vector<8x128xf32>
    %374 = arith.divf %372, %373 : vector<8x128xf32>
    %375 = vector.extract_strided_slice %362 {offsets = [0, 256], sizes = [8, 128], strides = [1, 1]} : vector<8x512xf32> to vector<8x128xf32>
    %376 = math.tanh %375 : vector<8x128xf32>
    %377 = vector.extract_strided_slice %362 {offsets = [0, 384], sizes = [8, 128], strides = [1, 1]} : vector<8x512xf32> to vector<8x128xf32>
    %378 = arith.negf %377 : vector<8x128xf32>
    %379 = math.exp %378 : vector<8x128xf32>
    %cst_177 = arith.constant 1.000000e+00 : f32
    %380 = vector.broadcast %cst_177 : f32 to vector<8x128xf32>
    %381 = arith.addf %380, %379 : vector<8x128xf32>
    %382 = arith.divf %380, %381 : vector<8x128xf32>
    %383 = arith.mulf %374, %358 : vector<8x128xf32>
    %384 = arith.mulf %368, %376 : vector<8x128xf32>
    %385 = arith.addf %383, %384 : vector<8x128xf32>
    %386 = math.tanh %385 : vector<8x128xf32>
    %387 = arith.mulf %382, %386 : vector<8x128xf32>
    %c0_178 = arith.constant 0 : index
    %c0_179 = arith.constant 0 : index
    %388 = vector.load %arg13[%c0_178, %c0_179] : memref<8x128xf32, #tpu.memory_space<vmem>>, vector<8x128xf32>
    tpu.vector_store %arg13[%c0_178, %c0_179], %387 {strides = array<i32>} : memref<8x128xf32, #tpu.memory_space<vmem>>, vector<8x128xf32>,
    %c0_180 = arith.constant 0 : index
    %c0_181 = arith.constant 0 : index
    %389 = vector.load %arg14[%c0_180, %c0_181] : memref<8x128xf32, #tpu.memory_space<vmem>>, vector<8x128xf32>
    tpu.vector_store %arg14[%c0_180, %c0_181], %385 {strides = array<i32>} : memref<8x128xf32, #tpu.memory_space<vmem>>, vector<8x128xf32>,
    %c2_i32_182 = arith.constant 2 : i32
    %c8_i32_183 = arith.constant 8 : i32
    %390 = arith.muli %c2_i32_182, %c8_i32_183 : i32
    %391 = tpu.assume_multiple %390, 8 : i32
    %c0_184 = arith.constant 0 : index
    %c0_185 = arith.constant 0 : index
    %392 = vector.load %arg13[%c0_184, %c0_185] : memref<8x128xf32, #tpu.memory_space<vmem>>, vector<8x128xf32>
    %c0_186 = arith.constant 0 : index
    %c0_187 = arith.constant 0 : index
    %393 = vector.load %arg14[%c0_186, %c0_187] : memref<8x128xf32, #tpu.memory_space<vmem>>, vector<8x128xf32>
    %394 = arith.index_cast %391 : i32 to index
    %c0_188 = arith.constant 0 : index
    %395 = vector.load %arg12[%394, %c0_188] : memref<64x512xf32, #tpu.memory_space<vmem>>, vector<8x512xf32>
    %cst_189 = arith.constant dense<0.000000e+00> : vector<8x512xf32>
    %396 = tpu.matmul %392, %309, %cst_189 {dimension_numbers = #tpu.dot_dimension_numbers<[1], [0], [0], [1], [0, 0, 1, 1], [], []>} : vector<8x128xf32>, vector<128x512xf32>, vector<8x512xf32> -> vector<8x512xf32>
    %397 = arith.addf %395, %396 : vector<8x512xf32>
    %398 = vector.extract_strided_slice %397 {offsets = [0, 0], sizes = [8, 128], strides = [1, 1]} : vector<8x512xf32> to vector<8x128xf32>
    %399 = arith.negf %398 : vector<8x128xf32>
    %400 = math.exp %399 : vector<8x128xf32>
    %cst_190 = arith.constant 1.000000e+00 : f32
    %401 = vector.broadcast %cst_190 : f32 to vector<8x128xf32>
    %402 = arith.addf %401, %400 : vector<8x128xf32>
    %403 = arith.divf %401, %402 : vector<8x128xf32>
    %404 = vector.extract_strided_slice %397 {offsets = [0, 128], sizes = [8, 128], strides = [1, 1]} : vector<8x512xf32> to vector<8x128xf32>
    %405 = arith.negf %404 : vector<8x128xf32>
    %406 = math.exp %405 : vector<8x128xf32>
    %cst_191 = arith.constant 1.000000e+00 : f32
    %407 = vector.broadcast %cst_191 : f32 to vector<8x128xf32>
    %408 = arith.addf %407, %406 : vector<8x128xf32>
    %409 = arith.divf %407, %408 : vector<8x128xf32>
    %410 = vector.extract_strided_slice %397 {offsets = [0, 256], sizes = [8, 128], strides = [1, 1]} : vector<8x512xf32> to vector<8x128xf32>
    %411 = math.tanh %410 : vector<8x128xf32>
    %412 = vector.extract_strided_slice %397 {offsets = [0, 384], sizes = [8, 128], strides = [1, 1]} : vector<8x512xf32> to vector<8x128xf32>
    %413 = arith.negf %412 : vector<8x128xf32>
    %414 = math.exp %413 : vector<8x128xf32>
    %cst_192 = arith.constant 1.000000e+00 : f32
    %415 = vector.broadcast %cst_192 : f32 to vector<8x128xf32>
    %416 = arith.addf %415, %414 : vector<8x128xf32>
    %417 = arith.divf %415, %416 : vector<8x128xf32>
    %418 = arith.mulf %409, %393 : vector<8x128xf32>
    %419 = arith.mulf %403, %411 : vector<8x128xf32>
    %420 = arith.addf %418, %419 : vector<8x128xf32>
    %421 = math.tanh %420 : vector<8x128xf32>
    %422 = arith.mulf %417, %421 : vector<8x128xf32>
    %c0_193 = arith.constant 0 : index
    %c0_194 = arith.constant 0 : index
    %423 = vector.load %arg13[%c0_193, %c0_194] : memref<8x128xf32, #tpu.memory_space<vmem>>, vector<8x128xf32>
    tpu.vector_store %arg13[%c0_193, %c0_194], %422 {strides = array<i32>} : memref<8x128xf32, #tpu.memory_space<vmem>>, vector<8x128xf32>,
    %c0_195 = arith.constant 0 : index
    %c0_196 = arith.constant 0 : index
    %424 = vector.load %arg14[%c0_195, %c0_196] : memref<8x128xf32, #tpu.memory_space<vmem>>, vector<8x128xf32>
    tpu.vector_store %arg14[%c0_195, %c0_196], %420 {strides = array<i32>} : memref<8x128xf32, #tpu.memory_space<vmem>>, vector<8x128xf32>,
    %c3_i32_197 = arith.constant 3 : i32
    %c8_i32_198 = arith.constant 8 : i32
    %425 = arith.muli %c3_i32_197, %c8_i32_198 : i32
    %426 = tpu.assume_multiple %425, 8 : i32
    %c0_199 = arith.constant 0 : index
    %c0_200 = arith.constant 0 : index
    %427 = vector.load %arg13[%c0_199, %c0_200] : memref<8x128xf32, #tpu.memory_space<vmem>>, vector<8x128xf32>
    %c0_201 = arith.constant 0 : index
    %c0_202 = arith.constant 0 : index
    %428 = vector.load %arg14[%c0_201, %c0_202] : memref<8x128xf32, #tpu.memory_space<vmem>>, vector<8x128xf32>
    %429 = arith.index_cast %426 : i32 to index
    %c0_203 = arith.constant 0 : index
    %430 = vector.load %arg12[%429, %c0_203] : memref<64x512xf32, #tpu.memory_space<vmem>>, vector<8x512xf32>
    %cst_204 = arith.constant dense<0.000000e+00> : vector<8x512xf32>
    %431 = tpu.matmul %427, %309, %cst_204 {dimension_numbers = #tpu.dot_dimension_numbers<[1], [0], [0], [1], [0, 0, 1, 1], [], []>} : vector<8x128xf32>, vector<128x512xf32>, vector<8x512xf32> -> vector<8x512xf32>
    %432 = arith.addf %430, %431 : vector<8x512xf32>
    %433 = vector.extract_strided_slice %432 {offsets = [0, 0], sizes = [8, 128], strides = [1, 1]} : vector<8x512xf32> to vector<8x128xf32>
    %434 = arith.negf %433 : vector<8x128xf32>
    %435 = math.exp %434 : vector<8x128xf32>
    %cst_205 = arith.constant 1.000000e+00 : f32
    %436 = vector.broadcast %cst_205 : f32 to vector<8x128xf32>
    %437 = arith.addf %436, %435 : vector<8x128xf32>
    %438 = arith.divf %436, %437 : vector<8x128xf32>
    %439 = vector.extract_strided_slice %432 {offsets = [0, 128], sizes = [8, 128], strides = [1, 1]} : vector<8x512xf32> to vector<8x128xf32>
    %440 = arith.negf %439 : vector<8x128xf32>
    %441 = math.exp %440 : vector<8x128xf32>
    %cst_206 = arith.constant 1.000000e+00 : f32
    %442 = vector.broadcast %cst_206 : f32 to vector<8x128xf32>
    %443 = arith.addf %442, %441 : vector<8x128xf32>
    %444 = arith.divf %442, %443 : vector<8x128xf32>
    %445 = vector.extract_strided_slice %432 {offsets = [0, 256], sizes = [8, 128], strides = [1, 1]} : vector<8x512xf32> to vector<8x128xf32>
    %446 = math.tanh %445 : vector<8x128xf32>
    %447 = vector.extract_strided_slice %432 {offsets = [0, 384], sizes = [8, 128], strides = [1, 1]} : vector<8x512xf32> to vector<8x128xf32>
    %448 = arith.negf %447 : vector<8x128xf32>
    %449 = math.exp %448 : vector<8x128xf32>
    %cst_207 = arith.constant 1.000000e+00 : f32
    %450 = vector.broadcast %cst_207 : f32 to vector<8x128xf32>
    %451 = arith.addf %450, %449 : vector<8x128xf32>
    %452 = arith.divf %450, %451 : vector<8x128xf32>
    %453 = arith.mulf %444, %428 : vector<8x128xf32>
    %454 = arith.mulf %438, %446 : vector<8x128xf32>
    %455 = arith.addf %453, %454 : vector<8x128xf32>
    %456 = math.tanh %455 : vector<8x128xf32>
    %457 = arith.mulf %452, %456 : vector<8x128xf32>
    %c0_208 = arith.constant 0 : index
    %c0_209 = arith.constant 0 : index
    %458 = vector.load %arg13[%c0_208, %c0_209] : memref<8x128xf32, #tpu.memory_space<vmem>>, vector<8x128xf32>
    tpu.vector_store %arg13[%c0_208, %c0_209], %457 {strides = array<i32>} : memref<8x128xf32, #tpu.memory_space<vmem>>, vector<8x128xf32>,
    %c0_210 = arith.constant 0 : index
    %c0_211 = arith.constant 0 : index
    %459 = vector.load %arg14[%c0_210, %c0_211] : memref<8x128xf32, #tpu.memory_space<vmem>>, vector<8x128xf32>
    tpu.vector_store %arg14[%c0_210, %c0_211], %455 {strides = array<i32>} : memref<8x128xf32, #tpu.memory_space<vmem>>, vector<8x128xf32>,
    %c4_i32_212 = arith.constant 4 : i32
    %c8_i32_213 = arith.constant 8 : i32
    %460 = arith.muli %c4_i32_212, %c8_i32_213 : i32
    %461 = tpu.assume_multiple %460, 8 : i32
    %c0_214 = arith.constant 0 : index
    %c0_215 = arith.constant 0 : index
    %462 = vector.load %arg13[%c0_214, %c0_215] : memref<8x128xf32, #tpu.memory_space<vmem>>, vector<8x128xf32>
    %c0_216 = arith.constant 0 : index
    %c0_217 = arith.constant 0 : index
    %463 = vector.load %arg14[%c0_216, %c0_217] : memref<8x128xf32, #tpu.memory_space<vmem>>, vector<8x128xf32>
    %464 = arith.index_cast %461 : i32 to index
    %c0_218 = arith.constant 0 : index
    %465 = vector.load %arg12[%464, %c0_218] : memref<64x512xf32, #tpu.memory_space<vmem>>, vector<8x512xf32>
    %cst_219 = arith.constant dense<0.000000e+00> : vector<8x512xf32>
    %466 = tpu.matmul %462, %309, %cst_219 {dimension_numbers = #tpu.dot_dimension_numbers<[1], [0], [0], [1], [0, 0, 1, 1], [], []>} : vector<8x128xf32>, vector<128x512xf32>, vector<8x512xf32> -> vector<8x512xf32>
    %467 = arith.addf %465, %466 : vector<8x512xf32>
    %468 = vector.extract_strided_slice %467 {offsets = [0, 0], sizes = [8, 128], strides = [1, 1]} : vector<8x512xf32> to vector<8x128xf32>
    %469 = arith.negf %468 : vector<8x128xf32>
    %470 = math.exp %469 : vector<8x128xf32>
    %cst_220 = arith.constant 1.000000e+00 : f32
    %471 = vector.broadcast %cst_220 : f32 to vector<8x128xf32>
    %472 = arith.addf %471, %470 : vector<8x128xf32>
    %473 = arith.divf %471, %472 : vector<8x128xf32>
    %474 = vector.extract_strided_slice %467 {offsets = [0, 128], sizes = [8, 128], strides = [1, 1]} : vector<8x512xf32> to vector<8x128xf32>
    %475 = arith.negf %474 : vector<8x128xf32>
    %476 = math.exp %475 : vector<8x128xf32>
    %cst_221 = arith.constant 1.000000e+00 : f32
    %477 = vector.broadcast %cst_221 : f32 to vector<8x128xf32>
    %478 = arith.addf %477, %476 : vector<8x128xf32>
    %479 = arith.divf %477, %478 : vector<8x128xf32>
    %480 = vector.extract_strided_slice %467 {offsets = [0, 256], sizes = [8, 128], strides = [1, 1]} : vector<8x512xf32> to vector<8x128xf32>
    %481 = math.tanh %480 : vector<8x128xf32>
    %482 = vector.extract_strided_slice %467 {offsets = [0, 384], sizes = [8, 128], strides = [1, 1]} : vector<8x512xf32> to vector<8x128xf32>
    %483 = arith.negf %482 : vector<8x128xf32>
    %484 = math.exp %483 : vector<8x128xf32>
    %cst_222 = arith.constant 1.000000e+00 : f32
    %485 = vector.broadcast %cst_222 : f32 to vector<8x128xf32>
    %486 = arith.addf %485, %484 : vector<8x128xf32>
    %487 = arith.divf %485, %486 : vector<8x128xf32>
    %488 = arith.mulf %479, %463 : vector<8x128xf32>
    %489 = arith.mulf %473, %481 : vector<8x128xf32>
    %490 = arith.addf %488, %489 : vector<8x128xf32>
    %491 = math.tanh %490 : vector<8x128xf32>
    %492 = arith.mulf %487, %491 : vector<8x128xf32>
    %c0_223 = arith.constant 0 : index
    %c0_224 = arith.constant 0 : index
    %493 = vector.load %arg13[%c0_223, %c0_224] : memref<8x128xf32, #tpu.memory_space<vmem>>, vector<8x128xf32>
    tpu.vector_store %arg13[%c0_223, %c0_224], %492 {strides = array<i32>} : memref<8x128xf32, #tpu.memory_space<vmem>>, vector<8x128xf32>,
    %c0_225 = arith.constant 0 : index
    %c0_226 = arith.constant 0 : index
    %494 = vector.load %arg14[%c0_225, %c0_226] : memref<8x128xf32, #tpu.memory_space<vmem>>, vector<8x128xf32>
    tpu.vector_store %arg14[%c0_225, %c0_226], %490 {strides = array<i32>} : memref<8x128xf32, #tpu.memory_space<vmem>>, vector<8x128xf32>,
    %c5_i32_227 = arith.constant 5 : i32
    %c8_i32_228 = arith.constant 8 : i32
    %495 = arith.muli %c5_i32_227, %c8_i32_228 : i32
    %496 = tpu.assume_multiple %495, 8 : i32
    %c0_229 = arith.constant 0 : index
    %c0_230 = arith.constant 0 : index
    %497 = vector.load %arg13[%c0_229, %c0_230] : memref<8x128xf32, #tpu.memory_space<vmem>>, vector<8x128xf32>
    %c0_231 = arith.constant 0 : index
    %c0_232 = arith.constant 0 : index
    %498 = vector.load %arg14[%c0_231, %c0_232] : memref<8x128xf32, #tpu.memory_space<vmem>>, vector<8x128xf32>
    %499 = arith.index_cast %496 : i32 to index
    %c0_233 = arith.constant 0 : index
    %500 = vector.load %arg12[%499, %c0_233] : memref<64x512xf32, #tpu.memory_space<vmem>>, vector<8x512xf32>
    %cst_234 = arith.constant dense<0.000000e+00> : vector<8x512xf32>
    %501 = tpu.matmul %497, %309, %cst_234 {dimension_numbers = #tpu.dot_dimension_numbers<[1], [0], [0], [1], [0, 0, 1, 1], [], []>} : vector<8x128xf32>, vector<128x512xf32>, vector<8x512xf32> -> vector<8x512xf32>
    %502 = arith.addf %500, %501 : vector<8x512xf32>
    %503 = vector.extract_strided_slice %502 {offsets = [0, 0], sizes = [8, 128], strides = [1, 1]} : vector<8x512xf32> to vector<8x128xf32>
    %504 = arith.negf %503 : vector<8x128xf32>
    %505 = math.exp %504 : vector<8x128xf32>
    %cst_235 = arith.constant 1.000000e+00 : f32
    %506 = vector.broadcast %cst_235 : f32 to vector<8x128xf32>
    %507 = arith.addf %506, %505 : vector<8x128xf32>
    %508 = arith.divf %506, %507 : vector<8x128xf32>
    %509 = vector.extract_strided_slice %502 {offsets = [0, 128], sizes = [8, 128], strides = [1, 1]} : vector<8x512xf32> to vector<8x128xf32>
    %510 = arith.negf %509 : vector<8x128xf32>
    %511 = math.exp %510 : vector<8x128xf32>
    %cst_236 = arith.constant 1.000000e+00 : f32
    %512 = vector.broadcast %cst_236 : f32 to vector<8x128xf32>
    %513 = arith.addf %512, %511 : vector<8x128xf32>
    %514 = arith.divf %512, %513 : vector<8x128xf32>
    %515 = vector.extract_strided_slice %502 {offsets = [0, 256], sizes = [8, 128], strides = [1, 1]} : vector<8x512xf32> to vector<8x128xf32>
    %516 = math.tanh %515 : vector<8x128xf32>
    %517 = vector.extract_strided_slice %502 {offsets = [0, 384], sizes = [8, 128], strides = [1, 1]} : vector<8x512xf32> to vector<8x128xf32>
    %518 = arith.negf %517 : vector<8x128xf32>
    %519 = math.exp %518 : vector<8x128xf32>
    %cst_237 = arith.constant 1.000000e+00 : f32
    %520 = vector.broadcast %cst_237 : f32 to vector<8x128xf32>
    %521 = arith.addf %520, %519 : vector<8x128xf32>
    %522 = arith.divf %520, %521 : vector<8x128xf32>
    %523 = arith.mulf %514, %498 : vector<8x128xf32>
    %524 = arith.mulf %508, %516 : vector<8x128xf32>
    %525 = arith.addf %523, %524 : vector<8x128xf32>
    %526 = math.tanh %525 : vector<8x128xf32>
    %527 = arith.mulf %522, %526 : vector<8x128xf32>
    %c0_238 = arith.constant 0 : index
    %c0_239 = arith.constant 0 : index
    %528 = vector.load %arg13[%c0_238, %c0_239] : memref<8x128xf32, #tpu.memory_space<vmem>>, vector<8x128xf32>
    tpu.vector_store %arg13[%c0_238, %c0_239], %527 {strides = array<i32>} : memref<8x128xf32, #tpu.memory_space<vmem>>, vector<8x128xf32>,
    %c0_240 = arith.constant 0 : index
    %c0_241 = arith.constant 0 : index
    %529 = vector.load %arg14[%c0_240, %c0_241] : memref<8x128xf32, #tpu.memory_space<vmem>>, vector<8x128xf32>
    tpu.vector_store %arg14[%c0_240, %c0_241], %525 {strides = array<i32>} : memref<8x128xf32, #tpu.memory_space<vmem>>, vector<8x128xf32>,
    %c6_i32_242 = arith.constant 6 : i32
    %c8_i32_243 = arith.constant 8 : i32
    %530 = arith.muli %c6_i32_242, %c8_i32_243 : i32
    %531 = tpu.assume_multiple %530, 8 : i32
    %c0_244 = arith.constant 0 : index
    %c0_245 = arith.constant 0 : index
    %532 = vector.load %arg13[%c0_244, %c0_245] : memref<8x128xf32, #tpu.memory_space<vmem>>, vector<8x128xf32>
    %c0_246 = arith.constant 0 : index
    %c0_247 = arith.constant 0 : index
    %533 = vector.load %arg14[%c0_246, %c0_247] : memref<8x128xf32, #tpu.memory_space<vmem>>, vector<8x128xf32>
    %534 = arith.index_cast %531 : i32 to index
    %c0_248 = arith.constant 0 : index
    %535 = vector.load %arg12[%534, %c0_248] : memref<64x512xf32, #tpu.memory_space<vmem>>, vector<8x512xf32>
    %cst_249 = arith.constant dense<0.000000e+00> : vector<8x512xf32>
    %536 = tpu.matmul %532, %309, %cst_249 {dimension_numbers = #tpu.dot_dimension_numbers<[1], [0], [0], [1], [0, 0, 1, 1], [], []>} : vector<8x128xf32>, vector<128x512xf32>, vector<8x512xf32> -> vector<8x512xf32>
    %537 = arith.addf %535, %536 : vector<8x512xf32>
    %538 = vector.extract_strided_slice %537 {offsets = [0, 0], sizes = [8, 128], strides = [1, 1]} : vector<8x512xf32> to vector<8x128xf32>
    %539 = arith.negf %538 : vector<8x128xf32>
    %540 = math.exp %539 : vector<8x128xf32>
    %cst_250 = arith.constant 1.000000e+00 : f32
    %541 = vector.broadcast %cst_250 : f32 to vector<8x128xf32>
    %542 = arith.addf %541, %540 : vector<8x128xf32>
    %543 = arith.divf %541, %542 : vector<8x128xf32>
    %544 = vector.extract_strided_slice %537 {offsets = [0, 128], sizes = [8, 128], strides = [1, 1]} : vector<8x512xf32> to vector<8x128xf32>
    %545 = arith.negf %544 : vector<8x128xf32>
    %546 = math.exp %545 : vector<8x128xf32>
    %cst_251 = arith.constant 1.000000e+00 : f32
    %547 = vector.broadcast %cst_251 : f32 to vector<8x128xf32>
    %548 = arith.addf %547, %546 : vector<8x128xf32>
    %549 = arith.divf %547, %548 : vector<8x128xf32>
    %550 = vector.extract_strided_slice %537 {offsets = [0, 256], sizes = [8, 128], strides = [1, 1]} : vector<8x512xf32> to vector<8x128xf32>
    %551 = math.tanh %550 : vector<8x128xf32>
    %552 = vector.extract_strided_slice %537 {offsets = [0, 384], sizes = [8, 128], strides = [1, 1]} : vector<8x512xf32> to vector<8x128xf32>
    %553 = arith.negf %552 : vector<8x128xf32>
    %554 = math.exp %553 : vector<8x128xf32>
    %cst_252 = arith.constant 1.000000e+00 : f32
    %555 = vector.broadcast %cst_252 : f32 to vector<8x128xf32>
    %556 = arith.addf %555, %554 : vector<8x128xf32>
    %557 = arith.divf %555, %556 : vector<8x128xf32>
    %558 = arith.mulf %549, %533 : vector<8x128xf32>
    %559 = arith.mulf %543, %551 : vector<8x128xf32>
    %560 = arith.addf %558, %559 : vector<8x128xf32>
    %561 = math.tanh %560 : vector<8x128xf32>
    %562 = arith.mulf %557, %561 : vector<8x128xf32>
    %c0_253 = arith.constant 0 : index
    %c0_254 = arith.constant 0 : index
    %563 = vector.load %arg13[%c0_253, %c0_254] : memref<8x128xf32, #tpu.memory_space<vmem>>, vector<8x128xf32>
    tpu.vector_store %arg13[%c0_253, %c0_254], %562 {strides = array<i32>} : memref<8x128xf32, #tpu.memory_space<vmem>>, vector<8x128xf32>,
    %c0_255 = arith.constant 0 : index
    %c0_256 = arith.constant 0 : index
    %564 = vector.load %arg14[%c0_255, %c0_256] : memref<8x128xf32, #tpu.memory_space<vmem>>, vector<8x128xf32>
    tpu.vector_store %arg14[%c0_255, %c0_256], %560 {strides = array<i32>} : memref<8x128xf32, #tpu.memory_space<vmem>>, vector<8x128xf32>,
    %c7_i32_257 = arith.constant 7 : i32
    %c8_i32_258 = arith.constant 8 : i32
    %565 = arith.muli %c7_i32_257, %c8_i32_258 : i32
    %566 = tpu.assume_multiple %565, 8 : i32
    %c0_259 = arith.constant 0 : index
    %c0_260 = arith.constant 0 : index
    %567 = vector.load %arg13[%c0_259, %c0_260] : memref<8x128xf32, #tpu.memory_space<vmem>>, vector<8x128xf32>
    %c0_261 = arith.constant 0 : index
    %c0_262 = arith.constant 0 : index
    %568 = vector.load %arg14[%c0_261, %c0_262] : memref<8x128xf32, #tpu.memory_space<vmem>>, vector<8x128xf32>
    %569 = arith.index_cast %566 : i32 to index
    %c0_263 = arith.constant 0 : index
    %570 = vector.load %arg12[%569, %c0_263] : memref<64x512xf32, #tpu.memory_space<vmem>>, vector<8x512xf32>
    %cst_264 = arith.constant dense<0.000000e+00> : vector<8x512xf32>
    %571 = tpu.matmul %567, %309, %cst_264 {dimension_numbers = #tpu.dot_dimension_numbers<[1], [0], [0], [1], [0, 0, 1, 1], [], []>} : vector<8x128xf32>, vector<128x512xf32>, vector<8x512xf32> -> vector<8x512xf32>
    %572 = arith.addf %570, %571 : vector<8x512xf32>
    %573 = vector.extract_strided_slice %572 {offsets = [0, 0], sizes = [8, 128], strides = [1, 1]} : vector<8x512xf32> to vector<8x128xf32>
    %574 = arith.negf %573 : vector<8x128xf32>
    %575 = math.exp %574 : vector<8x128xf32>
    %cst_265 = arith.constant 1.000000e+00 : f32
    %576 = vector.broadcast %cst_265 : f32 to vector<8x128xf32>
    %577 = arith.addf %576, %575 : vector<8x128xf32>
    %578 = arith.divf %576, %577 : vector<8x128xf32>
    %579 = vector.extract_strided_slice %572 {offsets = [0, 128], sizes = [8, 128], strides = [1, 1]} : vector<8x512xf32> to vector<8x128xf32>
    %580 = arith.negf %579 : vector<8x128xf32>
    %581 = math.exp %580 : vector<8x128xf32>
    %cst_266 = arith.constant 1.000000e+00 : f32
    %582 = vector.broadcast %cst_266 : f32 to vector<8x128xf32>
    %583 = arith.addf %582, %581 : vector<8x128xf32>
    %584 = arith.divf %582, %583 : vector<8x128xf32>
    %585 = vector.extract_strided_slice %572 {offsets = [0, 256], sizes = [8, 128], strides = [1, 1]} : vector<8x512xf32> to vector<8x128xf32>
    %586 = math.tanh %585 : vector<8x128xf32>
    %587 = vector.extract_strided_slice %572 {offsets = [0, 384], sizes = [8, 128], strides = [1, 1]} : vector<8x512xf32> to vector<8x128xf32>
    %588 = arith.negf %587 : vector<8x128xf32>
    %589 = math.exp %588 : vector<8x128xf32>
    %cst_267 = arith.constant 1.000000e+00 : f32
    %590 = vector.broadcast %cst_267 : f32 to vector<8x128xf32>
    %591 = arith.addf %590, %589 : vector<8x128xf32>
    %592 = arith.divf %590, %591 : vector<8x128xf32>
    %593 = arith.mulf %584, %568 : vector<8x128xf32>
    %594 = arith.mulf %578, %586 : vector<8x128xf32>
    %595 = arith.addf %593, %594 : vector<8x128xf32>
    %596 = math.tanh %595 : vector<8x128xf32>
    %597 = arith.mulf %592, %596 : vector<8x128xf32>
    %c0_268 = arith.constant 0 : index
    %c0_269 = arith.constant 0 : index
    %598 = vector.load %arg13[%c0_268, %c0_269] : memref<8x128xf32, #tpu.memory_space<vmem>>, vector<8x128xf32>
    tpu.vector_store %arg13[%c0_268, %c0_269], %597 {strides = array<i32>} : memref<8x128xf32, #tpu.memory_space<vmem>>, vector<8x128xf32>,
    %c0_270 = arith.constant 0 : index
    %c0_271 = arith.constant 0 : index
    %599 = vector.load %arg14[%c0_270, %c0_271] : memref<8x128xf32, #tpu.memory_space<vmem>>, vector<8x128xf32>
    tpu.vector_store %arg14[%c0_270, %c0_271], %595 {strides = array<i32>} : memref<8x128xf32, #tpu.memory_space<vmem>>, vector<8x128xf32>,
    %c8_i32_272 = arith.constant 8 : i32
    %c0_273 = arith.constant 0 : index
    %c0_274 = arith.constant 0 : index
    %600 = vector.load %arg13[%c0_273, %c0_274] : memref<8x128xf32, #tpu.memory_space<vmem>>, vector<8x128xf32>
    %c0_275 = arith.constant 0 : index
    %c0_276 = arith.constant 0 : index
    %601 = vector.load %arg8[%c0_275, %c0_276] : memref<128x128xf32, #tpu.memory_space<vmem>>, vector<128x128xf32>
    %cst_277 = arith.constant dense<0.000000e+00> : vector<8x128xf32>
    %602 = tpu.matmul %600, %601, %cst_277 {dimension_numbers = #tpu.dot_dimension_numbers<[1], [0], [0], [1], [0, 0, 1, 1], [], []>} : vector<8x128xf32>, vector<128x128xf32>, vector<8x128xf32> -> vector<8x128xf32>
    %c0_278 = arith.constant 0 : index
    %c0_279 = arith.constant 0 : index
    %603 = vector.load %arg9[%c0_278, %c0_279] : memref<1x128xf32, #tpu.memory_space<vmem>>, vector<1x128xf32>
    %604 = vector.broadcast %603 : vector<1x128xf32> to vector<8x128xf32>
    %605 = arith.addf %602, %604 : vector<8x128xf32>
    %c0_280 = arith.constant 0 : index
    %c0_281 = arith.constant 0 : index
    %606 = vector.load %arg10[%c0_280, %c0_281] : memref<8x128xf32, #tpu.memory_space<vmem>>, vector<8x128xf32>
    tpu.vector_store %arg10[%c0_280, %c0_281], %605 {strides = array<i32>} : memref<8x128xf32, #tpu.memory_space<vmem>>, vector<8x128xf32>,
    return
  }
  func.func @transform_0(%arg0: i32) -> (i32, i32) {
    %c0_i32 = arith.constant 0 : i32
    %c0_i32_0 = arith.constant 0 : i32
    %c0_i32_1 = arith.constant 0 : i32
    return %c0_i32, %c0_i32_0 : i32, i32
  }
  func.func @transform_1(%arg0: i32) -> (i32, i32) {
    %c0_i32 = arith.constant 0 : i32
    %c0_i32_0 = arith.constant 0 : i32
    %c0_i32_1 = arith.constant 0 : i32
    return %c0_i32, %c0_i32_0 : i32, i32
  }
  func.func @transform_2(%arg0: i32) -> (i32, i32) {
    %c0_i32 = arith.constant 0 : i32
    %c0_i32_0 = arith.constant 0 : i32
    %c0_i32_1 = arith.constant 0 : i32
    return %c0_i32, %c0_i32_0 : i32, i32
  }
  func.func @transform_3(%arg0: i32) -> (i32, i32) {
    %c0_i32 = arith.constant 0 : i32
    %c0_i32_0 = arith.constant 0 : i32
    %c0_i32_1 = arith.constant 0 : i32
    return %c0_i32, %c0_i32_0 : i32, i32
  }
  func.func @transform_4(%arg0: i32) -> (i32, i32) {
    %c0_i32 = arith.constant 0 : i32
    %c0_i32_0 = arith.constant 0 : i32
    %c0_i32_1 = arith.constant 0 : i32
    return %c0_i32, %c0_i32_0 : i32, i32
  }
  func.func @transform_5(%arg0: i32) -> (i32, i32) {
    %c0_i32 = arith.constant 0 : i32
    %c0_i32_0 = arith.constant 0 : i32
    %c0_i32_1 = arith.constant 0 : i32
    return %c0_i32, %c0_i32_0 : i32, i32
  }
  func.func @transform_6(%arg0: i32) -> (i32, i32) {
    %c0_i32 = arith.constant 0 : i32
    %c0_i32_0 = arith.constant 0 : i32
    %c0_i32_1 = arith.constant 0 : i32
    return %c0_i32, %c0_i32_0 : i32, i32
  }
  func.func @transform_7(%arg0: i32) -> (i32, i32) {
    %c0_i32 = arith.constant 0 : i32
    %c0_i32_0 = arith.constant 0 : i32
    %c0_i32_1 = arith.constant 0 : i32
    return %c0_i32, %c0_i32_0 : i32, i32
  }
  func.func @transform_8(%arg0: i32) -> (i32, i32) {
    %c0_i32 = arith.constant 0 : i32
    %c0_i32_0 = arith.constant 0 : i32
    %c0_i32_1 = arith.constant 0 : i32
    return %c0_i32, %c0_i32_0 : i32, i32
  }
  func.func @transform_9(%arg0: i32) -> (i32, i32) {
    %c0_i32 = arith.constant 0 : i32
    %c0_i32_0 = arith.constant 0 : i32
    %c0_i32_1 = arith.constant 0 : i32
    return %c0_i32, %c0_i32_0 : i32, i32
  }
}

</mosaic_0001>

<llo_original>
// kernel: lstm_classifier_forward.1
$region0: #{lstm_classifier_forward.1}
  #allocation0 [shape = 'u32[]', space=smem, size = 0x4, offset = 0x4, fixed_abs, tag = 'smem constant byte address 0x4 - core index']
  #allocation1 [shape = 'u32[144,128]{1,0:T(1,128)}', space=vmem, size = 0x12000, scoped, tag = 'internal scratch']
  #allocation2 [shape = 'f32[64,128]{1,0:T(8,128)}', space=vmem, size = 0x8000, scoped, tag = 'scratch operand']
  #allocation3 [shape = 'f32[64,512]{1,0:T(8,128)}', space=vmem, size = 0x20000, scoped, tag = 'scratch operand']
  #allocation4 [shape = 'f32[8,128]{1,0:T(8,128)}', space=vmem, size = 0x1000, scoped, tag = 'scratch operand']
  #allocation5 [shape = 'f32[8,128]{1,0:T(8,128)}', space=vmem, size = 0x1000, scoped, tag = 'scratch operand']
  %s0 = inlined_call_operand.vmem [shape: f32[64,128], index: 0, kind: input, shape index: {}]
  %s1 = inlined_call_operand.hbm [shape: f32[128,512], index: 1, kind: input, shape index: {}]
  %s2 = inlined_call_operand.hbm [shape: f32[128,512], index: 2, kind: input, shape index: {}]
  %s3 = inlined_call_operand.vmem [shape: f32[1,512], index: 3, kind: input, shape index: {}]
  %s4 = inlined_call_operand.hbm [shape: f32[128,512], index: 4, kind: input, shape index: {}]
  %s5 = inlined_call_operand.hbm [shape: f32[128,512], index: 5, kind: input, shape index: {}]
  %s6 = inlined_call_operand.vmem [shape: f32[1,512], index: 6, kind: input, shape index: {}]
  %s7 = inlined_call_operand.hbm [shape: f32[128,128], index: 7, kind: input, shape index: {}]
  %s8 = inlined_call_operand.vmem [shape: f32[1,128], index: 8, kind: input, shape index: {}]
  %s9 = inlined_call_operand.vmem [shape: f32[8,128], index: 9, kind: output, shape index: {}]
  %s10 = sld [smem:[#allocation0]]
  $region66: #{lstm_classifier_forward.1} parent=0
    _
  %s12 = ssub.s32 1, %s10
  %s13 = scalar_select 0, %s12, %s10
  $region1: #{lstm_classifier_forward.1} parent=0
    #allocation6 [shape = 'u8[262144]{0}', space=vmem, size = 0x40000, scoped, tag = 'input window, operand 1, single buffered']
    #allocation7 [shape = 's32[1]{0}', space=sflag, size = 0x4, scoped, tag = 'scoped memory for lstm_classifier_forward.1']
    #allocation8 [shape = 'u8[262144]{0}', space=vmem, size = 0x40000, scoped, tag = 'input window, operand 2, single buffered']
    #allocation9 [shape = 's32[1]{0}', space=sflag, size = 0x4, scoped, tag = 'scoped memory for lstm_classifier_forward.1']
    #allocation10 [shape = 'u8[262144]{0}', space=vmem, size = 0x40000, scoped, tag = 'input window, operand 4, single buffered']
    #allocation11 [shape = 'u8[262144]{0}', space=vmem, size = 0x40000, scoped, tag = 'input window, operand 5, single buffered']
    #allocation12 [shape = 's32[1]{0}', space=sflag, size = 0x4, scoped, tag = 'scoped memory for lstm_classifier_forward.1']
    #allocation13 [shape = 'u8[65536]{0}', space=vmem, size = 0x10000, scoped, tag = 'input window, operand 7, single buffered']
    %14 = vsyncpa [#allocation7], 0
    %15 = vsyncpa [#allocation9], 0
    %16 = vsyncpa [#allocation12], 0
    // Predicated region
    $region2: #{lstm_classifier_forward.1} parent=1 // pred_check
      _
    $region3: #{lstm_classifier_forward.1} parent=1 // pred_check_branch
      %18 = sbr.rel (0) target = $region5
    $region4: #{lstm_classifier_forward.1} parent=1 // pred_region
      _
    $region5: #{lstm_classifier_forward.1} parent=1 // pred_fallthru
      _
    // Predicated region
    $region6: #{lstm_classifier_forward.1} parent=1 // pred_check
      _
    $region7: #{lstm_classifier_forward.1} parent=1 // pred_check_branch
      %20 = sbr.rel (0) target = $region9
    $region8: #{lstm_classifier_forward.1} parent=1 // pred_region
      %s22 = ssub.s32 8192, 8192
      %23 = vsyncadd [#allocation7], %s22
      %s24 = sshll.u32 [#allocation6], 4
      %s25 = int_to_ptr.vmem [resolvable:$true] %s24
      %30 = dma.hbm_to_vmem [thread:$0]  %s1, 8192, %s25, [#allocation7], 512, 512, 32
    $region9: #{lstm_classifier_forward.1} parent=1 // pred_fallthru
      _
    // Predicated region
    $region10: #{lstm_classifier_forward.1} parent=1 // pred_check
      _
    $region11: #{lstm_classifier_forward.1} parent=1 // pred_check_branch
      %32 = sbr.rel (0) target = $region13
    $region12: #{lstm_classifier_forward.1} parent=1 // pred_region
      %s34 = ssub.s32 8192, 8192
      %35 = vsyncadd [#allocation9], %s34
      %s36 = sshll.u32 [#allocation8], 4
      %s37 = int_to_ptr.vmem [resolvable:$true] %s36
      %42 = dma.hbm_to_vmem [thread:$0]  %s2, 8192, %s37, [#allocation9], 512, 512, 32
    $region13: #{lstm_classifier_forward.1} parent=1 // pred_fallthru
      _
    // Predicated region
    $region14: #{lstm_classifier_forward.1} parent=1 // pred_check
      _
    $region15: #{lstm_classifier_forward.1} parent=1 // pred_check_branch
      %44 = sbr.rel (0) target = $region17
    $region16: #{lstm_classifier_forward.1} parent=1 // pred_region
      _
    $region17: #{lstm_classifier_forward.1} parent=1 // pred_fallthru
      _
    // Predicated region
    $region18: #{lstm_classifier_forward.1} parent=1 // pred_check
      _
    $region19: #{lstm_classifier_forward.1} parent=1 // pred_check_branch
      %46 = sbr.rel (0) target = $region21
    $region20: #{lstm_classifier_forward.1} parent=1 // pred_region
      %s48 = ssub.s32 8192, 8192
      %49 = vsyncadd [#allocation9], %s48
      %s50 = sshll.u32 [#allocation10], 4
      %s51 = int_to_ptr.vmem [resolvable:$true] %s50
      %56 = dma.hbm_to_vmem [thread:$0]  %s4, 8192, %s51, [#allocation9], 512, 512, 32
    $region21: #{lstm_classifier_forward.1} parent=1 // pred_fallthru
      _
    // Predicated region
    $region22: #{lstm_classifier_forward.1} parent=1 // pred_check
      _
    $region23: #{lstm_classifier_forward.1} parent=1 // pred_check_branch
      %58 = sbr.rel (0) target = $region25
    $region24: #{lstm_classifier_forward.1} parent=1 // pred_region
      %s60 = ssub.s32 8192, 8192
      %61 = vsyncadd [#allocation12], %s60
      %s62 = sshll.u32 [#allocation11], 4
      %s63 = int_to_ptr.vmem [resolvable:$true] %s62
      %68 = dma.hbm_to_vmem [thread:$0]  %s5, 8192, %s63, [#allocation12], 512, 512, 32
    $region25: #{lstm_classifier_forward.1} parent=1 // pred_fallthru
      _
    // Predicated region
    $region26: #{lstm_classifier_forward.1} parent=1 // pred_check
      _
    $region27: #{lstm_classifier_forward.1} parent=1 // pred_check_branch
      %70 = sbr.rel (0) target = $region29
    $region28: #{lstm_classifier_forward.1} parent=1 // pred_region
      _
    $region29: #{lstm_classifier_forward.1} parent=1 // pred_fallthru
      _
    // Predicated region
    $region30: #{lstm_classifier_forward.1} parent=1 // pred_check
      _
    $region31: #{lstm_classifier_forward.1} parent=1 // pred_check_branch
      %72 = sbr.rel (0) target = $region33
    $region32: #{lstm_classifier_forward.1} parent=1 // pred_region
      %s74 = ssub.s32 2048, 2048
      %75 = vsyncadd [#allocation12], %s74
      %s76 = sshll.u32 [#allocation13], 4
      %s77 = int_to_ptr.vmem [resolvable:$true] %s76
      %82 = dma.hbm_to_vmem [thread:$0]  %s7, 2048, %s77, [#allocation12], 128, 128, 8
    $region33: #{lstm_classifier_forward.1} parent=1 // pred_fallthru
      _
    // Predicated region
    $region34: #{lstm_classifier_forward.1} parent=1 // pred_check
      _
    $region35: #{lstm_classifier_forward.1} parent=1 // pred_check_branch
      %84 = sbr.rel (0) target = $region37
    $region36: #{lstm_classifier_forward.1} parent=1 // pred_region
      _
    $region37: #{lstm_classifier_forward.1} parent=1 // pred_fallthru
      _
    // Predicated region
    $region38: #{lstm_classifier_forward.1} parent=1 // pred_check
      _
    $region39: #{lstm_classifier_forward.1} parent=1 // pred_check_branch
      %86 = sbr.rel (0) target = $region41
    $region40: #{lstm_classifier_forward.1} parent=1 // pred_region
      %87 = dma.done [#allocation7], 8192
    $region41: #{lstm_classifier_forward.1} parent=1 // pred_fallthru
      _
    // Predicated region
    $region42: #{lstm_classifier_forward.1} parent=1 // pred_check
      _
    $region43: #{lstm_classifier_forward.1} parent=1 // pred_check_branch
      %89 = sbr.rel (0) target = $region45
    $region44: #{lstm_classifier_forward.1} parent=1 // pred_region
      %90 = dma.done [#allocation9], 8192
    $region45: #{lstm_classifier_forward.1} parent=1 // pred_fallthru
      _
    // Predicated region
    $region46: #{lstm_classifier_forward.1} parent=1 // pred_check
      _
    $region47: #{lstm_classifier_forward.1} parent=1 // pred_check_branch
      %92 = sbr.rel (0) target = $region49
    $region48: #{lstm_classifier_forward.1} parent=1 // pred_region
      %93 = dma.done [#allocation9], 8192
    $region49: #{lstm_classifier_forward.1} parent=1 // pred_fallthru
      _
    // Predicated region
    $region50: #{lstm_classifier_forward.1} parent=1 // pred_check
      _
    $region51: #{lstm_classifier_forward.1} parent=1 // pred_check_branch
      %95 = sbr.rel (0) target = $region53
    $region52: #{lstm_classifier_forward.1} parent=1 // pred_region
      %96 = dma.done [#allocation12], 8192
    $region53: #{lstm_classifier_forward.1} parent=1 // pred_fallthru
      _
    // Predicated region
    $region54: #{lstm_classifier_forward.1} parent=1 // pred_check
      _
    $region55: #{lstm_classifier_forward.1} parent=1 // pred_check_branch
      %98 = sbr.rel (0) target = $region57
    $region56: #{lstm_classifier_forward.1} parent=1 // pred_region
      %99 = dma.done [#allocation12], 2048
    $region57: #{lstm_classifier_forward.1} parent=1 // pred_fallthru
      _
    %v100 = vld [vmem:[#allocation6] sm:$0xff]
    %v101 = vld [vmem:[#allocation6 + $0x8] sm:$0xff]
    %v102 = vld [vmem:[#allocation6 + $0x10] sm:$0xff]
    %v103 = vld [vmem:[#allocation6 + $0x18] sm:$0xff]
    %v104 = vld [vmem:[#allocation6 + $0x20] sm:$0xff]
    %v105 = vld [vmem:[#allocation6 + $0x28] sm:$0xff]
    %v106 = vld [vmem:[#allocation6 + $0x30] sm:$0xff]
    %v107 = vld [vmem:[#allocation6 + $0x38] sm:$0xff]
    %v108 = vld [vmem:[#allocation6 + $0x40] sm:$0xff]
    %v109 = vld [vmem:[#allocation6 + $0x48] sm:$0xff]
    %v110 = vld [vmem:[#allocation6 + $0x50] sm:$0xff]
    %v111 = vld [vmem:[#allocation6 + $0x58] sm:$0xff]
    %v112 = vld [vmem:[#allocation6 + $0x60] sm:$0xff]
    %v113 = vld [vmem:[#allocation6 + $0x68] sm:$0xff]
    %v114 = vld [vmem:[#allocation6 + $0x70] sm:$0xff]
    %v115 = vld [vmem:[#allocation6 + $0x78] sm:$0xff]
    %v116 = vld [vmem:[#allocation6 + $0x80] sm:$0xff]
    %v117 = vld [vmem:[#allocation6 + $0x88] sm:$0xff]
    %v118 = vld [vmem:[#allocation6 + $0x90] sm:$0xff]
    %v119 = vld [vmem:[#allocation6 + $0x98] sm:$0xff]
    %v120 = vld [vmem:[#allocation6 + $0xa0] sm:$0xff]
    %v121 = vld [vmem:[#allocation6 + $0xa8] sm:$0xff]
    %v122 = vld [vmem:[#allocation6 + $0xb0] sm:$0xff]
    %v123 = vld [vmem:[#allocation6 + $0xb8] sm:$0xff]
    %v124 = vld [vmem:[#allocation6 + $0xc0] sm:$0xff]
    %v125 = vld [vmem:[#allocation6 + $0xc8] sm:$0xff]
    %v126 = vld [vmem:[#allocation6 + $0xd0] sm:$0xff]
    %v127 = vld [vmem:[#allocation6 + $0xd8] sm:$0xff]
    %v128 = vld [vmem:[#allocation6 + $0xe0] sm:$0xff]
    %v129 = vld [vmem:[#allocation6 + $0xe8] sm:$0xff]
    %v130 = vld [vmem:[#allocation6 + $0xf0] sm:$0xff]
    %v131 = vld [vmem:[#allocation6 + $0xf8] sm:$0xff]
    %v132 = vld [vmem:[#allocation6 + $0x100] sm:$0xff]
    %v133 = vld [vmem:[#allocation6 + $0x108] sm:$0xff]
    %v134 = vld [vmem:[#allocation6 + $0x110] sm:$0xff]
    %v135 = vld [vmem:[#allocation6 + $0x118] sm:$0xff]
    %v136 = vld [vmem:[#allocation6 + $0x120] sm:$0xff]
    %v137 = vld [vmem:[#allocation6 + $0x128] sm:$0xff]
    %v138 = vld [vmem:[#allocation6 + $0x130] sm:$0xff]
    %v139 = vld [vmem:[#allocation6 + $0x138] sm:$0xff]
    %v140 = vld [vmem:[#allocation6 + $0x140] sm:$0xff]
    %v141 = vld [vmem:[#allocation6 + $0x148] sm:$0xff]
    %v142 = vld [vmem:[#allocation6 + $0x150] sm:$0xff]
    %v143 = vld [vmem:[#allocation6 + $0x158] sm:$0xff]
    %v144 = vld [vmem:[#allocation6 + $0x160] sm:$0xff]
    %v145 = vld [vmem:[#allocation6 + $0x168] sm:$0xff]
    %v146 = vld [vmem:[#allocation6 + $0x170] sm:$0xff]
    %v147 = vld [vmem:[#allocation6 + $0x178] sm:$0xff]
    %v148 = vld [vmem:[#allocation6 + $0x180] sm:$0xff]
    %v149 = vld [vmem:[#allocation6 + $0x188] sm:$0xff]
    %v150 = vld [vmem:[#allocation6 + $0x190] sm:$0xff]
    %v151 = vld [vmem:[#allocation6 + $0x198] sm:$0xff]
    %v152 = vld [vmem:[#allocation6 + $0x1a0] sm:$0xff]
    %v153 = vld [vmem:[#allocation6 + $0x1a8] sm:$0xff]
    %v154 = vld [vmem:[#allocation6 + $0x1b0] sm:$0xff]
    %v155 = vld [vmem:[#allocation6 + $0x1b8] sm:$0xff]
    %v156 = vld [vmem:[#allocation6 + $0x1c0] sm:$0xff]
    %v157 = vld [vmem:[#allocation6 + $0x1c8] sm:$0xff]
    %v158 = vld [vmem:[#allocation6 + $0x1d0] sm:$0xff]
    %v159 = vld [vmem:[#allocation6 + $0x1d8] sm:$0xff]
    %v160 = vld [vmem:[#allocation6 + $0x1e0] sm:$0xff]
    %v161 = vld [vmem:[#allocation6 + $0x1e8] sm:$0xff]
    %v162 = vld [vmem:[#allocation6 + $0x1f0] sm:$0xff]
    %v163 = vld [vmem:[#allocation6 + $0x1f8] sm:$0xff]
    %v164 = vld [vmem:[#allocation8] sm:$0xff]
    %v165 = vld [vmem:[#allocation8 + $0x8] sm:$0xff]
    %v166 = vld [vmem:[#allocation8 + $0x10] sm:$0xff]
    %v167 = vld [vmem:[#allocation8 + $0x18] sm:$0xff]
    %v168 = vld [vmem:[#allocation8 + $0x20] sm:$0xff]
    %v169 = vld [vmem:[#allocation8 + $0x28] sm:$0xff]
    %v170 = vld [vmem:[#allocation8 + $0x30] sm:$0xff]
    %v171 = vld [vmem:[#allocation8 + $0x38] sm:$0xff]
    %v172 = vld [vmem:[#allocation8 + $0x40] sm:$0xff]
    %v173 = vld [vmem:[#allocation8 + $0x48] sm:$0xff]
    %v174 = vld [vmem:[#allocation8 + $0x50] sm:$0xff]
    %v175 = vld [vmem:[#allocation8 + $0x58] sm:$0xff]
    %v176 = vld [vmem:[#allocation8 + $0x60] sm:$0xff]
    %v177 = vld [vmem:[#allocation8 + $0x68] sm:$0xff]
    %v178 = vld [vmem:[#allocation8 + $0x70] sm:$0xff]
    %v179 = vld [vmem:[#allocation8 + $0x78] sm:$0xff]
    %v180 = vld [vmem:[#allocation8 + $0x80] sm:$0xff]
    %v181 = vld [vmem:[#allocation8 + $0x88] sm:$0xff]
    %v182 = vld [vmem:[#allocation8 + $0x90] sm:$0xff]
    %v183 = vld [vmem:[#allocation8 + $0x98] sm:$0xff]
    %v184 = vld [vmem:[#allocation8 + $0xa0] sm:$0xff]
    %v185 = vld [vmem:[#allocation8 + $0xa8] sm:$0xff]
    %v186 = vld [vmem:[#allocation8 + $0xb0] sm:$0xff]
    %v187 = vld [vmem:[#allocation8 + $0xb8] sm:$0xff]
    %v188 = vld [vmem:[#allocation8 + $0xc0] sm:$0xff]
    %v189 = vld [vmem:[#allocation8 + $0xc8] sm:$0xff]
    %v190 = vld [vmem:[#allocation8 + $0xd0] sm:$0xff]
    %v191 = vld [vmem:[#allocation8 + $0xd8] sm:$0xff]
    %v192 = vld [vmem:[#allocation8 + $0xe0] sm:$0xff]
    %v193 = vld [vmem:[#allocation8 + $0xe8] sm:$0xff]
    %v194 = vld [vmem:[#allocation8 + $0xf0] sm:$0xff]
    %v195 = vld [vmem:[#allocation8 + $0xf8] sm:$0xff]
    %v196 = vld [vmem:[#allocation8 + $0x100] sm:$0xff]
    %v197 = vld [vmem:[#allocation8 + $0x108] sm:$0xff]
    %v198 = vld [vmem:[#allocation8 + $0x110] sm:$0xff]
    %v199 = vld [vmem:[#allocation8 + $0x118] sm:$0xff]
    %v200 = vld [vmem:[#allocation8 + $0x120] sm:$0xff]
    %v201 = vld [vmem:[#allocation8 + $0x128] sm:$0xff]
    %v202 = vld [vmem:[#allocation8 + $0x130] sm:$0xff]
    %v203 = vld [vmem:[#allocation8 + $0x138] sm:$0xff]
    %v204 = vld [vmem:[#allocation8 + $0x140] sm:$0xff]
    %v205 = vld [vmem:[#allocation8 + $0x148] sm:$0xff]
    %v206 = vld [vmem:[#allocation8 + $0x150] sm:$0xff]
    %v207 = vld [vmem:[#allocation8 + $0x158] sm:$0xff]
    %v208 = vld [vmem:[#allocation8 + $0x160] sm:$0xff]
    %v209 = vld [vmem:[#allocation8 + $0x168] sm:$0xff]
    %v210 = vld [vmem:[#allocation8 + $0x170] sm:$0xff]
    %v211 = vld [vmem:[#allocation8 + $0x178] sm:$0xff]
    %v212 = vld [vmem:[#allocation8 + $0x180] sm:$0xff]
    %v213 = vld [vmem:[#allocation8 + $0x188] sm:$0xff]
    %v214 = vld [vmem:[#allocation8 + $0x190] sm:$0xff]
    %v215 = vld [vmem:[#allocation8 + $0x198] sm:$0xff]
    %v216 = vld [vmem:[#allocation8 + $0x1a0] sm:$0xff]
    %v217 = vld [vmem:[#allocation8 + $0x1a8] sm:$0xff]
    %v218 = vld [vmem:[#allocation8 + $0x1b0] sm:$0xff]
    %v219 = vld [vmem:[#allocation8 + $0x1b8] sm:$0xff]
    %v220 = vld [vmem:[#allocation8 + $0x1c0] sm:$0xff]
    %v221 = vld [vmem:[#allocation8 + $0x1c8] sm:$0xff]
    %v222 = vld [vmem:[#allocation8 + $0x1d0] sm:$0xff]
    %v223 = vld [vmem:[#allocation8 + $0x1d8] sm:$0xff]
    %v224 = vld [vmem:[#allocation8 + $0x1e0] sm:$0xff]
    %v225 = vld [vmem:[#allocation8 + $0x1e8] sm:$0xff]
    %v226 = vld [vmem:[#allocation8 + $0x1f0] sm:$0xff]
    %v227 = vld [vmem:[#allocation8 + $0x1f8] sm:$0xff]
    %v228 = vld [vmem:[%s3] sm:$0xf]
    %v229 = vld [vmem:[%s0] sm:$0xff]
    %v230 = vld [vmem:[%s0 + $0x8] sm:$0xff]
    %v231 = vld [vmem:[%s0 + $0x10] sm:$0xff]
    %v232 = vld [vmem:[%s0 + $0x18] sm:$0xff]
    %v233 = vld [vmem:[%s0 + $0x20] sm:$0xff]
    %v234 = vld [vmem:[%s0 + $0x28] sm:$0xff]
    %v235 = vld [vmem:[%s0 + $0x30] sm:$0xff]
    %v236 = vld [vmem:[%s0 + $0x38] sm:$0xff]
    %v238 = vlaneseq
    %v239 = vshrl.u32 %v238, 7
    %v240 = vsub.s32 0, %v239
    %v241 = vrot.slane %v228, %v240
    %v242 = vlaneseq
    %v243 = vshrl.u32 %v242, 7
    %v244 = vsub.s32 1, %v243
    %v245 = vrot.slane %v228, %v244
    %v246 = vlaneseq
    %v247 = vshrl.u32 %v246, 7
    %v248 = vsub.s32 2, %v247
    %v249 = vrot.slane %v228, %v248
    %v250 = vlaneseq
    %v251 = vshrl.u32 %v250, 7
    %v252 = vsub.s32 3, %v251
    %v253 = vrot.slane %v228, %v252
    %258 = vmatprep.subr.mxu0 %v101
    %259 = vmatpush1.msra.mxu0 %v100
    %260 = vmatprep.subr.mxu0 %v105
    %261 = vmatpush1.msra.mxu0 %v104
    %262 = vmatprep.subr.mxu0 %v109
    %263 = vmatpush1.msra.mxu0 %v108
    %264 = vmatprep.subr.mxu0 %v113
    %265 = vmatpush1.msra.mxu0 %v112
    %266 = vmatprep.subr.mxu0 %v117
    %267 = vmatpush1.msra.mxu0 %v116
    %268 = vmatprep.subr.mxu0 %v121
    %269 = vmatpush1.msra.mxu0 %v120
    %270 = vmatprep.subr.mxu0 %v125
    %271 = vmatpush1.msra.mxu0 %v124
    %272 = vmatprep.subr.mxu0 %v129
    %273 = vmatpush1.msra.mxu0 %v128
    %274 = vmatprep.subr.mxu0 %v133
    %275 = vmatpush1.msra.mxu0 %v132
    %276 = vmatprep.subr.mxu0 %v137
    %277 = vmatpush1.msra.mxu0 %v136
    %278 = vmatprep.subr.mxu0 %v141
    %279 = vmatpush1.msra.mxu0 %v140
    %280 = vmatprep.subr.mxu0 %v145
    %281 = vmatpush1.msra.mxu0 %v144
    %282 = vmatprep.subr.mxu0 %v149
    %283 = vmatpush1.msra.mxu0 %v148
    %284 = vmatprep.subr.mxu0 %v153
    %285 = vmatpush1.msra.mxu0 %v152
    %286 = vmatprep.subr.mxu0 %v157
    %287 = vmatpush1.msra.mxu0 %v156
    %288 = vmatprep.subr.mxu0 %v161
    %289 = vmatpush1.msra.mxu0 %v160
    %290 = vmatprep.subr.mxu0 0.0
    %291 = vmatpush1.msra.mxu0 0.0
    %292 = vmatprep.subr.mxu0 0.0
    %293 = vmatpush1.msra.mxu0 0.0
    %294 = vmatprep.subr.mxu0 0.0
    %295 = vmatpush1.msra.mxu0 0.0
    %296 = vmatprep.subr.mxu0 0.0
    %297 = vmatpush1.msra.mxu0 0.0
    %298 = vmatprep.subr.mxu0 0.0
    %299 = vmatpush1.msra.mxu0 0.0
    %300 = vmatprep.subr.mxu0 0.0
    %301 = vmatpush1.msra.mxu0 0.0
    %302 = vmatprep.subr.mxu0 0.0
    %303 = vmatpush1.msra.mxu0 0.0
    %304 = vmatprep.subr.mxu0 0.0
    %305 = vmatpush1.msra.mxu0 0.0
    %306 = vmatprep.subr.mxu0 0.0
    %307 = vmatpush1.msra.mxu0 0.0
    %308 = vmatprep.subr.mxu0 0.0
    %309 = vmatpush1.msra.mxu0 0.0
    %310 = vmatprep.subr.mxu0 0.0
    %311 = vmatpush1.msra.mxu0 0.0
    %312 = vmatprep.subr.mxu0 0.0
    %313 = vmatpush1.msra.mxu0 0.0
    %314 = vmatprep.subr.mxu0 0.0
    %315 = vmatpush1.msra.mxu0 0.0
    %316 = vmatprep.subr.mxu0 0.0
    %317 = vmatpush1.msra.mxu0 0.0
    %318 = vmatprep.subr.mxu0 0.0
    %319 = vmatpush1.msra.mxu0 0.0
    %320 = vmatprep.subr.mxu0 0.0
    %321 = vmatpush1.msra.mxu0 0.0
    %322 = vmatprep.mubr.f32.mxu0 0.0
    %323 = vmatmul.mubr.f32.gmra.mrb[0].mxu0 %v229
    %v324 = vpop.f32.mrb[0].mxu0
    %v325 = vadd.f32 %v241, %v324
    %v326 = vpop.f32.mrb[0].mxu0
    %v327 = vadd.f32 %v245, %v326
    %328 = vmatprep.mubr.f32.mxu0 0.0
    %329 = vmatmul.mubr.f32.gmra.mrb[0].mxu0 %v230
    %v330 = vpop.f32.mrb[0].mxu0
    %v331 = vadd.f32 %v241, %v330
    %v332 = vpop.f32.mrb[0].mxu0
    %v333 = vadd.f32 %v245, %v332
    %334 = vmatprep.mubr.f32.mxu0 0.0
    %335 = vmatmul.mubr.f32.gmra.mrb[0].mxu0 %v231
    %v336 = vpop.f32.mrb[0].mxu0
    %v337 = vadd.f32 %v241, %v336
    %v338 = vpop.f32.mrb[0].mxu0
    %v339 = vadd.f32 %v245, %v338
    %340 = vmatprep.mubr.f32.mxu0 0.0
    %341 = vmatmul.mubr.f32.gmra.mrb[0].mxu0 %v232
    %v342 = vpop.f32.mrb[0].mxu0
    %v343 = vadd.f32 %v241, %v342
    %v344 = vpop.f32.mrb[0].mxu0
    %v345 = vadd.f32 %v245, %v344
    %346 = vmatprep.mubr.f32.mxu0 0.0
    %347 = vmatmul.mubr.f32.gmra.mrb[0].mxu0 %v233
    %v348 = vpop.f32.mrb[0].mxu0
    %v349 = vadd.f32 %v241, %v348
    %v350 = vpop.f32.mrb[0].mxu0
    %v351 = vadd.f32 %v245, %v350
    %352 = vmatprep.mubr.f32.mxu0 0.0
    %353 = vmatmul.mubr.f32.gmra.mrb[0].mxu0 %v234
    %v354 = vpop.f32.mrb[0].mxu0
    %v355 = vadd.f32 %v241, %v354
    %v356 = vpop.f32.mrb[0].mxu0
    %v357 = vadd.f32 %v245, %v356
    %358 = vmatprep.mubr.f32.mxu0 0.0
    %359 = vmatmul.mubr.f32.gmra.mrb[0].mxu0 %v235
    %v360 = vpop.f32.mrb[0].mxu0
    %v361 = vadd.f32 %v241, %v360
    %v362 = vpop.f32.mrb[0].mxu0
    %v363 = vadd.f32 %v245, %v362
    %364 = vmatprep.mubr.f32.mxu0 0.0
    %365 = vmatmul.mubr.f32.gmra.mrb[0].mxu0 %v236
    %v366 = vpop.f32.mrb[0].mxu0
    %v367 = vadd.f32 %v241, %v366
    %v368 = vpop.f32.mrb[0].mxu0
    %v369 = vadd.f32 %v245, %v368
    %370 = vdwg.mxu0
    %371 = vmatprep.subr.mxu0 %v103
    %372 = vmatpush1.msra.mxu0 %v102
    %373 = vmatprep.subr.mxu0 %v107
    %374 = vmatpush1.msra.mxu0 %v106
    %375 = vmatprep.subr.mxu0 %v111
    %376 = vmatpush1.msra.mxu0 %v110
    %377 = vmatprep.subr.mxu0 %v115
    %378 = vmatpush1.msra.mxu0 %v114
    %379 = vmatprep.subr.mxu0 %v119
    %380 = vmatpush1.msra.mxu0 %v118
    %381 = vmatprep.subr.mxu0 %v123
    %382 = vmatpush1.msra.mxu0 %v122
    %383 = vmatprep.subr.mxu0 %v127
    %384 = vmatpush1.msra.mxu0 %v126
    %385 = vmatprep.subr.mxu0 %v131
    %386 = vmatpush1.msra.mxu0 %v130
    %387 = vmatprep.subr.mxu0 %v135
    %388 = vmatpush1.msra.mxu0 %v134
    %389 = vmatprep.subr.mxu0 %v139
    %390 = vmatpush1.msra.mxu0 %v138
    %391 = vmatprep.subr.mxu0 %v143
    %392 = vmatpush1.msra.mxu0 %v142
    %393 = vmatprep.subr.mxu0 %v147
    %394 = vmatpush1.msra.mxu0 %v146
    %395 = vmatprep.subr.mxu0 %v151
    %396 = vmatpush1.msra.mxu0 %v150
    %397 = vmatprep.subr.mxu0 %v155
    %398 = vmatpush1.msra.mxu0 %v154
    %399 = vmatprep.subr.mxu0 %v159
    %400 = vmatpush1.msra.mxu0 %v158
    %401 = vmatprep.subr.mxu0 %v163
    %402 = vmatpush1.msra.mxu0 %v162
    %403 = vmatprep.subr.mxu0 0.0
    %404 = vmatpush1.msra.mxu0 0.0
    %405 = vmatprep.subr.mxu0 0.0
    %406 = vmatpush1.msra.mxu0 0.0
    %407 = vmatprep.subr.mxu0 0.0
    %408 = vmatpush1.msra.mxu0 0.0
    %409 = vmatprep.subr.mxu0 0.0
    %410 = vmatpush1.msra.mxu0 0.0
    %411 = vmatprep.subr.mxu0 0.0
    %412 = vmatpush1.msra.mxu0 0.0
    %413 = vmatprep.subr.mxu0 0.0
    %414 = vmatpush1.msra.mxu0 0.0
    %415 = vmatprep.subr.mxu0 0.0
    %416 = vmatpush1.msra.mxu0 0.0
    %417 = vmatprep.subr.mxu0 0.0
    %418 = vmatpush1.msra.mxu0 0.0
    %419 = vmatprep.subr.mxu0 0.0
    %420 = vmatpush1.msra.mxu0 0.0
    %421 = vmatprep.subr.mxu0 0.0
    %422 = vmatpush1.msra.mxu0 0.0
    %423 = vmatprep.subr.mxu0 0.0
    %424 = vmatpush1.msra.mxu0 0.0
    %425 = vmatprep.subr.mxu0 0.0
    %426 = vmatpush1.msra.mxu0 0.0
    %427 = vmatprep.subr.mxu0 0.0
    %428 = vmatpush1.msra.mxu0 0.0
    %429 = vmatprep.subr.mxu0 0.0
    %430 = vmatpush1.msra.mxu0 0.0
    %431 = vmatprep.subr.mxu0 0.0
    %432 = vmatpush1.msra.mxu0 0.0
    %433 = vmatprep.subr.mxu0 0.0
    %434 = vmatpush1.msra.mxu0 0.0
    %435 = vmatprep.mubr.f32.mxu0 0.0
    %436 = vmatmul.mubr.f32.gmra.mrb[0].mxu0 %v229
    %v437 = vpop.f32.mrb[0].mxu0
    %v438 = vadd.f32 %v249, %v437
    %v439 = vpop.f32.mrb[0].mxu0
    %v440 = vadd.f32 %v253, %v439
    %441 = vmatprep.mubr.f32.mxu0 0.0
    %442 = vmatmul.mubr.f32.gmra.mrb[0].mxu0 %v230
    %v443 = vpop.f32.mrb[0].mxu0
    %v444 = vadd.f32 %v249, %v443
    %v445 = vpop.f32.mrb[0].mxu0
    %v446 = vadd.f32 %v253, %v445
    %447 = vmatprep.mubr.f32.mxu0 0.0
    %448 = vmatmul.mubr.f32.gmra.mrb[0].mxu0 %v231
    %v449 = vpop.f32.mrb[0].mxu0
    %v450 = vadd.f32 %v249, %v449
    %v451 = vpop.f32.mrb[0].mxu0
    %v452 = vadd.f32 %v253, %v451
    %453 = vmatprep.mubr.f32.mxu0 0.0
    %454 = vmatmul.mubr.f32.gmra.mrb[0].mxu0 %v232
    %v455 = vpop.f32.mrb[0].mxu0
    %v456 = vadd.f32 %v249, %v455
    %v457 = vpop.f32.mrb[0].mxu0
    %v458 = vadd.f32 %v253, %v457
    %459 = vmatprep.mubr.f32.mxu0 0.0
    %460 = vmatmul.mubr.f32.gmra.mrb[0].mxu0 %v233
    %v461 = vpop.f32.mrb[0].mxu0
    %v462 = vadd.f32 %v249, %v461
    %v463 = vpop.f32.mrb[0].mxu0
    %v464 = vadd.f32 %v253, %v463
    %465 = vmatprep.mubr.f32.mxu0 0.0
    %466 = vmatmul.mubr.f32.gmra.mrb[0].mxu0 %v234
    %v467 = vpop.f32.mrb[0].mxu0
    %v468 = vadd.f32 %v249, %v467
    %v469 = vpop.f32.mrb[0].mxu0
    %v470 = vadd.f32 %v253, %v469
    %471 = vmatprep.mubr.f32.mxu0 0.0
    %472 = vmatmul.mubr.f32.gmra.mrb[0].mxu0 %v235
    %v473 = vpop.f32.mrb[0].mxu0
    %v474 = vadd.f32 %v249, %v473
    %v475 = vpop.f32.mrb[0].mxu0
    %v476 = vadd.f32 %v253, %v475
    %477 = vmatprep.mubr.f32.mxu0 0.0
    %478 = vmatmul.mubr.f32.gmra.mrb[0].mxu0 %v236
    %v479 = vpop.f32.mrb[0].mxu0
    %v480 = vadd.f32 %v249, %v479
    %v481 = vpop.f32.mrb[0].mxu0
    %v482 = vadd.f32 %v253, %v481
    %483 = vdwg.mxu0
    %484 = vst [vmem:[#allocation3] sm:$0xff] %v325
    %485 = vst [vmem:[#allocation3 + $0x8] sm:$0xff] %v327
    %486 = vst [vmem:[#allocation3 + $0x10] sm:$0xff] %v438
    %487 = vst [vmem:[#allocation3 + $0x18] sm:$0xff] %v440
    %488 = vst [vmem:[#allocation3 + $0x20] sm:$0xff] %v331
    %489 = vst [vmem:[#allocation3 + $0x28] sm:$0xff] %v333
    %490 = vst [vmem:[#allocation3 + $0x30] sm:$0xff] %v444
    %491 = vst [vmem:[#allocation3 + $0x38] sm:$0xff] %v446
    %492 = vst [vmem:[#allocation3 + $0x40] sm:$0xff] %v337
    %493 = vst [vmem:[#allocation3 + $0x48] sm:$0xff] %v339
    %494 = vst [vmem:[#allocation3 + $0x50] sm:$0xff] %v450
    %495 = vst [vmem:[#allocation3 + $0x58] sm:$0xff] %v452
    %496 = vst [vmem:[#allocation3 + $0x60] sm:$0xff] %v343
    %497 = vst [vmem:[#allocation3 + $0x68] sm:$0xff] %v345
    %498 = vst [vmem:[#allocation3 + $0x70] sm:$0xff] %v456
    %499 = vst [vmem:[#allocation3 + $0x78] sm:$0xff] %v458
    %500 = vst [vmem:[#allocation3 + $0x80] sm:$0xff] %v349
    %501 = vst [vmem:[#allocation3 + $0x88] sm:$0xff] %v351
    %502 = vst [vmem:[#allocation3 + $0x90] sm:$0xff] %v462
    %503 = vst [vmem:[#allocation3 + $0x98] sm:$0xff] %v464
    %504 = vst [vmem:[#allocation3 + $0xa0] sm:$0xff] %v355
    %505 = vst [vmem:[#allocation3 + $0xa8] sm:$0xff] %v357
    %506 = vst [vmem:[#allocation3 + $0xb0] sm:$0xff] %v468
    %507 = vst [vmem:[#allocation3 + $0xb8] sm:$0xff] %v470
    %508 = vst [vmem:[#allocation3 + $0xc0] sm:$0xff] %v361
    %509 = vst [vmem:[#allocation3 + $0xc8] sm:$0xff] %v363
    %510 = vst [vmem:[#allocation3 + $0xd0] sm:$0xff] %v474
    %511 = vst [vmem:[#allocation3 + $0xd8] sm:$0xff] %v476
    %512 = vst [vmem:[#allocation3 + $0xe0] sm:$0xff] %v367
    %513 = vst [vmem:[#allocation3 + $0xe8] sm:$0xff] %v369
    %514 = vst [vmem:[#allocation3 + $0xf0] sm:$0xff] %v480
    %515 = vst [vmem:[#allocation3 + $0xf8] sm:$0xff] %v482
    %516 = vst [vmem:[#allocation4] sm:$0xff] 0.0
    %517 = vst [vmem:[#allocation5] sm:$0xff] 0.0
    %v518 = vld [vmem:[#allocation4] sm:$0xff]
    %v519 = vld [vmem:[#allocation5] sm:$0xff]
    %s520 = smul.u32 0, 4
    %s521 = smul.addr %s520, 8
    %s522 = scalar_lea.vmem [#allocation3], %s521
    %v523 = vld [vmem:[%s522] sm:$0xff]
    %v524 = vld [vmem:[%s522 + $0x8] sm:$0xff]
    %v525 = vld [vmem:[%s522 + $0x10] sm:$0xff]
    %v526 = vld [vmem:[%s522 + $0x18] sm:$0xff]
    %527 = vmatprep.subr.mxu0 %v165
    %528 = vmatpush1.msra.mxu0 %v164
    %529 = vmatprep.subr.mxu0 %v169
    %530 = vmatpush1.msra.mxu0 %v168
    %531 = vmatprep.subr.mxu0 %v173
    %532 = vmatpush1.msra.mxu0 %v172
    %533 = vmatprep.subr.mxu0 %v177
    %534 = vmatpush1.msra.mxu0 %v176
    %535 = vmatprep.subr.mxu0 %v181
    %536 = vmatpush1.msra.mxu0 %v180
    %537 = vmatprep.subr.mxu0 %v185
    %538 = vmatpush1.msra.mxu0 %v184
    %539 = vmatprep.subr.mxu0 %v189
    %540 = vmatpush1.msra.mxu0 %v188
    %541 = vmatprep.subr.mxu0 %v193
    %542 = vmatpush1.msra.mxu0 %v192
    %543 = vmatprep.subr.mxu0 %v197
    %544 = vmatpush1.msra.mxu0 %v196
    %545 = vmatprep.subr.mxu0 %v201
    %546 = vmatpush1.msra.mxu0 %v200
    %547 = vmatprep.subr.mxu0 %v205
    %548 = vmatpush1.msra.mxu0 %v204
    %549 = vmatprep.subr.mxu0 %v209
    %550 = vmatpush1.msra.mxu0 %v208
    %551 = vmatprep.subr.mxu0 %v213
    %552 = vmatpush1.msra.mxu0 %v212
    %553 = vmatprep.subr.mxu0 %v217
    %554 = vmatpush1.msra.mxu0 %v216
    %555 = vmatprep.subr.mxu0 %v221
    %556 = vmatpush1.msra.mxu0 %v220
    %557 = vmatprep.subr.mxu0 %v225
    %558 = vmatpush1.msra.mxu0 %v224
    %559 = vmatprep.subr.mxu0 0.0
    %560 = vmatpush1.msra.mxu0 0.0
    %561 = vmatprep.subr.mxu0 0.0
    %562 = vmatpush1.msra.mxu0 0.0
    %563 = vmatprep.subr.mxu0 0.0
    %564 = vmatpush1.msra.mxu0 0.0
    %565 = vmatprep.subr.mxu0 0.0
    %566 = vmatpush1.msra.mxu0 0.0
    %567 = vmatprep.subr.mxu0 0.0
    %568 = vmatpush1.msra.mxu0 0.0
    %569 = vmatprep.subr.mxu0 0.0
    %570 = vmatpush1.msra.mxu0 0.0
    %571 = vmatprep.subr.mxu0 0.0
    %572 = vmatpush1.msra.mxu0 0.0
    %573 = vmatprep.subr.mxu0 0.0
    %574 = vmatpush1.msra.mxu0 0.0
    %575 = vmatprep.subr.mxu0 0.0
    %576 = vmatpush1.msra.mxu0 0.0
    %577 = vmatprep.subr.mxu0 0.0
    %578 = vmatpush1.msra.mxu0 0.0
    %579 = vmatprep.subr.mxu0 0.0
    %580 = vmatpush1.msra.mxu0 0.0
    %581 = vmatprep.subr.mxu0 0.0
    %582 = vmatpush1.msra.mxu0 0.0
    %583 = vmatprep.subr.mxu0 0.0
    %584 = vmatpush1.msra.mxu0 0.0
    %585 = vmatprep.subr.mxu0 0.0
    %586 = vmatpush1.msra.mxu0 0.0
    %587 = vmatprep.subr.mxu0 0.0
    %588 = vmatpush1.msra.mxu0 0.0
    %589 = vmatprep.subr.mxu0 0.0
    %590 = vmatpush1.msra.mxu0 0.0
    %591 = vmatprep.mubr.f32.mxu0 0.0
    %592 = vmatmul.mubr.f32.gmra.mrb[0].mxu0 %v518
    %v593 = vpop.f32.mrb[0].mxu0
    %v594 = vadd.f32 0.0, %v593
    %v595 = vpop.f32.mrb[0].mxu0
    %v596 = vadd.f32 0.0, %v595
    %597 = vdwg.mxu0
    %598 = vmatprep.subr.mxu0 %v167
    %599 = vmatpush1.msra.mxu0 %v166
    %600 = vmatprep.subr.mxu0 %v171
    %601 = vmatpush1.msra.mxu0 %v170
    %602 = vmatprep.subr.mxu0 %v175
    %603 = vmatpush1.msra.mxu0 %v174
    %604 = vmatprep.subr.mxu0 %v179
    %605 = vmatpush1.msra.mxu0 %v178
    %606 = vmatprep.subr.mxu0 %v183
    %607 = vmatpush1.msra.mxu0 %v182
    %608 = vmatprep.subr.mxu0 %v187
    %609 = vmatpush1.msra.mxu0 %v186
    %610 = vmatprep.subr.mxu0 %v191
    %611 = vmatpush1.msra.mxu0 %v190
    %612 = vmatprep.subr.mxu0 %v195
    %613 = vmatpush1.msra.mxu0 %v194
    %614 = vmatprep.subr.mxu0 %v199
    %615 = vmatpush1.msra.mxu0 %v198
    %616 = vmatprep.subr.mxu0 %v203
    %617 = vmatpush1.msra.mxu0 %v202
    %618 = vmatprep.subr.mxu0 %v207
    %619 = vmatpush1.msra.mxu0 %v206
    %620 = vmatprep.subr.mxu0 %v211
    %621 = vmatpush1.msra.mxu0 %v210
    %622 = vmatprep.subr.mxu0 %v215
    %623 = vmatpush1.msra.mxu0 %v214
    %624 = vmatprep.subr.mxu0 %v219
    %625 = vmatpush1.msra.mxu0 %v218
    %626 = vmatprep.subr.mxu0 %v223
    %627 = vmatpush1.msra.mxu0 %v222
    %628 = vmatprep.subr.mxu0 %v227
    %629 = vmatpush1.msra.mxu0 %v226
    %630 = vmatprep.subr.mxu0 0.0
    %631 = vmatpush1.msra.mxu0 0.0
    %632 = vmatprep.subr.mxu0 0.0
    %633 = vmatpush1.msra.mxu0 0.0
    %634 = vmatprep.subr.mxu0 0.0
    %635 = vmatpush1.msra.mxu0 0.0
    %636 = vmatprep.subr.mxu0 0.0
    %637 = vmatpush1.msra.mxu0 0.0
    %638 = vmatprep.subr.mxu0 0.0
    %639 = vmatpush1.msra.mxu0 0.0
    %640 = vmatprep.subr.mxu0 0.0
    %641 = vmatpush1.msra.mxu0 0.0
    %642 = vmatprep.subr.mxu0 0.0
    %643 = vmatpush1.msra.mxu0 0.0
    %644 = vmatprep.subr.mxu0 0.0
    %645 = vmatpush1.msra.mxu0 0.0
    %646 = vmatprep.subr.mxu0 0.0
    %647 = vmatpush1.msra.mxu0 0.0
    %648 = vmatprep.subr.mxu0 0.0
    %649 = vmatpush1.msra.mxu0 0.0
    %650 = vmatprep.subr.mxu0 0.0
    %651 = vmatpush1.msra.mxu0 0.0
    %652 = vmatprep.subr.mxu0 0.0
    %653 = vmatpush1.msra.mxu0 0.0
    %654 = vmatprep.subr.mxu0 0.0
    %655 = vmatpush1.msra.mxu0 0.0
    %656 = vmatprep.subr.mxu0 0.0
    %657 = vmatpush1.msra.mxu0 0.0
    %658 = vmatprep.subr.mxu0 0.0
    %659 = vmatpush1.msra.mxu0 0.0
    %660 = vmatprep.subr.mxu0 0.0
    %661 = vmatpush1.msra.mxu0 0.0
    %662 = vmatprep.mubr.f32.mxu0 0.0
    %663 = vmatmul.mubr.f32.gmra.mrb[0].mxu0 %v518
    %v664 = vpop.f32.mrb[0].mxu0
    %v665 = vadd.f32 0.0, %v664
    %v666 = vpop.f32.mrb[0].mxu0
    %v667 = vadd.f32 0.0, %v666
    %668 = vdwg.mxu0
    %v669 = vadd.f32 %v523, %v594
    %v670 = vadd.f32 %v524, %v596
    %v671 = vadd.f32 %v525, %v665
    %v672 = vadd.f32 %v526, %v667
    %v673 = vxor.u32 %v669, 2147483648
    %v674 = vmul.f32 %v673, 1.442695
    %v675 = vpow.pop %v674
    %v676 = vadd.f32 %v675, 1.0
    %v677 = vrcp.pop %v676
    %v678 = vmul.f32 1.0, %v677
    %v679 = vxor.u32 %v670, 2147483648
    %v680 = vmul.f32 %v679, 1.442695
    %v681 = vpow.pop %v680
    %v682 = vadd.f32 %v681, 1.0
    %v683 = vrcp.pop %v682
    %v684 = vmul.f32 1.0, %v683
    %v685 = vtanh.pop %v671
    %v686 = vxor.u32 %v672, 2147483648
    %v687 = vmul.f32 %v686, 1.442695
    %v688 = vpow.pop %v687
    %v689 = vadd.f32 %v688, 1.0
    %v690 = vrcp.pop %v689
    %v691 = vmul.f32 1.0, %v690
    %v692 = vmul.f32 %v684, %v519
    %v693 = vmul.f32 %v678, %v685
    %v694 = vadd.f32 %v692, %v693
    %v695 = vtanh.pop %v694
    %v696 = vmul.f32 %v691, %v695
    %697 = vst [vmem:[#allocation4] sm:$0xff] %v696
    %698 = vst [vmem:[#allocation5] sm:$0xff] %v694
    %699 = vst [vmem:[#allocation2] sm:$0xff] %v696
    %v700 = vld [vmem:[#allocation4] sm:$0xff]
    %v701 = vld [vmem:[#allocation5] sm:$0xff]
    %s702 = smul.u32 1, 4
    %s703 = smul.addr %s702, 8
    %s704 = scalar_lea.vmem [#allocation3], %s703
    %v705 = vld [vmem:[%s704] sm:$0xff]
    %v706 = vld [vmem:[%s704 + $0x8] sm:$0xff]
    %v707 = vld [vmem:[%s704 + $0x10] sm:$0xff]
    %v708 = vld [vmem:[%s704 + $0x18] sm:$0xff]
    %709 = vmatprep.subr.mxu0 %v165
    %710 = vmatpush1.msra.mxu0 %v164
    %711 = vmatprep.subr.mxu0 %v169
    %712 = vmatpush1.msra.mxu0 %v168
    %713 = vmatprep.subr.mxu0 %v173
    %714 = vmatpush1.msra.mxu0 %v172
    %715 = vmatprep.subr.mxu0 %v177
    %716 = vmatpush1.msra.mxu0 %v176
    %717 = vmatprep.subr.mxu0 %v181
    %718 = vmatpush1.msra.mxu0 %v180
    %719 = vmatprep.subr.mxu0 %v185
    %720 = vmatpush1.msra.mxu0 %v184
    %721 = vmatprep.subr.mxu0 %v189
    %722 = vmatpush1.msra.mxu0 %v188
    %723 = vmatprep.subr.mxu0 %v193
    %724 = vmatpush1.msra.mxu0 %v192
    %725 = vmatprep.subr.mxu0 %v197
    %726 = vmatpush1.msra.mxu0 %v196
    %727 = vmatprep.subr.mxu0 %v201
    %728 = vmatpush1.msra.mxu0 %v200
    %729 = vmatprep.subr.mxu0 %v205
    %730 = vmatpush1.msra.mxu0 %v204
    %731 = vmatprep.subr.mxu0 %v209
    %732 = vmatpush1.msra.mxu0 %v208
    %733 = vmatprep.subr.mxu0 %v213
    %734 = vmatpush1.msra.mxu0 %v212
    %735 = vmatprep.subr.mxu0 %v217
    %736 = vmatpush1.msra.mxu0 %v216
    %737 = vmatprep.subr.mxu0 %v221
    %738 = vmatpush1.msra.mxu0 %v220
    %739 = vmatprep.subr.mxu0 %v225
    %740 = vmatpush1.msra.mxu0 %v224
    %741 = vmatprep.subr.mxu0 0.0
    %742 = vmatpush1.msra.mxu0 0.0
    %743 = vmatprep.subr.mxu0 0.0
    %744 = vmatpush1.msra.mxu0 0.0
    %745 = vmatprep.subr.mxu0 0.0
    %746 = vmatpush1.msra.mxu0 0.0
    %747 = vmatprep.subr.mxu0 0.0
    %748 = vmatpush1.msra.mxu0 0.0
    %749 = vmatprep.subr.mxu0 0.0
    %750 = vmatpush1.msra.mxu0 0.0
    %751 = vmatprep.subr.mxu0 0.0
    %752 = vmatpush1.msra.mxu0 0.0
    %753 = vmatprep.subr.mxu0 0.0
    %754 = vmatpush1.msra.mxu0 0.0
    %755 = vmatprep.subr.mxu0 0.0
    %756 = vmatpush1.msra.mxu0 0.0
    %757 = vmatprep.subr.mxu0 0.0
    %758 = vmatpush1.msra.mxu0 0.0
    %759 = vmatprep.subr.mxu0 0.0
    %760 = vmatpush1.msra.mxu0 0.0
    %761 = vmatprep.subr.mxu0 0.0
    %762 = vmatpush1.msra.mxu0 0.0
    %763 = vmatprep.subr.mxu0 0.0
    %764 = vmatpush1.msra.mxu0 0.0
    %765 = vmatprep.subr.mxu0 0.0
    %766 = vmatpush1.msra.mxu0 0.0
    %767 = vmatprep.subr.mxu0 0.0
    %768 = vmatpush1.msra.mxu0 0.0
    %769 = vmatprep.subr.mxu0 0.0
    %770 = vmatpush1.msra.mxu0 0.0
    %771 = vmatprep.subr.mxu0 0.0
    %772 = vmatpush1.msra.mxu0 0.0
    %773 = vmatprep.mubr.f32.mxu0 0.0
    %774 = vmatmul.mubr.f32.gmra.mrb[0].mxu0 %v700
    %v775 = vpop.f32.mrb[0].mxu0
    %v776 = vadd.f32 0.0, %v775
    %v777 = vpop.f32.mrb[0].mxu0
    %v778 = vadd.f32 0.0, %v777
    %779 = vdwg.mxu0
    %780 = vmatprep.subr.mxu0 %v167
    %781 = vmatpush1.msra.mxu0 %v166
    %782 = vmatprep.subr.mxu0 %v171
    %783 = vmatpush1.msra.mxu0 %v170
    %784 = vmatprep.subr.mxu0 %v175
    %785 = vmatpush1.msra.mxu0 %v174
    %786 = vmatprep.subr.mxu0 %v179
    %787 = vmatpush1.msra.mxu0 %v178
    %788 = vmatprep.subr.mxu0 %v183
    %789 = vmatpush1.msra.mxu0 %v182
    %790 = vmatprep.subr.mxu0 %v187
    %791 = vmatpush1.msra.mxu0 %v186
    %792 = vmatprep.subr.mxu0 %v191
    %793 = vmatpush1.msra.mxu0 %v190
    %794 = vmatprep.subr.mxu0 %v195
    %795 = vmatpush1.msra.mxu0 %v194
    %796 = vmatprep.subr.mxu0 %v199
    %797 = vmatpush1.msra.mxu0 %v198
    %798 = vmatprep.subr.mxu0 %v203
    %799 = vmatpush1.msra.mxu0 %v202
    %800 = vmatprep.subr.mxu0 %v207
    %801 = vmatpush1.msra.mxu0 %v206
    %802 = vmatprep.subr.mxu0 %v211
    %803 = vmatpush1.msra.mxu0 %v210
    %804 = vmatprep.subr.mxu0 %v215
    %805 = vmatpush1.msra.mxu0 %v214
    %806 = vmatprep.subr.mxu0 %v219
    %807 = vmatpush1.msra.mxu0 %v218
    %808 = vmatprep.subr.mxu0 %v223
    %809 = vmatpush1.msra.mxu0 %v222
    %810 = vmatprep.subr.mxu0 %v227
    %811 = vmatpush1.msra.mxu0 %v226
    %812 = vmatprep.subr.mxu0 0.0
    %813 = vmatpush1.msra.mxu0 0.0
    %814 = vmatprep.subr.mxu0 0.0
    %815 = vmatpush1.msra.mxu0 0.0
    %816 = vmatprep.subr.mxu0 0.0
    %817 = vmatpush1.msra.mxu0 0.0
    %818 = vmatprep.subr.mxu0 0.0
    %819 = vmatpush1.msra.mxu0 0.0
    %820 = vmatprep.subr.mxu0 0.0
    %821 = vmatpush1.msra.mxu0 0.0
    %822 = vmatprep.subr.mxu0 0.0
    %823 = vmatpush1.msra.mxu0 0.0
    %824 = vmatprep.subr.mxu0 0.0
    %825 = vmatpush1.msra.mxu0 0.0
    %826 = vmatprep.subr.mxu0 0.0
    %827 = vmatpush1.msra.mxu0 0.0
    %828 = vmatprep.subr.mxu0 0.0
    %829 = vmatpush1.msra.mxu0 0.0
    %830 = vmatprep.subr.mxu0 0.0
    %831 = vmatpush1.msra.mxu0 0.0
    %832 = vmatprep.subr.mxu0 0.0
    %833 = vmatpush1.msra.mxu0 0.0
    %834 = vmatprep.subr.mxu0 0.0
    %835 = vmatpush1.msra.mxu0 0.0
    %836 = vmatprep.subr.mxu0 0.0
    %837 = vmatpush1.msra.mxu0 0.0
    %838 = vmatprep.subr.mxu0 0.0
    %839 = vmatpush1.msra.mxu0 0.0
    %840 = vmatprep.subr.mxu0 0.0
    %841 = vmatpush1.msra.mxu0 0.0
    %842 = vmatprep.subr.mxu0 0.0
    %843 = vmatpush1.msra.mxu0 0.0
    %844 = vmatprep.mubr.f32.mxu0 0.0
    %845 = vmatmul.mubr.f32.gmra.mrb[0].mxu0 %v700
    %v846 = vpop.f32.mrb[0].mxu0
    %v847 = vadd.f32 0.0, %v846
    %v848 = vpop.f32.mrb[0].mxu0
    %v849 = vadd.f32 0.0, %v848
    %850 = vdwg.mxu0
    %v851 = vadd.f32 %v705, %v776
    %v852 = vadd.f32 %v706, %v778
    %v853 = vadd.f32 %v707, %v847
    %v854 = vadd.f32 %v708, %v849
    %v855 = vxor.u32 %v851, 2147483648
    %v856 = vmul.f32 %v855, 1.442695
    %v857 = vpow.pop %v856
    %v858 = vadd.f32 %v857, 1.0
    %v859 = vrcp.pop %v858
    %v860 = vmul.f32 1.0, %v859
    %v861 = vxor.u32 %v852, 2147483648
    %v862 = vmul.f32 %v861, 1.442695
    %v863 = vpow.pop %v862
    %v864 = vadd.f32 %v863, 1.0
    %v865 = vrcp.pop %v864
    %v866 = vmul.f32 1.0, %v865
    %v867 = vtanh.pop %v853
    %v868 = vxor.u32 %v854, 2147483648
    %v869 = vmul.f32 %v868, 1.442695
    %v870 = vpow.pop %v869
    %v871 = vadd.f32 %v870, 1.0
    %v872 = vrcp.pop %v871
    %v873 = vmul.f32 1.0, %v872
    %v874 = vmul.f32 %v866, %v701
    %v875 = vmul.f32 %v860, %v867
    %v876 = vadd.f32 %v874, %v875
    %v877 = vtanh.pop %v876
    %v878 = vmul.f32 %v873, %v877
    %879 = vst [vmem:[#allocation4] sm:$0xff] %v878
    %880 = vst [vmem:[#allocation5] sm:$0xff] %v876
    %s881 = scalar_lea.vmem [#allocation2], 8
    %882 = vst [vmem:[%s881] sm:$0xff] %v878
    %v883 = vld [vmem:[#allocation4] sm:$0xff]
    %v884 = vld [vmem:[#allocation5] sm:$0xff]
    %s885 = smul.u32 2, 4
    %s886 = smul.addr %s885, 8
    %s887 = scalar_lea.vmem [#allocation3], %s886
    %v888 = vld [vmem:[%s887] sm:$0xff]
    %v889 = vld [vmem:[%s887 + $0x8] sm:$0xff]
    %v890 = vld [vmem:[%s887 + $0x10] sm:$0xff]
    %v891 = vld [vmem:[%s887 + $0x18] sm:$0xff]
    %892 = vmatprep.subr.mxu0 %v165
    %893 = vmatpush1.msra.mxu0 %v164
    %894 = vmatprep.subr.mxu0 %v169
    %895 = vmatpush1.msra.mxu0 %v168
    %896 = vmatprep.subr.mxu0 %v173
    %897 = vmatpush1.msra.mxu0 %v172
    %898 = vmatprep.subr.mxu0 %v177
    %899 = vmatpush1.msra.mxu0 %v176
    %900 = vmatprep.subr.mxu0 %v181
    %901 = vmatpush1.msra.mxu0 %v180
    %902 = vmatprep.subr.mxu0 %v185
    %903 = vmatpush1.msra.mxu0 %v184
    %904 = vmatprep.subr.mxu0 %v189
    %905 = vmatpush1.msra.mxu0 %v188
    %906 = vmatprep.subr.mxu0 %v193
    %907 = vmatpush1.msra.mxu0 %v192
    %908 = vmatprep.subr.mxu0 %v197
    %909 = vmatpush1.msra.mxu0 %v196
    %910 = vmatprep.subr.mxu0 %v201
    %911 = vmatpush1.msra.mxu0 %v200
    %912 = vmatprep.subr.mxu0 %v205
    %913 = vmatpush1.msra.mxu0 %v204
    %914 = vmatprep.subr.mxu0 %v209
    %915 = vmatpush1.msra.mxu0 %v208
    %916 = vmatprep.subr.mxu0 %v213
    %917 = vmatpush1.msra.mxu0 %v212
    %918 = vmatprep.subr.mxu0 %v217
    %919 = vmatpush1.msra.mxu0 %v216
    %920 = vmatprep.subr.mxu0 %v221
    %921 = vmatpush1.msra.mxu0 %v220
    %922 = vmatprep.subr.mxu0 %v225
    %923 = vmatpush1.msra.mxu0 %v224
    %924 = vmatprep.subr.mxu0 0.0
    %925 = vmatpush1.msra.mxu0 0.0
    %926 = vmatprep.subr.mxu0 0.0
    %927 = vmatpush1.msra.mxu0 0.0
    %928 = vmatprep.subr.mxu0 0.0
    %929 = vmatpush1.msra.mxu0 0.0
    %930 = vmatprep.subr.mxu0 0.0
    %931 = vmatpush1.msra.mxu0 0.0
    %932 = vmatprep.subr.mxu0 0.0
    %933 = vmatpush1.msra.mxu0 0.0
    %934 = vmatprep.subr.mxu0 0.0
    %935 = vmatpush1.msra.mxu0 0.0
    %936 = vmatprep.subr.mxu0 0.0
    %937 = vmatpush1.msra.mxu0 0.0
    %938 = vmatprep.subr.mxu0 0.0
    %939 = vmatpush1.msra.mxu0 0.0
    %940 = vmatprep.subr.mxu0 0.0
    %941 = vmatpush1.msra.mxu0 0.0
    %942 = vmatprep.subr.mxu0 0.0
    %943 = vmatpush1.msra.mxu0 0.0
    %944 = vmatprep.subr.mxu0 0.0
    %945 = vmatpush1.msra.mxu0 0.0
    %946 = vmatprep.subr.mxu0 0.0
    %947 = vmatpush1.msra.mxu0 0.0
    %948 = vmatprep.subr.mxu0 0.0
    %949 = vmatpush1.msra.mxu0 0.0
    %950 = vmatprep.subr.mxu0 0.0
    %951 = vmatpush1.msra.mxu0 0.0
    %952 = vmatprep.subr.mxu0 0.0
    %953 = vmatpush1.msra.mxu0 0.0
    %954 = vmatprep.subr.mxu0 0.0
    %955 = vmatpush1.msra.mxu0 0.0
    %956 = vmatprep.mubr.f32.mxu0 0.0
    %957 = vmatmul.mubr.f32.gmra.mrb[0].mxu0 %v883
    %v958 = vpop.f32.mrb[0].mxu0
    %v959 = vadd.f32 0.0, %v958
    %v960 = vpop.f32.mrb[0].mxu0
    %v961 = vadd.f32 0.0, %v960
    %962 = vdwg.mxu0
    %963 = vmatprep.subr.mxu0 %v167
    %964 = vmatpush1.msra.mxu0 %v166
    %965 = vmatprep.subr.mxu0 %v171
    %966 = vmatpush1.msra.mxu0 %v170
    %967 = vmatprep.subr.mxu0 %v175
    %968 = vmatpush1.msra.mxu0 %v174
    %969 = vmatprep.subr.mxu0 %v179
    %970 = vmatpush1.msra.mxu0 %v178
    %971 = vmatprep.subr.mxu0 %v183
    %972 = vmatpush1.msra.mxu0 %v182
    %973 = vmatprep.subr.mxu0 %v187
    %974 = vmatpush1.msra.mxu0 %v186
    %975 = vmatprep.subr.mxu0 %v191
    %976 = vmatpush1.msra.mxu0 %v190
    %977 = vmatprep.subr.mxu0 %v195
    %978 = vmatpush1.msra.mxu0 %v194
    %979 = vmatprep.subr.mxu0 %v199
    %980 = vmatpush1.msra.mxu0 %v198
    %981 = vmatprep.subr.mxu0 %v203
    %982 = vmatpush1.msra.mxu0 %v202
    %983 = vmatprep.subr.mxu0 %v207
    %984 = vmatpush1.msra.mxu0 %v206
    %985 = vmatprep.subr.mxu0 %v211
    %986 = vmatpush1.msra.mxu0 %v210
    %987 = vmatprep.subr.mxu0 %v215
    %988 = vmatpush1.msra.mxu0 %v214
    %989 = vmatprep.subr.mxu0 %v219
    %990 = vmatpush1.msra.mxu0 %v218
    %991 = vmatprep.subr.mxu0 %v223
    %992 = vmatpush1.msra.mxu0 %v222
    %993 = vmatprep.subr.mxu0 %v227
    %994 = vmatpush1.msra.mxu0 %v226
    %995 = vmatprep.subr.mxu0 0.0
    %996 = vmatpush1.msra.mxu0 0.0
    %997 = vmatprep.subr.mxu0 0.0
    %998 = vmatpush1.msra.mxu0 0.0
    %999 = vmatprep.subr.mxu0 0.0
    %1000 = vmatpush1.msra.mxu0 0.0
    %1001 = vmatprep.subr.mxu0 0.0
    %1002 = vmatpush1.msra.mxu0 0.0
    %1003 = vmatprep.subr.mxu0 0.0
    %1004 = vmatpush1.msra.mxu0 0.0
    %1005 = vmatprep.subr.mxu0 0.0
    %1006 = vmatpush1.msra.mxu0 0.0
    %1007 = vmatprep.subr.mxu0 0.0
    %1008 = vmatpush1.msra.mxu0 0.0
    %1009 = vmatprep.subr.mxu0 0.0
    %1010 = vmatpush1.msra.mxu0 0.0
    %1011 = vmatprep.subr.mxu0 0.0
    %1012 = vmatpush1.msra.mxu0 0.0
    %1013 = vmatprep.subr.mxu0 0.0
    %1014 = vmatpush1.msra.mxu0 0.0
    %1015 = vmatprep.subr.mxu0 0.0
    %1016 = vmatpush1.msra.mxu0 0.0
    %1017 = vmatprep.subr.mxu0 0.0
    %1018 = vmatpush1.msra.mxu0 0.0
    %1019 = vmatprep.subr.mxu0 0.0
    %1020 = vmatpush1.msra.mxu0 0.0
    %1021 = vmatprep.subr.mxu0 0.0
    %1022 = vmatpush1.msra.mxu0 0.0
    %1023 = vmatprep.subr.mxu0 0.0
    %1024 = vmatpush1.msra.mxu0 0.0
    %1025 = vmatprep.subr.mxu0 0.0
    %1026 = vmatpush1.msra.mxu0 0.0
    %1027 = vmatprep.mubr.f32.mxu0 0.0
    %1028 = vmatmul.mubr.f32.gmra.mrb[0].mxu0 %v883
    %v1029 = vpop.f32.mrb[0].mxu0
    %v1030 = vadd.f32 0.0, %v1029
    %v1031 = vpop.f32.mrb[0].mxu0
    %v1032 = vadd.f32 0.0, %v1031
    %1033 = vdwg.mxu0
    %v1034 = vadd.f32 %v888, %v959
    %v1035 = vadd.f32 %v889, %v961
    %v1036 = vadd.f32 %v890, %v1030
    %v1037 = vadd.f32 %v891, %v1032
    %v1038 = vxor.u32 %v1034, 2147483648
    %v1039 = vmul.f32 %v1038, 1.442695
    %v1040 = vpow.pop %v1039
    %v1041 = vadd.f32 %v1040, 1.0
    %v1042 = vrcp.pop %v1041
    %v1043 = vmul.f32 1.0, %v1042
    %v1044 = vxor.u32 %v1035, 2147483648
    %v1045 = vmul.f32 %v1044, 1.442695
    %v1046 = vpow.pop %v1045
    %v1047 = vadd.f32 %v1046, 1.0
    %v1048 = vrcp.pop %v1047
    %v1049 = vmul.f32 1.0, %v1048
    %v1050 = vtanh.pop %v1036
    %v1051 = vxor.u32 %v1037, 2147483648
    %v1052 = vmul.f32 %v1051, 1.442695
    %v1053 = vpow.pop %v1052
    %v1054 = vadd.f32 %v1053, 1.0
    %v1055 = vrcp.pop %v1054
    %v1056 = vmul.f32 1.0, %v1055
    %v1057 = vmul.f32 %v1049, %v884
    %v1058 = vmul.f32 %v1043, %v1050
    %v1059 = vadd.f32 %v1057, %v1058
    %v1060 = vtanh.pop %v1059
    %v1061 = vmul.f32 %v1056, %v1060
    %1062 = vst [vmem:[#allocation4] sm:$0xff] %v1061
    %1063 = vst [vmem:[#allocation5] sm:$0xff] %v1059
    %s1064 = scalar_lea.vmem [#allocation2], 16
    %1065 = vst [vmem:[%s1064] sm:$0xff] %v1061
    %v1066 = vld [vmem:[#allocation4] sm:$0xff]
    %v1067 = vld [vmem:[#allocation5] sm:$0xff]
    %s1068 = smul.u32 3, 4
    %s1069 = smul.addr %s1068, 8
    %s1070 = scalar_lea.vmem [#allocation3], %s1069
    %v1071 = vld [vmem:[%s1070] sm:$0xff]
    %v1072 = vld [vmem:[%s1070 + $0x8] sm:$0xff]
    %v1073 = vld [vmem:[%s1070 + $0x10] sm:$0xff]
    %v1074 = vld [vmem:[%s1070 + $0x18] sm:$0xff]
    %1075 = vmatprep.subr.mxu0 %v165
    %1076 = vmatpush1.msra.mxu0 %v164
    %1077 = vmatprep.subr.mxu0 %v169
    %1078 = vmatpush1.msra.mxu0 %v168
    %1079 = vmatprep.subr.mxu0 %v173
    %1080 = vmatpush1.msra.mxu0 %v172
    %1081 = vmatprep.subr.mxu0 %v177
    %1082 = vmatpush1.msra.mxu0 %v176
    %1083 = vmatprep.subr.mxu0 %v181
    %1084 = vmatpush1.msra.mxu0 %v180
    %1085 = vmatprep.subr.mxu0 %v185
    %1086 = vmatpush1.msra.mxu0 %v184
    %1087 = vmatprep.subr.mxu0 %v189
    %1088 = vmatpush1.msra.mxu0 %v188
    %1089 = vmatprep.subr.mxu0 %v193
    %1090 = vmatpush1.msra.mxu0 %v192
    %1091 = vmatprep.subr.mxu0 %v197
    %1092 = vmatpush1.msra.mxu0 %v196
    %1093 = vmatprep.subr.mxu0 %v201
    %1094 = vmatpush1.msra.mxu0 %v200
    %1095 = vmatprep.subr.mxu0 %v205
    %1096 = vmatpush1.msra.mxu0 %v204
    %1097 = vmatprep.subr.mxu0 %v209
    %1098 = vmatpush1.msra.mxu0 %v208
    %1099 = vmatprep.subr.mxu0 %v213
    %1100 = vmatpush1.msra.mxu0 %v212
    %1101 = vmatprep.subr.mxu0 %v217
    %1102 = vmatpush1.msra.mxu0 %v216
    %1103 = vmatprep.subr.mxu0 %v221
    %1104 = vmatpush1.msra.mxu0 %v220
    %1105 = vmatprep.subr.mxu0 %v225
    %1106 = vmatpush1.msra.mxu0 %v224
    %1107 = vmatprep.subr.mxu0 0.0
    %1108 = vmatpush1.msra.mxu0 0.0
    %1109 = vmatprep.subr.mxu0 0.0
    %1110 = vmatpush1.msra.mxu0 0.0
    %1111 = vmatprep.subr.mxu0 0.0
    %1112 = vmatpush1.msra.mxu0 0.0
    %1113 = vmatprep.subr.mxu0 0.0
    %1114 = vmatpush1.msra.mxu0 0.0
    %1115 = vmatprep.subr.mxu0 0.0
    %1116 = vmatpush1.msra.mxu0 0.0
    %1117 = vmatprep.subr.mxu0 0.0
    %1118 = vmatpush1.msra.mxu0 0.0
    %1119 = vmatprep.subr.mxu0 0.0
    %1120 = vmatpush1.msra.mxu0 0.0
    %1121 = vmatprep.subr.mxu0 0.0
    %1122 = vmatpush1.msra.mxu0 0.0
    %1123 = vmatprep.subr.mxu0 0.0
    %1124 = vmatpush1.msra.mxu0 0.0
    %1125 = vmatprep.subr.mxu0 0.0
    %1126 = vmatpush1.msra.mxu0 0.0
    %1127 = vmatprep.subr.mxu0 0.0
    %1128 = vmatpush1.msra.mxu0 0.0
    %1129 = vmatprep.subr.mxu0 0.0
    %1130 = vmatpush1.msra.mxu0 0.0
    %1131 = vmatprep.subr.mxu0 0.0
    %1132 = vmatpush1.msra.mxu0 0.0
    %1133 = vmatprep.subr.mxu0 0.0
    %1134 = vmatpush1.msra.mxu0 0.0
    %1135 = vmatprep.subr.mxu0 0.0
    %1136 = vmatpush1.msra.mxu0 0.0
    %1137 = vmatprep.subr.mxu0 0.0
    %1138 = vmatpush1.msra.mxu0 0.0
    %1139 = vmatprep.mubr.f32.mxu0 0.0
    %1140 = vmatmul.mubr.f32.gmra.mrb[0].mxu0 %v1066
    %v1141 = vpop.f32.mrb[0].mxu0
    %v1142 = vadd.f32 0.0, %v1141
    %v1143 = vpop.f32.mrb[0].mxu0
    %v1144 = vadd.f32 0.0, %v1143
    %1145 = vdwg.mxu0
    %1146 = vmatprep.subr.mxu0 %v167
    %1147 = vmatpush1.msra.mxu0 %v166
    %1148 = vmatprep.subr.mxu0 %v171
    %1149 = vmatpush1.msra.mxu0 %v170
    %1150 = vmatprep.subr.mxu0 %v175
    %1151 = vmatpush1.msra.mxu0 %v174
    %1152 = vmatprep.subr.mxu0 %v179
    %1153 = vmatpush1.msra.mxu0 %v178
    %1154 = vmatprep.subr.mxu0 %v183
    %1155 = vmatpush1.msra.mxu0 %v182
    %1156 = vmatprep.subr.mxu0 %v187
    %1157 = vmatpush1.msra.mxu0 %v186
    %1158 = vmatprep.subr.mxu0 %v191
    %1159 = vmatpush1.msra.mxu0 %v190
    %1160 = vmatprep.subr.mxu0 %v195
    %1161 = vmatpush1.msra.mxu0 %v194
    %1162 = vmatprep.subr.mxu0 %v199
    %1163 = vmatpush1.msra.mxu0 %v198
    %1164 = vmatprep.subr.mxu0 %v203
    %1165 = vmatpush1.msra.mxu0 %v202
    %1166 = vmatprep.subr.mxu0 %v207
    %1167 = vmatpush1.msra.mxu0 %v206
    %1168 = vmatprep.subr.mxu0 %v211
    %1169 = vmatpush1.msra.mxu0 %v210
    %1170 = vmatprep.subr.mxu0 %v215
    %1171 = vmatpush1.msra.mxu0 %v214
    %1172 = vmatprep.subr.mxu0 %v219
    %1173 = vmatpush1.msra.mxu0 %v218
    %1174 = vmatprep.subr.mxu0 %v223
    %1175 = vmatpush1.msra.mxu0 %v222
    %1176 = vmatprep.subr.mxu0 %v227
    %1177 = vmatpush1.msra.mxu0 %v226
    %1178 = vmatprep.subr.mxu0 0.0
    %1179 = vmatpush1.msra.mxu0 0.0
    %1180 = vmatprep.subr.mxu0 0.0
    %1181 = vmatpush1.msra.mxu0 0.0
    %1182 = vmatprep.subr.mxu0 0.0
    %1183 = vmatpush1.msra.mxu0 0.0
    %1184 = vmatprep.subr.mxu0 0.0
    %1185 = vmatpush1.msra.mxu0 0.0
    %1186 = vmatprep.subr.mxu0 0.0
    %1187 = vmatpush1.msra.mxu0 0.0
    %1188 = vmatprep.subr.mxu0 0.0
    %1189 = vmatpush1.msra.mxu0 0.0
    %1190 = vmatprep.subr.mxu0 0.0
    %1191 = vmatpush1.msra.mxu0 0.0
    %1192 = vmatprep.subr.mxu0 0.0
    %1193 = vmatpush1.msra.mxu0 0.0
    %1194 = vmatprep.subr.mxu0 0.0
    %1195 = vmatpush1.msra.mxu0 0.0
    %1196 = vmatprep.subr.mxu0 0.0
    %1197 = vmatpush1.msra.mxu0 0.0
    %1198 = vmatprep.subr.mxu0 0.0
    %1199 = vmatpush1.msra.mxu0 0.0
    %1200 = vmatprep.subr.mxu0 0.0
    %1201 = vmatpush1.msra.mxu0 0.0
    %1202 = vmatprep.subr.mxu0 0.0
    %1203 = vmatpush1.msra.mxu0 0.0
    %1204 = vmatprep.subr.mxu0 0.0
    %1205 = vmatpush1.msra.mxu0 0.0
    %1206 = vmatprep.subr.mxu0 0.0
    %1207 = vmatpush1.msra.mxu0 0.0
    %1208 = vmatprep.subr.mxu0 0.0
    %1209 = vmatpush1.msra.mxu0 0.0
    %1210 = vmatprep.mubr.f32.mxu0 0.0
    %1211 = vmatmul.mubr.f32.gmra.mrb[0].mxu0 %v1066
    %v1212 = vpop.f32.mrb[0].mxu0
    %v1213 = vadd.f32 0.0, %v1212
    %v1214 = vpop.f32.mrb[0].mxu0
    %v1215 = vadd.f32 0.0, %v1214
    %1216 = vdwg.mxu0
    %v1217 = vadd.f32 %v1071, %v1142
    %v1218 = vadd.f32 %v1072, %v1144
    %v1219 = vadd.f32 %v1073, %v1213
    %v1220 = vadd.f32 %v1074, %v1215
    %v1221 = vxor.u32 %v1217, 2147483648
    %v1222 = vmul.f32 %v1221, 1.442695
    %v1223 = vpow.pop %v1222
    %v1224 = vadd.f32 %v1223, 1.0
    %v1225 = vrcp.pop %v1224
    %v1226 = vmul.f32 1.0, %v1225
    %v1227 = vxor.u32 %v1218, 2147483648
    %v1228 = vmul.f32 %v1227, 1.442695
    %v1229 = vpow.pop %v1228
    %v1230 = vadd.f32 %v1229, 1.0
    %v1231 = vrcp.pop %v1230
    %v1232 = vmul.f32 1.0, %v1231
    %v1233 = vtanh.pop %v1219
    %v1234 = vxor.u32 %v1220, 2147483648
    %v1235 = vmul.f32 %v1234, 1.442695
    %v1236 = vpow.pop %v1235
    %v1237 = vadd.f32 %v1236, 1.0
    %v1238 = vrcp.pop %v1237
    %v1239 = vmul.f32 1.0, %v1238
    %v1240 = vmul.f32 %v1232, %v1067
    %v1241 = vmul.f32 %v1226, %v1233
    %v1242 = vadd.f32 %v1240, %v1241
    %v1243 = vtanh.pop %v1242
    %v1244 = vmul.f32 %v1239, %v1243
    %1245 = vst [vmem:[#allocation4] sm:$0xff] %v1244
    %1246 = vst [vmem:[#allocation5] sm:$0xff] %v1242
    %s1247 = scalar_lea.vmem [#allocation2], 24
    %1248 = vst [vmem:[%s1247] sm:$0xff] %v1244
    %v1249 = vld [vmem:[#allocation4] sm:$0xff]
    %v1250 = vld [vmem:[#allocation5] sm:$0xff]
    %s1251 = smul.u32 4, 4
    %s1252 = smul.addr %s1251, 8
    %s1253 = scalar_lea.vmem [#allocation3], %s1252
    %v1254 = vld [vmem:[%s1253] sm:$0xff]
    %v1255 = vld [vmem:[%s1253 + $0x8] sm:$0xff]
    %v1256 = vld [vmem:[%s1253 + $0x10] sm:$0xff]
    %v1257 = vld [vmem:[%s1253 + $0x18] sm:$0xff]
    %1258 = vmatprep.subr.mxu0 %v165
    %1259 = vmatpush1.msra.mxu0 %v164
    %1260 = vmatprep.subr.mxu0 %v169
    %1261 = vmatpush1.msra.mxu0 %v168
    %1262 = vmatprep.subr.mxu0 %v173
    %1263 = vmatpush1.msra.mxu0 %v172
    %1264 = vmatprep.subr.mxu0 %v177
    %1265 = vmatpush1.msra.mxu0 %v176
    %1266 = vmatprep.subr.mxu0 %v181
    %1267 = vmatpush1.msra.mxu0 %v180
    %1268 = vmatprep.subr.mxu0 %v185
    %1269 = vmatpush1.msra.mxu0 %v184
    %1270 = vmatprep.subr.mxu0 %v189
    %1271 = vmatpush1.msra.mxu0 %v188
    %1272 = vmatprep.subr.mxu0 %v193
    %1273 = vmatpush1.msra.mxu0 %v192
    %1274 = vmatprep.subr.mxu0 %v197
    %1275 = vmatpush1.msra.mxu0 %v196
    %1276 = vmatprep.subr.mxu0 %v201
    %1277 = vmatpush1.msra.mxu0 %v200
    %1278 = vmatprep.subr.mxu0 %v205
    %1279 = vmatpush1.msra.mxu0 %v204
    %1280 = vmatprep.subr.mxu0 %v209
    %1281 = vmatpush1.msra.mxu0 %v208
    %1282 = vmatprep.subr.mxu0 %v213
    %1283 = vmatpush1.msra.mxu0 %v212
    %1284 = vmatprep.subr.mxu0 %v217
    %1285 = vmatpush1.msra.mxu0 %v216
    %1286 = vmatprep.subr.mxu0 %v221
    %1287 = vmatpush1.msra.mxu0 %v220
    %1288 = vmatprep.subr.mxu0 %v225
    %1289 = vmatpush1.msra.mxu0 %v224
    %1290 = vmatprep.subr.mxu0 0.0
    %1291 = vmatpush1.msra.mxu0 0.0
    %1292 = vmatprep.subr.mxu0 0.0
    %1293 = vmatpush1.msra.mxu0 0.0
    %1294 = vmatprep.subr.mxu0 0.0
    %1295 = vmatpush1.msra.mxu0 0.0
    %1296 = vmatprep.subr.mxu0 0.0
    %1297 = vmatpush1.msra.mxu0 0.0
    %1298 = vmatprep.subr.mxu0 0.0
    %1299 = vmatpush1.msra.mxu0 0.0
    %1300 = vmatprep.subr.mxu0 0.0
    %1301 = vmatpush1.msra.mxu0 0.0
    %1302 = vmatprep.subr.mxu0 0.0
    %1303 = vmatpush1.msra.mxu0 0.0
    %1304 = vmatprep.subr.mxu0 0.0
    %1305 = vmatpush1.msra.mxu0 0.0
    %1306 = vmatprep.subr.mxu0 0.0
    %1307 = vmatpush1.msra.mxu0 0.0
    %1308 = vmatprep.subr.mxu0 0.0
    %1309 = vmatpush1.msra.mxu0 0.0
    %1310 = vmatprep.subr.mxu0 0.0
    %1311 = vmatpush1.msra.mxu0 0.0
    %1312 = vmatprep.subr.mxu0 0.0
    %1313 = vmatpush1.msra.mxu0 0.0
    %1314 = vmatprep.subr.mxu0 0.0
    %1315 = vmatpush1.msra.mxu0 0.0
    %1316 = vmatprep.subr.mxu0 0.0
    %1317 = vmatpush1.msra.mxu0 0.0
    %1318 = vmatprep.subr.mxu0 0.0
    %1319 = vmatpush1.msra.mxu0 0.0
    %1320 = vmatprep.subr.mxu0 0.0
    %1321 = vmatpush1.msra.mxu0 0.0
    %1322 = vmatprep.mubr.f32.mxu0 0.0
    %1323 = vmatmul.mubr.f32.gmra.mrb[0].mxu0 %v1249
    %v1324 = vpop.f32.mrb[0].mxu0
    %v1325 = vadd.f32 0.0, %v1324
    %v1326 = vpop.f32.mrb[0].mxu0
    %v1327 = vadd.f32 0.0, %v1326
    %1328 = vdwg.mxu0
    %1329 = vmatprep.subr.mxu0 %v167
    %1330 = vmatpush1.msra.mxu0 %v166
    %1331 = vmatprep.subr.mxu0 %v171
    %1332 = vmatpush1.msra.mxu0 %v170
    %1333 = vmatprep.subr.mxu0 %v175
    %1334 = vmatpush1.msra.mxu0 %v174
    %1335 = vmatprep.subr.mxu0 %v179
    %1336 = vmatpush1.msra.mxu0 %v178
    %1337 = vmatprep.subr.mxu0 %v183
    %1338 = vmatpush1.msra.mxu0 %v182
    %1339 = vmatprep.subr.mxu0 %v187
    %1340 = vmatpush1.msra.mxu0 %v186
    %1341 = vmatprep.subr.mxu0 %v191
    %1342 = vmatpush1.msra.mxu0 %v190
    %1343 = vmatprep.subr.mxu0 %v195
    %1344 = vmatpush1.msra.mxu0 %v194
    %1345 = vmatprep.subr.mxu0 %v199
    %1346 = vmatpush1.msra.mxu0 %v198
    %1347 = vmatprep.subr.mxu0 %v203
    %1348 = vmatpush1.msra.mxu0 %v202
    %1349 = vmatprep.subr.mxu0 %v207
    %1350 = vmatpush1.msra.mxu0 %v206
    %1351 = vmatprep.subr.mxu0 %v211
    %1352 = vmatpush1.msra.mxu0 %v210
    %1353 = vmatprep.subr.mxu0 %v215
    %1354 = vmatpush1.msra.mxu0 %v214
    %1355 = vmatprep.subr.mxu0 %v219
    %1356 = vmatpush1.msra.mxu0 %v218
    %1357 = vmatprep.subr.mxu0 %v223
    %1358 = vmatpush1.msra.mxu0 %v222
    %1359 = vmatprep.subr.mxu0 %v227
    %1360 = vmatpush1.msra.mxu0 %v226
    %1361 = vmatprep.subr.mxu0 0.0
    %1362 = vmatpush1.msra.mxu0 0.0
    %1363 = vmatprep.subr.mxu0 0.0
    %1364 = vmatpush1.msra.mxu0 0.0
    %1365 = vmatprep.subr.mxu0 0.0
    %1366 = vmatpush1.msra.mxu0 0.0
    %1367 = vmatprep.subr.mxu0 0.0
    %1368 = vmatpush1.msra.mxu0 0.0
    %1369 = vmatprep.subr.mxu0 0.0
    %1370 = vmatpush1.msra.mxu0 0.0
    %1371 = vmatprep.subr.mxu0 0.0
    %1372 = vmatpush1.msra.mxu0 0.0
    %1373 = vmatprep.subr.mxu0 0.0
    %1374 = vmatpush1.msra.mxu0 0.0
    %1375 = vmatprep.subr.mxu0 0.0
    %1376 = vmatpush1.msra.mxu0 0.0
    %1377 = vmatprep.subr.mxu0 0.0
    %1378 = vmatpush1.msra.mxu0 0.0
    %1379 = vmatprep.subr.mxu0 0.0
    %1380 = vmatpush1.msra.mxu0 0.0
    %1381 = vmatprep.subr.mxu0 0.0
    %1382 = vmatpush1.msra.mxu0 0.0
    %1383 = vmatprep.subr.mxu0 0.0
    %1384 = vmatpush1.msra.mxu0 0.0
    %1385 = vmatprep.subr.mxu0 0.0
    %1386 = vmatpush1.msra.mxu0 0.0
    %1387 = vmatprep.subr.mxu0 0.0
    %1388 = vmatpush1.msra.mxu0 0.0
    %1389 = vmatprep.subr.mxu0 0.0
    %1390 = vmatpush1.msra.mxu0 0.0
    %1391 = vmatprep.subr.mxu0 0.0
    %1392 = vmatpush1.msra.mxu0 0.0
    %1393 = vmatprep.mubr.f32.mxu0 0.0
    %1394 = vmatmul.mubr.f32.gmra.mrb[0].mxu0 %v1249
    %v1395 = vpop.f32.mrb[0].mxu0
    %v1396 = vadd.f32 0.0, %v1395
    %v1397 = vpop.f32.mrb[0].mxu0
    %v1398 = vadd.f32 0.0, %v1397
    %1399 = vdwg.mxu0
    %v1400 = vadd.f32 %v1254, %v1325
    %v1401 = vadd.f32 %v1255, %v1327
    %v1402 = vadd.f32 %v1256, %v1396
    %v1403 = vadd.f32 %v1257, %v1398
    %v1404 = vxor.u32 %v1400, 2147483648
    %v1405 = vmul.f32 %v1404, 1.442695
    %v1406 = vpow.pop %v1405
    %v1407 = vadd.f32 %v1406, 1.0
    %v1408 = vrcp.pop %v1407
    %v1409 = vmul.f32 1.0, %v1408
    %v1410 = vxor.u32 %v1401, 2147483648
    %v1411 = vmul.f32 %v1410, 1.442695
    %v1412 = vpow.pop %v1411
    %v1413 = vadd.f32 %v1412, 1.0
    %v1414 = vrcp.pop %v1413
    %v1415 = vmul.f32 1.0, %v1414
    %v1416 = vtanh.pop %v1402
    %v1417 = vxor.u32 %v1403, 2147483648
    %v1418 = vmul.f32 %v1417, 1.442695
    %v1419 = vpow.pop %v1418
    %v1420 = vadd.f32 %v1419, 1.0
    %v1421 = vrcp.pop %v1420
    %v1422 = vmul.f32 1.0, %v1421
    %v1423 = vmul.f32 %v1415, %v1250
    %v1424 = vmul.f32 %v1409, %v1416
    %v1425 = vadd.f32 %v1423, %v1424
    %v1426 = vtanh.pop %v1425
    %v1427 = vmul.f32 %v1422, %v1426
    %1428 = vst [vmem:[#allocation4] sm:$0xff] %v1427
    %1429 = vst [vmem:[#allocation5] sm:$0xff] %v1425
    %s1430 = scalar_lea.vmem [#allocation2], 32
    %1431 = vst [vmem:[%s1430] sm:$0xff] %v1427
    %v1432 = vld [vmem:[#allocation4] sm:$0xff]
    %v1433 = vld [vmem:[#allocation5] sm:$0xff]
    %s1434 = smul.u32 5, 4
    %s1435 = smul.addr %s1434, 8
    %s1436 = scalar_lea.vmem [#allocation3], %s1435
    %v1437 = vld [vmem:[%s1436] sm:$0xff]
    %v1438 = vld [vmem:[%s1436 + $0x8] sm:$0xff]
    %v1439 = vld [vmem:[%s1436 + $0x10] sm:$0xff]
    %v1440 = vld [vmem:[%s1436 + $0x18] sm:$0xff]
    %1441 = vmatprep.subr.mxu0 %v165
    %1442 = vmatpush1.msra.mxu0 %v164
    %1443 = vmatprep.subr.mxu0 %v169
    %1444 = vmatpush1.msra.mxu0 %v168
    %1445 = vmatprep.subr.mxu0 %v173
    %1446 = vmatpush1.msra.mxu0 %v172
    %1447 = vmatprep.subr.mxu0 %v177
    %1448 = vmatpush1.msra.mxu0 %v176
    %1449 = vmatprep.subr.mxu0 %v181
    %1450 = vmatpush1.msra.mxu0 %v180
    %1451 = vmatprep.subr.mxu0 %v185
    %1452 = vmatpush1.msra.mxu0 %v184
    %1453 = vmatprep.subr.mxu0 %v189
    %1454 = vmatpush1.msra.mxu0 %v188
    %1455 = vmatprep.subr.mxu0 %v193
    %1456 = vmatpush1.msra.mxu0 %v192
    %1457 = vmatprep.subr.mxu0 %v197
    %1458 = vmatpush1.msra.mxu0 %v196
    %1459 = vmatprep.subr.mxu0 %v201
    %1460 = vmatpush1.msra.mxu0 %v200
    %1461 = vmatprep.subr.mxu0 %v205
    %1462 = vmatpush1.msra.mxu0 %v204
    %1463 = vmatprep.subr.mxu0 %v209
    %1464 = vmatpush1.msra.mxu0 %v208
    %1465 = vmatprep.subr.mxu0 %v213
    %1466 = vmatpush1.msra.mxu0 %v212
    %1467 = vmatprep.subr.mxu0 %v217
    %1468 = vmatpush1.msra.mxu0 %v216
    %1469 = vmatprep.subr.mxu0 %v221
    %1470 = vmatpush1.msra.mxu0 %v220
    %1471 = vmatprep.subr.mxu0 %v225
    %1472 = vmatpush1.msra.mxu0 %v224
    %1473 = vmatprep.subr.mxu0 0.0
    %1474 = vmatpush1.msra.mxu0 0.0
    %1475 = vmatprep.subr.mxu0 0.0
    %1476 = vmatpush1.msra.mxu0 0.0
    %1477 = vmatprep.subr.mxu0 0.0
    %1478 = vmatpush1.msra.mxu0 0.0
    %1479 = vmatprep.subr.mxu0 0.0
    %1480 = vmatpush1.msra.mxu0 0.0
    %1481 = vmatprep.subr.mxu0 0.0
    %1482 = vmatpush1.msra.mxu0 0.0
    %1483 = vmatprep.subr.mxu0 0.0
    %1484 = vmatpush1.msra.mxu0 0.0
    %1485 = vmatprep.subr.mxu0 0.0
    %1486 = vmatpush1.msra.mxu0 0.0
    %1487 = vmatprep.subr.mxu0 0.0
    %1488 = vmatpush1.msra.mxu0 0.0
    %1489 = vmatprep.subr.mxu0 0.0
    %1490 = vmatpush1.msra.mxu0 0.0
    %1491 = vmatprep.subr.mxu0 0.0
    %1492 = vmatpush1.msra.mxu0 0.0
    %1493 = vmatprep.subr.mxu0 0.0
    %1494 = vmatpush1.msra.mxu0 0.0
    %1495 = vmatprep.subr.mxu0 0.0
    %1496 = vmatpush1.msra.mxu0 0.0
    %1497 = vmatprep.subr.mxu0 0.0
    %1498 = vmatpush1.msra.mxu0 0.0
    %1499 = vmatprep.subr.mxu0 0.0
    %1500 = vmatpush1.msra.mxu0 0.0
    %1501 = vmatprep.subr.mxu0 0.0
    %1502 = vmatpush1.msra.mxu0 0.0
    %1503 = vmatprep.subr.mxu0 0.0
    %1504 = vmatpush1.msra.mxu0 0.0
    %1505 = vmatprep.mubr.f32.mxu0 0.0
    %1506 = vmatmul.mubr.f32.gmra.mrb[0].mxu0 %v1432
    %v1507 = vpop.f32.mrb[0].mxu0
    %v1508 = vadd.f32 0.0, %v1507
    %v1509 = vpop.f32.mrb[0].mxu0
    %v1510 = vadd.f32 0.0, %v1509
    %1511 = vdwg.mxu0
    %1512 = vmatprep.subr.mxu0 %v167
    %1513 = vmatpush1.msra.mxu0 %v166
    %1514 = vmatprep.subr.mxu0 %v171
    %1515 = vmatpush1.msra.mxu0 %v170
    %1516 = vmatprep.subr.mxu0 %v175
    %1517 = vmatpush1.msra.mxu0 %v174
    %1518 = vmatprep.subr.mxu0 %v179
    %1519 = vmatpush1.msra.mxu0 %v178
    %1520 = vmatprep.subr.mxu0 %v183
    %1521 = vmatpush1.msra.mxu0 %v182
    %1522 = vmatprep.subr.mxu0 %v187
    %1523 = vmatpush1.msra.mxu0 %v186
    %1524 = vmatprep.subr.mxu0 %v191
    %1525 = vmatpush1.msra.mxu0 %v190
    %1526 = vmatprep.subr.mxu0 %v195
    %1527 = vmatpush1.msra.mxu0 %v194
    %1528 = vmatprep.subr.mxu0 %v199
    %1529 = vmatpush1.msra.mxu0 %v198
    %1530 = vmatprep.subr.mxu0 %v203
    %1531 = vmatpush1.msra.mxu0 %v202
    %1532 = vmatprep.subr.mxu0 %v207
    %1533 = vmatpush1.msra.mxu0 %v206
    %1534 = vmatprep.subr.mxu0 %v211
    %1535 = vmatpush1.msra.mxu0 %v210
    %1536 = vmatprep.subr.mxu0 %v215
    %1537 = vmatpush1.msra.mxu0 %v214
    %1538 = vmatprep.subr.mxu0 %v219
    %1539 = vmatpush1.msra.mxu0 %v218
    %1540 = vmatprep.subr.mxu0 %v223
    %1541 = vmatpush1.msra.mxu0 %v222
    %1542 = vmatprep.subr.mxu0 %v227
    %1543 = vmatpush1.msra.mxu0 %v226
    %1544 = vmatprep.subr.mxu0 0.0
    %1545 = vmatpush1.msra.mxu0 0.0
    %1546 = vmatprep.subr.mxu0 0.0
    %1547 = vmatpush1.msra.mxu0 0.0
    %1548 = vmatprep.subr.mxu0 0.0
    %1549 = vmatpush1.msra.mxu0 0.0
    %1550 = vmatprep.subr.mxu0 0.0
    %1551 = vmatpush1.msra.mxu0 0.0
    %1552 = vmatprep.subr.mxu0 0.0
    %1553 = vmatpush1.msra.mxu0 0.0
    %1554 = vmatprep.subr.mxu0 0.0
    %1555 = vmatpush1.msra.mxu0 0.0
    %1556 = vmatprep.subr.mxu0 0.0
    %1557 = vmatpush1.msra.mxu0 0.0
    %1558 = vmatprep.subr.mxu0 0.0
    %1559 = vmatpush1.msra.mxu0 0.0
    %1560 = vmatprep.subr.mxu0 0.0
    %1561 = vmatpush1.msra.mxu0 0.0
    %1562 = vmatprep.subr.mxu0 0.0
    %1563 = vmatpush1.msra.mxu0 0.0
    %1564 = vmatprep.subr.mxu0 0.0
    %1565 = vmatpush1.msra.mxu0 0.0
    %1566 = vmatprep.subr.mxu0 0.0
    %1567 = vmatpush1.msra.mxu0 0.0
    %1568 = vmatprep.subr.mxu0 0.0
    %1569 = vmatpush1.msra.mxu0 0.0
    %1570 = vmatprep.subr.mxu0 0.0
    %1571 = vmatpush1.msra.mxu0 0.0
    %1572 = vmatprep.subr.mxu0 0.0
    %1573 = vmatpush1.msra.mxu0 0.0
    %1574 = vmatprep.subr.mxu0 0.0
    %1575 = vmatpush1.msra.mxu0 0.0
    %1576 = vmatprep.mubr.f32.mxu0 0.0
    %1577 = vmatmul.mubr.f32.gmra.mrb[0].mxu0 %v1432
    %v1578 = vpop.f32.mrb[0].mxu0
    %v1579 = vadd.f32 0.0, %v1578
    %v1580 = vpop.f32.mrb[0].mxu0
    %v1581 = vadd.f32 0.0, %v1580
    %1582 = vdwg.mxu0
    %v1583 = vadd.f32 %v1437, %v1508
    %v1584 = vadd.f32 %v1438, %v1510
    %v1585 = vadd.f32 %v1439, %v1579
    %v1586 = vadd.f32 %v1440, %v1581
    %v1587 = vxor.u32 %v1583, 2147483648
    %v1588 = vmul.f32 %v1587, 1.442695
    %v1589 = vpow.pop %v1588
    %v1590 = vadd.f32 %v1589, 1.0
    %v1591 = vrcp.pop %v1590
    %v1592 = vmul.f32 1.0, %v1591
    %v1593 = vxor.u32 %v1584, 2147483648
    %v1594 = vmul.f32 %v1593, 1.442695
    %v1595 = vpow.pop %v1594
    %v1596 = vadd.f32 %v1595, 1.0
    %v1597 = vrcp.pop %v1596
    %v1598 = vmul.f32 1.0, %v1597
    %v1599 = vtanh.pop %v1585
    %v1600 = vxor.u32 %v1586, 2147483648
    %v1601 = vmul.f32 %v1600, 1.442695
    %v1602 = vpow.pop %v1601
    %v1603 = vadd.f32 %v1602, 1.0
    %v1604 = vrcp.pop %v1603
    %v1605 = vmul.f32 1.0, %v1604
    %v1606 = vmul.f32 %v1598, %v1433
    %v1607 = vmul.f32 %v1592, %v1599
    %v1608 = vadd.f32 %v1606, %v1607
    %v1609 = vtanh.pop %v1608
    %v1610 = vmul.f32 %v1605, %v1609
    %1611 = vst [vmem:[#allocation4] sm:$0xff] %v1610
    %1612 = vst [vmem:[#allocation5] sm:$0xff] %v1608
    %s1613 = scalar_lea.vmem [#allocation2], 40
    %1614 = vst [vmem:[%s1613] sm:$0xff] %v1610
    %v1615 = vld [vmem:[#allocation4] sm:$0xff]
    %v1616 = vld [vmem:[#allocation5] sm:$0xff]
    %s1617 = smul.u32 6, 4
    %s1618 = smul.addr %s1617, 8
    %s1619 = scalar_lea.vmem [#allocation3], %s1618
    %v1620 = vld [vmem:[%s1619] sm:$0xff]
    %v1621 = vld [vmem:[%s1619 + $0x8] sm:$0xff]
    %v1622 = vld [vmem:[%s1619 + $0x10] sm:$0xff]
    %v1623 = vld [vmem:[%s1619 + $0x18] sm:$0xff]
    %1624 = vmatprep.subr.mxu0 %v165
    %1625 = vmatpush1.msra.mxu0 %v164
    %1626 = vmatprep.subr.mxu0 %v169
    %1627 = vmatpush1.msra.mxu0 %v168
    %1628 = vmatprep.subr.mxu0 %v173
    %1629 = vmatpush1.msra.mxu0 %v172
    %1630 = vmatprep.subr.mxu0 %v177
    %1631 = vmatpush1.msra.mxu0 %v176
    %1632 = vmatprep.subr.mxu0 %v181
    %1633 = vmatpush1.msra.mxu0 %v180
    %1634 = vmatprep.subr.mxu0 %v185
    %1635 = vmatpush1.msra.mxu0 %v184
    %1636 = vmatprep.subr.mxu0 %v189
    %1637 = vmatpush1.msra.mxu0 %v188
    %1638 = vmatprep.subr.mxu0 %v193
    %1639 = vmatpush1.msra.mxu0 %v192
    %1640 = vmatprep.subr.mxu0 %v197
    %1641 = vmatpush1.msra.mxu0 %v196
    %1642 = vmatprep.subr.mxu0 %v201
    %1643 = vmatpush1.msra.mxu0 %v200
    %1644 = vmatprep.subr.mxu0 %v205
    %1645 = vmatpush1.msra.mxu0 %v204
    %1646 = vmatprep.subr.mxu0 %v209
    %1647 = vmatpush1.msra.mxu0 %v208
    %1648 = vmatprep.subr.mxu0 %v213
    %1649 = vmatpush1.msra.mxu0 %v212
    %1650 = vmatprep.subr.mxu0 %v217
    %1651 = vmatpush1.msra.mxu0 %v216
    %1652 = vmatprep.subr.mxu0 %v221
    %1653 = vmatpush1.msra.mxu0 %v220
    %1654 = vmatprep.subr.mxu0 %v225
    %1655 = vmatpush1.msra.mxu0 %v224
    %1656 = vmatprep.subr.mxu0 0.0
    %1657 = vmatpush1.msra.mxu0 0.0
    %1658 = vmatprep.subr.mxu0 0.0
    %1659 = vmatpush1.msra.mxu0 0.0
    %1660 = vmatprep.subr.mxu0 0.0
    %1661 = vmatpush1.msra.mxu0 0.0
    %1662 = vmatprep.subr.mxu0 0.0
    %1663 = vmatpush1.msra.mxu0 0.0
    %1664 = vmatprep.subr.mxu0 0.0
    %1665 = vmatpush1.msra.mxu0 0.0
    %1666 = vmatprep.subr.mxu0 0.0
    %1667 = vmatpush1.msra.mxu0 0.0
    %1668 = vmatprep.subr.mxu0 0.0
    %1669 = vmatpush1.msra.mxu0 0.0
    %1670 = vmatprep.subr.mxu0 0.0
    %1671 = vmatpush1.msra.mxu0 0.0
    %1672 = vmatprep.subr.mxu0 0.0
    %1673 = vmatpush1.msra.mxu0 0.0
    %1674 = vmatprep.subr.mxu0 0.0
    %1675 = vmatpush1.msra.mxu0 0.0
    %1676 = vmatprep.subr.mxu0 0.0
    %1677 = vmatpush1.msra.mxu0 0.0
    %1678 = vmatprep.subr.mxu0 0.0
    %1679 = vmatpush1.msra.mxu0 0.0
    %1680 = vmatprep.subr.mxu0 0.0
    %1681 = vmatpush1.msra.mxu0 0.0
    %1682 = vmatprep.subr.mxu0 0.0
    %1683 = vmatpush1.msra.mxu0 0.0
    %1684 = vmatprep.subr.mxu0 0.0
    %1685 = vmatpush1.msra.mxu0 0.0
    %1686 = vmatprep.subr.mxu0 0.0
    %1687 = vmatpush1.msra.mxu0 0.0
    %1688 = vmatprep.mubr.f32.mxu0 0.0
    %1689 = vmatmul.mubr.f32.gmra.mrb[0].mxu0 %v1615
    %v1690 = vpop.f32.mrb[0].mxu0
    %v1691 = vadd.f32 0.0, %v1690
    %v1692 = vpop.f32.mrb[0].mxu0
    %v1693 = vadd.f32 0.0, %v1692
    %1694 = vdwg.mxu0
    %1695 = vmatprep.subr.mxu0 %v167
    %1696 = vmatpush1.msra.mxu0 %v166
    %1697 = vmatprep.subr.mxu0 %v171
    %1698 = vmatpush1.msra.mxu0 %v170
    %1699 = vmatprep.subr.mxu0 %v175
    %1700 = vmatpush1.msra.mxu0 %v174
    %1701 = vmatprep.subr.mxu0 %v179
    %1702 = vmatpush1.msra.mxu0 %v178
    %1703 = vmatprep.subr.mxu0 %v183
    %1704 = vmatpush1.msra.mxu0 %v182
    %1705 = vmatprep.subr.mxu0 %v187
    %1706 = vmatpush1.msra.mxu0 %v186
    %1707 = vmatprep.subr.mxu0 %v191
    %1708 = vmatpush1.msra.mxu0 %v190
    %1709 = vmatprep.subr.mxu0 %v195
    %1710 = vmatpush1.msra.mxu0 %v194
    %1711 = vmatprep.subr.mxu0 %v199
    %1712 = vmatpush1.msra.mxu0 %v198
    %1713 = vmatprep.subr.mxu0 %v203
    %1714 = vmatpush1.msra.mxu0 %v202
    %1715 = vmatprep.subr.mxu0 %v207
    %1716 = vmatpush1.msra.mxu0 %v206
    %1717 = vmatprep.subr.mxu0 %v211
    %1718 = vmatpush1.msra.mxu0 %v210
    %1719 = vmatprep.subr.mxu0 %v215
    %1720 = vmatpush1.msra.mxu0 %v214
    %1721 = vmatprep.subr.mxu0 %v219
    %1722 = vmatpush1.msra.mxu0 %v218
    %1723 = vmatprep.subr.mxu0 %v223
    %1724 = vmatpush1.msra.mxu0 %v222
    %1725 = vmatprep.subr.mxu0 %v227
    %1726 = vmatpush1.msra.mxu0 %v226
    %1727 = vmatprep.subr.mxu0 0.0
    %1728 = vmatpush1.msra.mxu0 0.0
    %1729 = vmatprep.subr.mxu0 0.0
    %1730 = vmatpush1.msra.mxu0 0.0
    %1731 = vmatprep.subr.mxu0 0.0
    %1732 = vmatpush1.msra.mxu0 0.0
    %1733 = vmatprep.subr.mxu0 0.0
    %1734 = vmatpush1.msra.mxu0 0.0
    %1735 = vmatprep.subr.mxu0 0.0
    %1736 = vmatpush1.msra.mxu0 0.0
    %1737 = vmatprep.subr.mxu0 0.0
    %1738 = vmatpush1.msra.mxu0 0.0
    %1739 = vmatprep.subr.mxu0 0.0
    %1740 = vmatpush1.msra.mxu0 0.0
    %1741 = vmatprep.subr.mxu0 0.0
    %1742 = vmatpush1.msra.mxu0 0.0
    %1743 = vmatprep.subr.mxu0 0.0
    %1744 = vmatpush1.msra.mxu0 0.0
    %1745 = vmatprep.subr.mxu0 0.0
    %1746 = vmatpush1.msra.mxu0 0.0
    %1747 = vmatprep.subr.mxu0 0.0
    %1748 = vmatpush1.msra.mxu0 0.0
    %1749 = vmatprep.subr.mxu0 0.0
    %1750 = vmatpush1.msra.mxu0 0.0
    %1751 = vmatprep.subr.mxu0 0.0
    %1752 = vmatpush1.msra.mxu0 0.0
    %1753 = vmatprep.subr.mxu0 0.0
    %1754 = vmatpush1.msra.mxu0 0.0
    %1755 = vmatprep.subr.mxu0 0.0
    %1756 = vmatpush1.msra.mxu0 0.0
    %1757 = vmatprep.subr.mxu0 0.0
    %1758 = vmatpush1.msra.mxu0 0.0
    %1759 = vmatprep.mubr.f32.mxu0 0.0
    %1760 = vmatmul.mubr.f32.gmra.mrb[0].mxu0 %v1615
    %v1761 = vpop.f32.mrb[0].mxu0
    %v1762 = vadd.f32 0.0, %v1761
    %v1763 = vpop.f32.mrb[0].mxu0
    %v1764 = vadd.f32 0.0, %v1763
    %1765 = vdwg.mxu0
    %v1766 = vadd.f32 %v1620, %v1691
    %v1767 = vadd.f32 %v1621, %v1693
    %v1768 = vadd.f32 %v1622, %v1762
    %v1769 = vadd.f32 %v1623, %v1764
    %v1770 = vxor.u32 %v1766, 2147483648
    %v1771 = vmul.f32 %v1770, 1.442695
    %v1772 = vpow.pop %v1771
    %v1773 = vadd.f32 %v1772, 1.0
    %v1774 = vrcp.pop %v1773
    %v1775 = vmul.f32 1.0, %v1774
    %v1776 = vxor.u32 %v1767, 2147483648
    %v1777 = vmul.f32 %v1776, 1.442695
    %v1778 = vpow.pop %v1777
    %v1779 = vadd.f32 %v1778, 1.0
    %v1780 = vrcp.pop %v1779
    %v1781 = vmul.f32 1.0, %v1780
    %v1782 = vtanh.pop %v1768
    %v1783 = vxor.u32 %v1769, 2147483648
    %v1784 = vmul.f32 %v1783, 1.442695
    %v1785 = vpow.pop %v1784
    %v1786 = vadd.f32 %v1785, 1.0
    %v1787 = vrcp.pop %v1786
    %v1788 = vmul.f32 1.0, %v1787
    %v1789 = vmul.f32 %v1781, %v1616
    %v1790 = vmul.f32 %v1775, %v1782
    %v1791 = vadd.f32 %v1789, %v1790
    %v1792 = vtanh.pop %v1791
    %v1793 = vmul.f32 %v1788, %v1792
    %1794 = vst [vmem:[#allocation4] sm:$0xff] %v1793
    %1795 = vst [vmem:[#allocation5] sm:$0xff] %v1791
    %s1796 = scalar_lea.vmem [#allocation2], 48
    %1797 = vst [vmem:[%s1796] sm:$0xff] %v1793
    %v1798 = vld [vmem:[#allocation4] sm:$0xff]
    %v1799 = vld [vmem:[#allocation5] sm:$0xff]
    %s1800 = smul.u32 7, 4
    %s1801 = smul.addr %s1800, 8
    %s1802 = scalar_lea.vmem [#allocation3], %s1801
    %v1803 = vld [vmem:[%s1802] sm:$0xff]
    %v1804 = vld [vmem:[%s1802 + $0x8] sm:$0xff]
    %v1805 = vld [vmem:[%s1802 + $0x10] sm:$0xff]
    %v1806 = vld [vmem:[%s1802 + $0x18] sm:$0xff]
    %1807 = vmatprep.subr.mxu0 %v165
    %1808 = vmatpush1.msra.mxu0 %v164
    %1809 = vmatprep.subr.mxu0 %v169
    %1810 = vmatpush1.msra.mxu0 %v168
    %1811 = vmatprep.subr.mxu0 %v173
    %1812 = vmatpush1.msra.mxu0 %v172
    %1813 = vmatprep.subr.mxu0 %v177
    %1814 = vmatpush1.msra.mxu0 %v176
    %1815 = vmatprep.subr.mxu0 %v181
    %1816 = vmatpush1.msra.mxu0 %v180
    %1817 = vmatprep.subr.mxu0 %v185
    %1818 = vmatpush1.msra.mxu0 %v184
    %1819 = vmatprep.subr.mxu0 %v189
    %1820 = vmatpush1.msra.mxu0 %v188
    %1821 = vmatprep.subr.mxu0 %v193
    %1822 = vmatpush1.msra.mxu0 %v192
    %1823 = vmatprep.subr.mxu0 %v197
    %1824 = vmatpush1.msra.mxu0 %v196
    %1825 = vmatprep.subr.mxu0 %v201
    %1826 = vmatpush1.msra.mxu0 %v200
    %1827 = vmatprep.subr.mxu0 %v205
    %1828 = vmatpush1.msra.mxu0 %v204
    %1829 = vmatprep.subr.mxu0 %v209
    %1830 = vmatpush1.msra.mxu0 %v208
    %1831 = vmatprep.subr.mxu0 %v213
    %1832 = vmatpush1.msra.mxu0 %v212
    %1833 = vmatprep.subr.mxu0 %v217
    %1834 = vmatpush1.msra.mxu0 %v216
    %1835 = vmatprep.subr.mxu0 %v221
    %1836 = vmatpush1.msra.mxu0 %v220
    %1837 = vmatprep.subr.mxu0 %v225
    %1838 = vmatpush1.msra.mxu0 %v224
    %1839 = vmatprep.subr.mxu0 0.0
    %1840 = vmatpush1.msra.mxu0 0.0
    %1841 = vmatprep.subr.mxu0 0.0
    %1842 = vmatpush1.msra.mxu0 0.0
    %1843 = vmatprep.subr.mxu0 0.0
    %1844 = vmatpush1.msra.mxu0 0.0
    %1845 = vmatprep.subr.mxu0 0.0
    %1846 = vmatpush1.msra.mxu0 0.0
    %1847 = vmatprep.subr.mxu0 0.0
    %1848 = vmatpush1.msra.mxu0 0.0
    %1849 = vmatprep.subr.mxu0 0.0
    %1850 = vmatpush1.msra.mxu0 0.0
    %1851 = vmatprep.subr.mxu0 0.0
    %1852 = vmatpush1.msra.mxu0 0.0
    %1853 = vmatprep.subr.mxu0 0.0
    %1854 = vmatpush1.msra.mxu0 0.0
    %1855 = vmatprep.subr.mxu0 0.0
    %1856 = vmatpush1.msra.mxu0 0.0
    %1857 = vmatprep.subr.mxu0 0.0
    %1858 = vmatpush1.msra.mxu0 0.0
    %1859 = vmatprep.subr.mxu0 0.0
    %1860 = vmatpush1.msra.mxu0 0.0
    %1861 = vmatprep.subr.mxu0 0.0
    %1862 = vmatpush1.msra.mxu0 0.0
    %1863 = vmatprep.subr.mxu0 0.0
    %1864 = vmatpush1.msra.mxu0 0.0
    %1865 = vmatprep.subr.mxu0 0.0
    %1866 = vmatpush1.msra.mxu0 0.0
    %1867 = vmatprep.subr.mxu0 0.0
    %1868 = vmatpush1.msra.mxu0 0.0
    %1869 = vmatprep.subr.mxu0 0.0
    %1870 = vmatpush1.msra.mxu0 0.0
    %1871 = vmatprep.mubr.f32.mxu0 0.0
    %1872 = vmatmul.mubr.f32.gmra.mrb[0].mxu0 %v1798
    %v1873 = vpop.f32.mrb[0].mxu0
    %v1874 = vadd.f32 0.0, %v1873
    %v1875 = vpop.f32.mrb[0].mxu0
    %v1876 = vadd.f32 0.0, %v1875
    %1877 = vdwg.mxu0
    %1878 = vmatprep.subr.mxu0 %v167
    %1879 = vmatpush1.msra.mxu0 %v166
    %1880 = vmatprep.subr.mxu0 %v171
    %1881 = vmatpush1.msra.mxu0 %v170
    %1882 = vmatprep.subr.mxu0 %v175
    %1883 = vmatpush1.msra.mxu0 %v174
    %1884 = vmatprep.subr.mxu0 %v179
    %1885 = vmatpush1.msra.mxu0 %v178
    %1886 = vmatprep.subr.mxu0 %v183
    %1887 = vmatpush1.msra.mxu0 %v182
    %1888 = vmatprep.subr.mxu0 %v187
    %1889 = vmatpush1.msra.mxu0 %v186
    %1890 = vmatprep.subr.mxu0 %v191
    %1891 = vmatpush1.msra.mxu0 %v190
    %1892 = vmatprep.subr.mxu0 %v195
    %1893 = vmatpush1.msra.mxu0 %v194
    %1894 = vmatprep.subr.mxu0 %v199
    %1895 = vmatpush1.msra.mxu0 %v198
    %1896 = vmatprep.subr.mxu0 %v203
    %1897 = vmatpush1.msra.mxu0 %v202
    %1898 = vmatprep.subr.mxu0 %v207
    %1899 = vmatpush1.msra.mxu0 %v206
    %1900 = vmatprep.subr.mxu0 %v211
    %1901 = vmatpush1.msra.mxu0 %v210
    %1902 = vmatprep.subr.mxu0 %v215
    %1903 = vmatpush1.msra.mxu0 %v214
    %1904 = vmatprep.subr.mxu0 %v219
    %1905 = vmatpush1.msra.mxu0 %v218
    %1906 = vmatprep.subr.mxu0 %v223
    %1907 = vmatpush1.msra.mxu0 %v222
    %1908 = vmatprep.subr.mxu0 %v227
    %1909 = vmatpush1.msra.mxu0 %v226
    %1910 = vmatprep.subr.mxu0 0.0
    %1911 = vmatpush1.msra.mxu0 0.0
    %1912 = vmatprep.subr.mxu0 0.0
    %1913 = vmatpush1.msra.mxu0 0.0
    %1914 = vmatprep.subr.mxu0 0.0
    %1915 = vmatpush1.msra.mxu0 0.0
    %1916 = vmatprep.subr.mxu0 0.0
    %1917 = vmatpush1.msra.mxu0 0.0
    %1918 = vmatprep.subr.mxu0 0.0
    %1919 = vmatpush1.msra.mxu0 0.0
    %1920 = vmatprep.subr.mxu0 0.0
    %1921 = vmatpush1.msra.mxu0 0.0
    %1922 = vmatprep.subr.mxu0 0.0
    %1923 = vmatpush1.msra.mxu0 0.0
    %1924 = vmatprep.subr.mxu0 0.0
    %1925 = vmatpush1.msra.mxu0 0.0
    %1926 = vmatprep.subr.mxu0 0.0
    %1927 = vmatpush1.msra.mxu0 0.0
    %1928 = vmatprep.subr.mxu0 0.0
    %1929 = vmatpush1.msra.mxu0 0.0
    %1930 = vmatprep.subr.mxu0 0.0
    %1931 = vmatpush1.msra.mxu0 0.0
    %1932 = vmatprep.subr.mxu0 0.0
    %1933 = vmatpush1.msra.mxu0 0.0
    %1934 = vmatprep.subr.mxu0 0.0
    %1935 = vmatpush1.msra.mxu0 0.0
    %1936 = vmatprep.subr.mxu0 0.0
    %1937 = vmatpush1.msra.mxu0 0.0
    %1938 = vmatprep.subr.mxu0 0.0
    %1939 = vmatpush1.msra.mxu0 0.0
    %1940 = vmatprep.subr.mxu0 0.0
    %1941 = vmatpush1.msra.mxu0 0.0
    %1942 = vmatprep.mubr.f32.mxu0 0.0
    %1943 = vmatmul.mubr.f32.gmra.mrb[0].mxu0 %v1798
    %v1944 = vpop.f32.mrb[0].mxu0
    %v1945 = vadd.f32 0.0, %v1944
    %v1946 = vpop.f32.mrb[0].mxu0
    %v1947 = vadd.f32 0.0, %v1946
    %1948 = vdwg.mxu0
    %v1949 = vadd.f32 %v1803, %v1874
    %v1950 = vadd.f32 %v1804, %v1876
    %v1951 = vadd.f32 %v1805, %v1945
    %v1952 = vadd.f32 %v1806, %v1947
    %v1953 = vxor.u32 %v1949, 2147483648
    %v1954 = vmul.f32 %v1953, 1.442695
    %v1955 = vpow.pop %v1954
    %v1956 = vadd.f32 %v1955, 1.0
    %v1957 = vrcp.pop %v1956
    %v1958 = vmul.f32 1.0, %v1957
    %v1959 = vxor.u32 %v1950, 2147483648
    %v1960 = vmul.f32 %v1959, 1.442695
    %v1961 = vpow.pop %v1960
    %v1962 = vadd.f32 %v1961, 1.0
    %v1963 = vrcp.pop %v1962
    %v1964 = vmul.f32 1.0, %v1963
    %v1965 = vtanh.pop %v1951
    %v1966 = vxor.u32 %v1952, 2147483648
    %v1967 = vmul.f32 %v1966, 1.442695
    %v1968 = vpow.pop %v1967
    %v1969 = vadd.f32 %v1968, 1.0
    %v1970 = vrcp.pop %v1969
    %v1971 = vmul.f32 1.0, %v1970
    %v1972 = vmul.f32 %v1964, %v1799
    %v1973 = vmul.f32 %v1958, %v1965
    %v1974 = vadd.f32 %v1972, %v1973
    %v1975 = vtanh.pop %v1974
    %v1976 = vmul.f32 %v1971, %v1975
    %1977 = vst [vmem:[#allocation4] sm:$0xff] %v1976
    %1978 = vst [vmem:[#allocation5] sm:$0xff] %v1974
    %s1979 = scalar_lea.vmem [#allocation2], 56
    %1980 = vst [vmem:[%s1979] sm:$0xff] %v1976
    %v1981 = vld [vmem:[#allocation10] sm:$0xff]
    %v1982 = vld [vmem:[#allocation10 + $0x8] sm:$0xff]
    %v1983 = vld [vmem:[#allocation10 + $0x10] sm:$0xff]
    %v1984 = vld [vmem:[#allocation10 + $0x18] sm:$0xff]
    %v1985 = vld [vmem:[#allocation10 + $0x20] sm:$0xff]
    %v1986 = vld [vmem:[#allocation10 + $0x28] sm:$0xff]
    %v1987 = vld [vmem:[#allocation10 + $0x30] sm:$0xff]
    %v1988 = vld [vmem:[#allocation10 + $0x38] sm:$0xff]
    %v1989 = vld [vmem:[#allocation10 + $0x40] sm:$0xff]
    %v1990 = vld [vmem:[#allocation10 + $0x48] sm:$0xff]
    %v1991 = vld [vmem:[#allocation10 + $0x50] sm:$0xff]
    %v1992 = vld [vmem:[#allocation10 + $0x58] sm:$0xff]
    %v1993 = vld [vmem:[#allocation10 + $0x60] sm:$0xff]
    %v1994 = vld [vmem:[#allocation10 + $0x68] sm:$0xff]
    %v1995 = vld [vmem:[#allocation10 + $0x70] sm:$0xff]
    %v1996 = vld [vmem:[#allocation10 + $0x78] sm:$0xff]
    %v1997 = vld [vmem:[#allocation10 + $0x80] sm:$0xff]
    %v1998 = vld [vmem:[#allocation10 + $0x88] sm:$0xff]
    %v1999 = vld [vmem:[#allocation10 + $0x90] sm:$0xff]
    %v2000 = vld [vmem:[#allocation10 + $0x98] sm:$0xff]
    %v2001 = vld [vmem:[#allocation10 + $0xa0] sm:$0xff]
    %v2002 = vld [vmem:[#allocation10 + $0xa8] sm:$0xff]
    %v2003 = vld [vmem:[#allocation10 + $0xb0] sm:$0xff]
    %v2004 = vld [vmem:[#allocation10 + $0xb8] sm:$0xff]
    %v2005 = vld [vmem:[#allocation10 + $0xc0] sm:$0xff]
    %v2006 = vld [vmem:[#allocation10 + $0xc8] sm:$0xff]
    %v2007 = vld [vmem:[#allocation10 + $0xd0] sm:$0xff]
    %v2008 = vld [vmem:[#allocation10 + $0xd8] sm:$0xff]
    %v2009 = vld [vmem:[#allocation10 + $0xe0] sm:$0xff]
    %v2010 = vld [vmem:[#allocation10 + $0xe8] sm:$0xff]
    %v2011 = vld [vmem:[#allocation10 + $0xf0] sm:$0xff]
    %v2012 = vld [vmem:[#allocation10 + $0xf8] sm:$0xff]
    %v2013 = vld [vmem:[#allocation10 + $0x100] sm:$0xff]
    %v2014 = vld [vmem:[#allocation10 + $0x108] sm:$0xff]
    %v2015 = vld [vmem:[#allocation10 + $0x110] sm:$0xff]
    %v2016 = vld [vmem:[#allocation10 + $0x118] sm:$0xff]
    %v2017 = vld [vmem:[#allocation10 + $0x120] sm:$0xff]
    %v2018 = vld [vmem:[#allocation10 + $0x128] sm:$0xff]
    %v2019 = vld [vmem:[#allocation10 + $0x130] sm:$0xff]
    %v2020 = vld [vmem:[#allocation10 + $0x138] sm:$0xff]
    %v2021 = vld [vmem:[#allocation10 + $0x140] sm:$0xff]
    %v2022 = vld [vmem:[#allocation10 + $0x148] sm:$0xff]
    %v2023 = vld [vmem:[#allocation10 + $0x150] sm:$0xff]
    %v2024 = vld [vmem:[#allocation10 + $0x158] sm:$0xff]
    %v2025 = vld [vmem:[#allocation10 + $0x160] sm:$0xff]
    %v2026 = vld [vmem:[#allocation10 + $0x168] sm:$0xff]
    %v2027 = vld [vmem:[#allocation10 + $0x170] sm:$0xff]
    %v2028 = vld [vmem:[#allocation10 + $0x178] sm:$0xff]
    %v2029 = vld [vmem:[#allocation10 + $0x180] sm:$0xff]
    %v2030 = vld [vmem:[#allocation10 + $0x188] sm:$0xff]
    %v2031 = vld [vmem:[#allocation10 + $0x190] sm:$0xff]
    %v2032 = vld [vmem:[#allocation10 + $0x198] sm:$0xff]
    %v2033 = vld [vmem:[#allocation10 + $0x1a0] sm:$0xff]
    %v2034 = vld [vmem:[#allocation10 + $0x1a8] sm:$0xff]
    %v2035 = vld [vmem:[#allocation10 + $0x1b0] sm:$0xff]
    %v2036 = vld [vmem:[#allocation10 + $0x1b8] sm:$0xff]
    %v2037 = vld [vmem:[#allocation10 + $0x1c0] sm:$0xff]
    %v2038 = vld [vmem:[#allocation10 + $0x1c8] sm:$0xff]
    %v2039 = vld [vmem:[#allocation10 + $0x1d0] sm:$0xff]
    %v2040 = vld [vmem:[#allocation10 + $0x1d8] sm:$0xff]
    %v2041 = vld [vmem:[#allocation10 + $0x1e0] sm:$0xff]
    %v2042 = vld [vmem:[#allocation10 + $0x1e8] sm:$0xff]
    %v2043 = vld [vmem:[#allocation10 + $0x1f0] sm:$0xff]
    %v2044 = vld [vmem:[#allocation10 + $0x1f8] sm:$0xff]
    %v2045 = vld [vmem:[#allocation11] sm:$0xff]
    %v2046 = vld [vmem:[#allocation11 + $0x8] sm:$0xff]
    %v2047 = vld [vmem:[#allocation11 + $0x10] sm:$0xff]
    %v2048 = vld [vmem:[#allocation11 + $0x18] sm:$0xff]
    %v2049 = vld [vmem:[#allocation11 + $0x20] sm:$0xff]
    %v2050 = vld [vmem:[#allocation11 + $0x28] sm:$0xff]
    %v2051 = vld [vmem:[#allocation11 + $0x30] sm:$0xff]
    %v2052 = vld [vmem:[#allocation11 + $0x38] sm:$0xff]
    %v2053 = vld [vmem:[#allocation11 + $0x40] sm:$0xff]
    %v2054 = vld [vmem:[#allocation11 + $0x48] sm:$0xff]
    %v2055 = vld [vmem:[#allocation11 + $0x50] sm:$0xff]
    %v2056 = vld [vmem:[#allocation11 + $0x58] sm:$0xff]
    %v2057 = vld [vmem:[#allocation11 + $0x60] sm:$0xff]
    %v2058 = vld [vmem:[#allocation11 + $0x68] sm:$0xff]
    %v2059 = vld [vmem:[#allocation11 + $0x70] sm:$0xff]
    %v2060 = vld [vmem:[#allocation11 + $0x78] sm:$0xff]
    %v2061 = vld [vmem:[#allocation11 + $0x80] sm:$0xff]
    %v2062 = vld [vmem:[#allocation11 + $0x88] sm:$0xff]
    %v2063 = vld [vmem:[#allocation11 + $0x90] sm:$0xff]
    %v2064 = vld [vmem:[#allocation11 + $0x98] sm:$0xff]
    %v2065 = vld [vmem:[#allocation11 + $0xa0] sm:$0xff]
    %v2066 = vld [vmem:[#allocation11 + $0xa8] sm:$0xff]
    %v2067 = vld [vmem:[#allocation11 + $0xb0] sm:$0xff]
    %v2068 = vld [vmem:[#allocation11 + $0xb8] sm:$0xff]
    %v2069 = vld [vmem:[#allocation11 + $0xc0] sm:$0xff]
    %v2070 = vld [vmem:[#allocation11 + $0xc8] sm:$0xff]
    %v2071 = vld [vmem:[#allocation11 + $0xd0] sm:$0xff]
    %v2072 = vld [vmem:[#allocation11 + $0xd8] sm:$0xff]
    %v2073 = vld [vmem:[#allocation11 + $0xe0] sm:$0xff]
    %v2074 = vld [vmem:[#allocation11 + $0xe8] sm:$0xff]
    %v2075 = vld [vmem:[#allocation11 + $0xf0] sm:$0xff]
    %v2076 = vld [vmem:[#allocation11 + $0xf8] sm:$0xff]
    %v2077 = vld [vmem:[#allocation11 + $0x100] sm:$0xff]
    %v2078 = vld [vmem:[#allocation11 + $0x108] sm:$0xff]
    %v2079 = vld [vmem:[#allocation11 + $0x110] sm:$0xff]
    %v2080 = vld [vmem:[#allocation11 + $0x118] sm:$0xff]
    %v2081 = vld [vmem:[#allocation11 + $0x120] sm:$0xff]
    %v2082 = vld [vmem:[#allocation11 + $0x128] sm:$0xff]
    %v2083 = vld [vmem:[#allocation11 + $0x130] sm:$0xff]
    %v2084 = vld [vmem:[#allocation11 + $0x138] sm:$0xff]
    %v2085 = vld [vmem:[#allocation11 + $0x140] sm:$0xff]
    %v2086 = vld [vmem:[#allocation11 + $0x148] sm:$0xff]
    %v2087 = vld [vmem:[#allocation11 + $0x150] sm:$0xff]
    %v2088 = vld [vmem:[#allocation11 + $0x158] sm:$0xff]
    %v2089 = vld [vmem:[#allocation11 + $0x160] sm:$0xff]
    %v2090 = vld [vmem:[#allocation11 + $0x168] sm:$0xff]
    %v2091 = vld [vmem:[#allocation11 + $0x170] sm:$0xff]
    %v2092 = vld [vmem:[#allocation11 + $0x178] sm:$0xff]
    %v2093 = vld [vmem:[#allocation11 + $0x180] sm:$0xff]
    %v2094 = vld [vmem:[#allocation11 + $0x188] sm:$0xff]
    %v2095 = vld [vmem:[#allocation11 + $0x190] sm:$0xff]
    %v2096 = vld [vmem:[#allocation11 + $0x198] sm:$0xff]
    %v2097 = vld [vmem:[#allocation11 + $0x1a0] sm:$0xff]
    %v2098 = vld [vmem:[#allocation11 + $0x1a8] sm:$0xff]
    %v2099 = vld [vmem:[#allocation11 + $0x1b0] sm:$0xff]
    %v2100 = vld [vmem:[#allocation11 + $0x1b8] sm:$0xff]
    %v2101 = vld [vmem:[#allocation11 + $0x1c0] sm:$0xff]
    %v2102 = vld [vmem:[#allocation11 + $0x1c8] sm:$0xff]
    %v2103 = vld [vmem:[#allocation11 + $0x1d0] sm:$0xff]
    %v2104 = vld [vmem:[#allocation11 + $0x1d8] sm:$0xff]
    %v2105 = vld [vmem:[#allocation11 + $0x1e0] sm:$0xff]
    %v2106 = vld [vmem:[#allocation11 + $0x1e8] sm:$0xff]
    %v2107 = vld [vmem:[#allocation11 + $0x1f0] sm:$0xff]
    %v2108 = vld [vmem:[#allocation11 + $0x1f8] sm:$0xff]
    %v2109 = vld [vmem:[%s6] sm:$0xf]
    %v2110 = vld [vmem:[#allocation2] sm:$0xff]
    %v2111 = vld [vmem:[#allocation2 + $0x8] sm:$0xff]
    %v2112 = vld [vmem:[#allocation2 + $0x10] sm:$0xff]
    %v2113 = vld [vmem:[#allocation2 + $0x18] sm:$0xff]
    %v2114 = vld [vmem:[#allocation2 + $0x20] sm:$0xff]
    %v2115 = vld [vmem:[#allocation2 + $0x28] sm:$0xff]
    %v2116 = vld [vmem:[#allocation2 + $0x30] sm:$0xff]
    %v2117 = vld [vmem:[#allocation2 + $0x38] sm:$0xff]
    %v2119 = vlaneseq
    %v2120 = vshrl.u32 %v2119, 7
    %v2121 = vsub.s32 0, %v2120
    %v2122 = vrot.slane %v2109, %v2121
    %v2123 = vlaneseq
    %v2124 = vshrl.u32 %v2123, 7
    %v2125 = vsub.s32 1, %v2124
    %v2126 = vrot.slane %v2109, %v2125
    %v2127 = vlaneseq
    %v2128 = vshrl.u32 %v2127, 7
    %v2129 = vsub.s32 2, %v2128
    %v2130 = vrot.slane %v2109, %v2129
    %v2131 = vlaneseq
    %v2132 = vshrl.u32 %v2131, 7
    %v2133 = vsub.s32 3, %v2132
    %v2134 = vrot.slane %v2109, %v2133
    %2139 = vmatprep.subr.mxu0 %v1982
    %2140 = vmatpush1.msra.mxu0 %v1981
    %2141 = vmatprep.subr.mxu0 %v1986
    %2142 = vmatpush1.msra.mxu0 %v1985
    %2143 = vmatprep.subr.mxu0 %v1990
    %2144 = vmatpush1.msra.mxu0 %v1989
    %2145 = vmatprep.subr.mxu0 %v1994
    %2146 = vmatpush1.msra.mxu0 %v1993
    %2147 = vmatprep.subr.mxu0 %v1998
    %2148 = vmatpush1.msra.mxu0 %v1997
    %2149 = vmatprep.subr.mxu0 %v2002
    %2150 = vmatpush1.msra.mxu0 %v2001
    %2151 = vmatprep.subr.mxu0 %v2006
    %2152 = vmatpush1.msra.mxu0 %v2005
    %2153 = vmatprep.subr.mxu0 %v2010
    %2154 = vmatpush1.msra.mxu0 %v2009
    %2155 = vmatprep.subr.mxu0 %v2014
    %2156 = vmatpush1.msra.mxu0 %v2013
    %2157 = vmatprep.subr.mxu0 %v2018
    %2158 = vmatpush1.msra.mxu0 %v2017
    %2159 = vmatprep.subr.mxu0 %v2022
    %2160 = vmatpush1.msra.mxu0 %v2021
    %2161 = vmatprep.subr.mxu0 %v2026
    %2162 = vmatpush1.msra.mxu0 %v2025
    %2163 = vmatprep.subr.mxu0 %v2030
    %2164 = vmatpush1.msra.mxu0 %v2029
    %2165 = vmatprep.subr.mxu0 %v2034
    %2166 = vmatpush1.msra.mxu0 %v2033
    %2167 = vmatprep.subr.mxu0 %v2038
    %2168 = vmatpush1.msra.mxu0 %v2037
    %2169 = vmatprep.subr.mxu0 %v2042
    %2170 = vmatpush1.msra.mxu0 %v2041
    %2171 = vmatprep.subr.mxu0 0.0
    %2172 = vmatpush1.msra.mxu0 0.0
    %2173 = vmatprep.subr.mxu0 0.0
    %2174 = vmatpush1.msra.mxu0 0.0
    %2175 = vmatprep.subr.mxu0 0.0
    %2176 = vmatpush1.msra.mxu0 0.0
    %2177 = vmatprep.subr.mxu0 0.0
    %2178 = vmatpush1.msra.mxu0 0.0
    %2179 = vmatprep.subr.mxu0 0.0
    %2180 = vmatpush1.msra.mxu0 0.0
    %2181 = vmatprep.subr.mxu0 0.0
    %2182 = vmatpush1.msra.mxu0 0.0
    %2183 = vmatprep.subr.mxu0 0.0
    %2184 = vmatpush1.msra.mxu0 0.0
    %2185 = vmatprep.subr.mxu0 0.0
    %2186 = vmatpush1.msra.mxu0 0.0
    %2187 = vmatprep.subr.mxu0 0.0
    %2188 = vmatpush1.msra.mxu0 0.0
    %2189 = vmatprep.subr.mxu0 0.0
    %2190 = vmatpush1.msra.mxu0 0.0
    %2191 = vmatprep.subr.mxu0 0.0
    %2192 = vmatpush1.msra.mxu0 0.0
    %2193 = vmatprep.subr.mxu0 0.0
    %2194 = vmatpush1.msra.mxu0 0.0
    %2195 = vmatprep.subr.mxu0 0.0
    %2196 = vmatpush1.msra.mxu0 0.0
    %2197 = vmatprep.subr.mxu0 0.0
    %2198 = vmatpush1.msra.mxu0 0.0
    %2199 = vmatprep.subr.mxu0 0.0
    %2200 = vmatpush1.msra.mxu0 0.0
    %2201 = vmatprep.subr.mxu0 0.0
    %2202 = vmatpush1.msra.mxu0 0.0
    %2203 = vmatprep.mubr.f32.mxu0 0.0
    %2204 = vmatmul.mubr.f32.gmra.mrb[0].mxu0 %v2110
    %v2205 = vpop.f32.mrb[0].mxu0
    %v2206 = vadd.f32 %v2122, %v2205
    %v2207 = vpop.f32.mrb[0].mxu0
    %v2208 = vadd.f32 %v2126, %v2207
    %2209 = vmatprep.mubr.f32.mxu0 0.0
    %2210 = vmatmul.mubr.f32.gmra.mrb[0].mxu0 %v2111
    %v2211 = vpop.f32.mrb[0].mxu0
    %v2212 = vadd.f32 %v2122, %v2211
    %v2213 = vpop.f32.mrb[0].mxu0
    %v2214 = vadd.f32 %v2126, %v2213
    %2215 = vmatprep.mubr.f32.mxu0 0.0
    %2216 = vmatmul.mubr.f32.gmra.mrb[0].mxu0 %v2112
    %v2217 = vpop.f32.mrb[0].mxu0
    %v2218 = vadd.f32 %v2122, %v2217
    %v2219 = vpop.f32.mrb[0].mxu0
    %v2220 = vadd.f32 %v2126, %v2219
    %2221 = vmatprep.mubr.f32.mxu0 0.0
    %2222 = vmatmul.mubr.f32.gmra.mrb[0].mxu0 %v2113
    %v2223 = vpop.f32.mrb[0].mxu0
    %v2224 = vadd.f32 %v2122, %v2223
    %v2225 = vpop.f32.mrb[0].mxu0
    %v2226 = vadd.f32 %v2126, %v2225
    %2227 = vmatprep.mubr.f32.mxu0 0.0
    %2228 = vmatmul.mubr.f32.gmra.mrb[0].mxu0 %v2114
    %v2229 = vpop.f32.mrb[0].mxu0
    %v2230 = vadd.f32 %v2122, %v2229
    %v2231 = vpop.f32.mrb[0].mxu0
    %v2232 = vadd.f32 %v2126, %v2231
    %2233 = vmatprep.mubr.f32.mxu0 0.0
    %2234 = vmatmul.mubr.f32.gmra.mrb[0].mxu0 %v2115
    %v2235 = vpop.f32.mrb[0].mxu0
    %v2236 = vadd.f32 %v2122, %v2235
    %v2237 = vpop.f32.mrb[0].mxu0
    %v2238 = vadd.f32 %v2126, %v2237
    %2239 = vmatprep.mubr.f32.mxu0 0.0
    %2240 = vmatmul.mubr.f32.gmra.mrb[0].mxu0 %v2116
    %v2241 = vpop.f32.mrb[0].mxu0
    %v2242 = vadd.f32 %v2122, %v2241
    %v2243 = vpop.f32.mrb[0].mxu0
    %v2244 = vadd.f32 %v2126, %v2243
    %2245 = vmatprep.mubr.f32.mxu0 0.0
    %2246 = vmatmul.mubr.f32.gmra.mrb[0].mxu0 %v2117
    %v2247 = vpop.f32.mrb[0].mxu0
    %v2248 = vadd.f32 %v2122, %v2247
    %v2249 = vpop.f32.mrb[0].mxu0
    %v2250 = vadd.f32 %v2126, %v2249
    %2251 = vdwg.mxu0
    %2252 = vmatprep.subr.mxu0 %v1984
    %2253 = vmatpush1.msra.mxu0 %v1983
    %2254 = vmatprep.subr.mxu0 %v1988
    %2255 = vmatpush1.msra.mxu0 %v1987
    %2256 = vmatprep.subr.mxu0 %v1992
    %2257 = vmatpush1.msra.mxu0 %v1991
    %2258 = vmatprep.subr.mxu0 %v1996
    %2259 = vmatpush1.msra.mxu0 %v1995
    %2260 = vmatprep.subr.mxu0 %v2000
    %2261 = vmatpush1.msra.mxu0 %v1999
    %2262 = vmatprep.subr.mxu0 %v2004
    %2263 = vmatpush1.msra.mxu0 %v2003
    %2264 = vmatprep.subr.mxu0 %v2008
    %2265 = vmatpush1.msra.mxu0 %v2007
    %2266 = vmatprep.subr.mxu0 %v2012
    %2267 = vmatpush1.msra.mxu0 %v2011
    %2268 = vmatprep.subr.mxu0 %v2016
    %2269 = vmatpush1.msra.mxu0 %v2015
    %2270 = vmatprep.subr.mxu0 %v2020
    %2271 = vmatpush1.msra.mxu0 %v2019
    %2272 = vmatprep.subr.mxu0 %v2024
    %2273 = vmatpush1.msra.mxu0 %v2023
    %2274 = vmatprep.subr.mxu0 %v2028
    %2275 = vmatpush1.msra.mxu0 %v2027
    %2276 = vmatprep.subr.mxu0 %v2032
    %2277 = vmatpush1.msra.mxu0 %v2031
    %2278 = vmatprep.subr.mxu0 %v2036
    %2279 = vmatpush1.msra.mxu0 %v2035
    %2280 = vmatprep.subr.mxu0 %v2040
    %2281 = vmatpush1.msra.mxu0 %v2039
    %2282 = vmatprep.subr.mxu0 %v2044
    %2283 = vmatpush1.msra.mxu0 %v2043
    %2284 = vmatprep.subr.mxu0 0.0
    %2285 = vmatpush1.msra.mxu0 0.0
    %2286 = vmatprep.subr.mxu0 0.0
    %2287 = vmatpush1.msra.mxu0 0.0
    %2288 = vmatprep.subr.mxu0 0.0
    %2289 = vmatpush1.msra.mxu0 0.0
    %2290 = vmatprep.subr.mxu0 0.0
    %2291 = vmatpush1.msra.mxu0 0.0
    %2292 = vmatprep.subr.mxu0 0.0
    %2293 = vmatpush1.msra.mxu0 0.0
    %2294 = vmatprep.subr.mxu0 0.0
    %2295 = vmatpush1.msra.mxu0 0.0
    %2296 = vmatprep.subr.mxu0 0.0
    %2297 = vmatpush1.msra.mxu0 0.0
    %2298 = vmatprep.subr.mxu0 0.0
    %2299 = vmatpush1.msra.mxu0 0.0
    %2300 = vmatprep.subr.mxu0 0.0
    %2301 = vmatpush1.msra.mxu0 0.0
    %2302 = vmatprep.subr.mxu0 0.0
    %2303 = vmatpush1.msra.mxu0 0.0
    %2304 = vmatprep.subr.mxu0 0.0
    %2305 = vmatpush1.msra.mxu0 0.0
    %2306 = vmatprep.subr.mxu0 0.0
    %2307 = vmatpush1.msra.mxu0 0.0
    %2308 = vmatprep.subr.mxu0 0.0
    %2309 = vmatpush1.msra.mxu0 0.0
    %2310 = vmatprep.subr.mxu0 0.0
    %2311 = vmatpush1.msra.mxu0 0.0
    %2312 = vmatprep.subr.mxu0 0.0
    %2313 = vmatpush1.msra.mxu0 0.0
    %2314 = vmatprep.subr.mxu0 0.0
    %2315 = vmatpush1.msra.mxu0 0.0
    %2316 = vmatprep.mubr.f32.mxu0 0.0
    %2317 = vmatmul.mubr.f32.gmra.mrb[0].mxu0 %v2110
    %v2318 = vpop.f32.mrb[0].mxu0
    %v2319 = vadd.f32 %v2130, %v2318
    %v2320 = vpop.f32.mrb[0].mxu0
    %v2321 = vadd.f32 %v2134, %v2320
    %2322 = vmatprep.mubr.f32.mxu0 0.0
    %2323 = vmatmul.mubr.f32.gmra.mrb[0].mxu0 %v2111
    %v2324 = vpop.f32.mrb[0].mxu0
    %v2325 = vadd.f32 %v2130, %v2324
    %v2326 = vpop.f32.mrb[0].mxu0
    %v2327 = vadd.f32 %v2134, %v2326
    %2328 = vmatprep.mubr.f32.mxu0 0.0
    %2329 = vmatmul.mubr.f32.gmra.mrb[0].mxu0 %v2112
    %v2330 = vpop.f32.mrb[0].mxu0
    %v2331 = vadd.f32 %v2130, %v2330
    %v2332 = vpop.f32.mrb[0].mxu0
    %v2333 = vadd.f32 %v2134, %v2332
    %2334 = vmatprep.mubr.f32.mxu0 0.0
    %2335 = vmatmul.mubr.f32.gmra.mrb[0].mxu0 %v2113
    %v2336 = vpop.f32.mrb[0].mxu0
    %v2337 = vadd.f32 %v2130, %v2336
    %v2338 = vpop.f32.mrb[0].mxu0
    %v2339 = vadd.f32 %v2134, %v2338
    %2340 = vmatprep.mubr.f32.mxu0 0.0
    %2341 = vmatmul.mubr.f32.gmra.mrb[0].mxu0 %v2114
    %v2342 = vpop.f32.mrb[0].mxu0
    %v2343 = vadd.f32 %v2130, %v2342
    %v2344 = vpop.f32.mrb[0].mxu0
    %v2345 = vadd.f32 %v2134, %v2344
    %2346 = vmatprep.mubr.f32.mxu0 0.0
    %2347 = vmatmul.mubr.f32.gmra.mrb[0].mxu0 %v2115
    %v2348 = vpop.f32.mrb[0].mxu0
    %v2349 = vadd.f32 %v2130, %v2348
    %v2350 = vpop.f32.mrb[0].mxu0
    %v2351 = vadd.f32 %v2134, %v2350
    %2352 = vmatprep.mubr.f32.mxu0 0.0
    %2353 = vmatmul.mubr.f32.gmra.mrb[0].mxu0 %v2116
    %v2354 = vpop.f32.mrb[0].mxu0
    %v2355 = vadd.f32 %v2130, %v2354
    %v2356 = vpop.f32.mrb[0].mxu0
    %v2357 = vadd.f32 %v2134, %v2356
    %2358 = vmatprep.mubr.f32.mxu0 0.0
    %2359 = vmatmul.mubr.f32.gmra.mrb[0].mxu0 %v2117
    %v2360 = vpop.f32.mrb[0].mxu0
    %v2361 = vadd.f32 %v2130, %v2360
    %v2362 = vpop.f32.mrb[0].mxu0
    %v2363 = vadd.f32 %v2134, %v2362
    %2364 = vdwg.mxu0
    %2365 = vst [vmem:[#allocation3] sm:$0xff] %v2206
    %2366 = vst [vmem:[#allocation3 + $0x8] sm:$0xff] %v2208
    %2367 = vst [vmem:[#allocation3 + $0x10] sm:$0xff] %v2319
    %2368 = vst [vmem:[#allocation3 + $0x18] sm:$0xff] %v2321
    %2369 = vst [vmem:[#allocation3 + $0x20] sm:$0xff] %v2212
    %2370 = vst [vmem:[#allocation3 + $0x28] sm:$0xff] %v2214
    %2371 = vst [vmem:[#allocation3 + $0x30] sm:$0xff] %v2325
    %2372 = vst [vmem:[#allocation3 + $0x38] sm:$0xff] %v2327
    %2373 = vst [vmem:[#allocation3 + $0x40] sm:$0xff] %v2218
    %2374 = vst [vmem:[#allocation3 + $0x48] sm:$0xff] %v2220
    %2375 = vst [vmem:[#allocation3 + $0x50] sm:$0xff] %v2331
    %2376 = vst [vmem:[#allocation3 + $0x58] sm:$0xff] %v2333
    %2377 = vst [vmem:[#allocation3 + $0x60] sm:$0xff] %v2224
    %2378 = vst [vmem:[#allocation3 + $0x68] sm:$0xff] %v2226
    %2379 = vst [vmem:[#allocation3 + $0x70] sm:$0xff] %v2337
    %2380 = vst [vmem:[#allocation3 + $0x78] sm:$0xff] %v2339
    %2381 = vst [vmem:[#allocation3 + $0x80] sm:$0xff] %v2230
    %2382 = vst [vmem:[#allocation3 + $0x88] sm:$0xff] %v2232
    %2383 = vst [vmem:[#allocation3 + $0x90] sm:$0xff] %v2343
    %2384 = vst [vmem:[#allocation3 + $0x98] sm:$0xff] %v2345
    %2385 = vst [vmem:[#allocation3 + $0xa0] sm:$0xff] %v2236
    %2386 = vst [vmem:[#allocation3 + $0xa8] sm:$0xff] %v2238
    %2387 = vst [vmem:[#allocation3 + $0xb0] sm:$0xff] %v2349
    %2388 = vst [vmem:[#allocation3 + $0xb8] sm:$0xff] %v2351
    %2389 = vst [vmem:[#allocation3 + $0xc0] sm:$0xff] %v2242
    %2390 = vst [vmem:[#allocation3 + $0xc8] sm:$0xff] %v2244
    %2391 = vst [vmem:[#allocation3 + $0xd0] sm:$0xff] %v2355
    %2392 = vst [vmem:[#allocation3 + $0xd8] sm:$0xff] %v2357
    %2393 = vst [vmem:[#allocation3 + $0xe0] sm:$0xff] %v2248
    %2394 = vst [vmem:[#allocation3 + $0xe8] sm:$0xff] %v2250
    %2395 = vst [vmem:[#allocation3 + $0xf0] sm:$0xff] %v2361
    %2396 = vst [vmem:[#allocation3 + $0xf8] sm:$0xff] %v2363
    %2397 = vst [vmem:[#allocation4] sm:$0xff] 0.0
    %2398 = vst [vmem:[#allocation5] sm:$0xff] 0.0
    %v2399 = vld [vmem:[#allocation4] sm:$0xff]
    %v2400 = vld [vmem:[#allocation5] sm:$0xff]
    %v2401 = vld [vmem:[%s522] sm:$0xff]
    %v2402 = vld [vmem:[%s522 + $0x8] sm:$0xff]
    %v2403 = vld [vmem:[%s522 + $0x10] sm:$0xff]
    %v2404 = vld [vmem:[%s522 + $0x18] sm:$0xff]
    %2405 = vmatprep.subr.mxu0 %v2046
    %2406 = vmatpush1.msra.mxu0 %v2045
    %2407 = vmatprep.subr.mxu0 %v2050
    %2408 = vmatpush1.msra.mxu0 %v2049
    %2409 = vmatprep.subr.mxu0 %v2054
    %2410 = vmatpush1.msra.mxu0 %v2053
    %2411 = vmatprep.subr.mxu0 %v2058
    %2412 = vmatpush1.msra.mxu0 %v2057
    %2413 = vmatprep.subr.mxu0 %v2062
    %2414 = vmatpush1.msra.mxu0 %v2061
    %2415 = vmatprep.subr.mxu0 %v2066
    %2416 = vmatpush1.msra.mxu0 %v2065
    %2417 = vmatprep.subr.mxu0 %v2070
    %2418 = vmatpush1.msra.mxu0 %v2069
    %2419 = vmatprep.subr.mxu0 %v2074
    %2420 = vmatpush1.msra.mxu0 %v2073
    %2421 = vmatprep.subr.mxu0 %v2078
    %2422 = vmatpush1.msra.mxu0 %v2077
    %2423 = vmatprep.subr.mxu0 %v2082
    %2424 = vmatpush1.msra.mxu0 %v2081
    %2425 = vmatprep.subr.mxu0 %v2086
    %2426 = vmatpush1.msra.mxu0 %v2085
    %2427 = vmatprep.subr.mxu0 %v2090
    %2428 = vmatpush1.msra.mxu0 %v2089
    %2429 = vmatprep.subr.mxu0 %v2094
    %2430 = vmatpush1.msra.mxu0 %v2093
    %2431 = vmatprep.subr.mxu0 %v2098
    %2432 = vmatpush1.msra.mxu0 %v2097
    %2433 = vmatprep.subr.mxu0 %v2102
    %2434 = vmatpush1.msra.mxu0 %v2101
    %2435 = vmatprep.subr.mxu0 %v2106
    %2436 = vmatpush1.msra.mxu0 %v2105
    %2437 = vmatprep.subr.mxu0 0.0
    %2438 = vmatpush1.msra.mxu0 0.0
    %2439 = vmatprep.subr.mxu0 0.0
    %2440 = vmatpush1.msra.mxu0 0.0
    %2441 = vmatprep.subr.mxu0 0.0
    %2442 = vmatpush1.msra.mxu0 0.0
    %2443 = vmatprep.subr.mxu0 0.0
    %2444 = vmatpush1.msra.mxu0 0.0
    %2445 = vmatprep.subr.mxu0 0.0
    %2446 = vmatpush1.msra.mxu0 0.0
    %2447 = vmatprep.subr.mxu0 0.0
    %2448 = vmatpush1.msra.mxu0 0.0
    %2449 = vmatprep.subr.mxu0 0.0
    %2450 = vmatpush1.msra.mxu0 0.0
    %2451 = vmatprep.subr.mxu0 0.0
    %2452 = vmatpush1.msra.mxu0 0.0
    %2453 = vmatprep.subr.mxu0 0.0
    %2454 = vmatpush1.msra.mxu0 0.0
    %2455 = vmatprep.subr.mxu0 0.0
    %2456 = vmatpush1.msra.mxu0 0.0
    %2457 = vmatprep.subr.mxu0 0.0
    %2458 = vmatpush1.msra.mxu0 0.0
    %2459 = vmatprep.subr.mxu0 0.0
    %2460 = vmatpush1.msra.mxu0 0.0
    %2461 = vmatprep.subr.mxu0 0.0
    %2462 = vmatpush1.msra.mxu0 0.0
    %2463 = vmatprep.subr.mxu0 0.0
    %2464 = vmatpush1.msra.mxu0 0.0
    %2465 = vmatprep.subr.mxu0 0.0
    %2466 = vmatpush1.msra.mxu0 0.0
    %2467 = vmatprep.subr.mxu0 0.0
    %2468 = vmatpush1.msra.mxu0 0.0
    %2469 = vmatprep.mubr.f32.mxu0 0.0
    %2470 = vmatmul.mubr.f32.gmra.mrb[0].mxu0 %v2399
    %v2471 = vpop.f32.mrb[0].mxu0
    %v2472 = vadd.f32 0.0, %v2471
    %v2473 = vpop.f32.mrb[0].mxu0
    %v2474 = vadd.f32 0.0, %v2473
    %2475 = vdwg.mxu0
    %2476 = vmatprep.subr.mxu0 %v2048
    %2477 = vmatpush1.msra.mxu0 %v2047
    %2478 = vmatprep.subr.mxu0 %v2052
    %2479 = vmatpush1.msra.mxu0 %v2051
    %2480 = vmatprep.subr.mxu0 %v2056
    %2481 = vmatpush1.msra.mxu0 %v2055
    %2482 = vmatprep.subr.mxu0 %v2060
    %2483 = vmatpush1.msra.mxu0 %v2059
    %2484 = vmatprep.subr.mxu0 %v2064
    %2485 = vmatpush1.msra.mxu0 %v2063
    %2486 = vmatprep.subr.mxu0 %v2068
    %2487 = vmatpush1.msra.mxu0 %v2067
    %2488 = vmatprep.subr.mxu0 %v2072
    %2489 = vmatpush1.msra.mxu0 %v2071
    %2490 = vmatprep.subr.mxu0 %v2076
    %2491 = vmatpush1.msra.mxu0 %v2075
    %2492 = vmatprep.subr.mxu0 %v2080
    %2493 = vmatpush1.msra.mxu0 %v2079
    %2494 = vmatprep.subr.mxu0 %v2084
    %2495 = vmatpush1.msra.mxu0 %v2083
    %2496 = vmatprep.subr.mxu0 %v2088
    %2497 = vmatpush1.msra.mxu0 %v2087
    %2498 = vmatprep.subr.mxu0 %v2092
    %2499 = vmatpush1.msra.mxu0 %v2091
    %2500 = vmatprep.subr.mxu0 %v2096
    %2501 = vmatpush1.msra.mxu0 %v2095
    %2502 = vmatprep.subr.mxu0 %v2100
    %2503 = vmatpush1.msra.mxu0 %v2099
    %2504 = vmatprep.subr.mxu0 %v2104
    %2505 = vmatpush1.msra.mxu0 %v2103
    %2506 = vmatprep.subr.mxu0 %v2108
    %2507 = vmatpush1.msra.mxu0 %v2107
    %2508 = vmatprep.subr.mxu0 0.0
    %2509 = vmatpush1.msra.mxu0 0.0
    %2510 = vmatprep.subr.mxu0 0.0
    %2511 = vmatpush1.msra.mxu0 0.0
    %2512 = vmatprep.subr.mxu0 0.0
    %2513 = vmatpush1.msra.mxu0 0.0
    %2514 = vmatprep.subr.mxu0 0.0
    %2515 = vmatpush1.msra.mxu0 0.0
    %2516 = vmatprep.subr.mxu0 0.0
    %2517 = vmatpush1.msra.mxu0 0.0
    %2518 = vmatprep.subr.mxu0 0.0
    %2519 = vmatpush1.msra.mxu0 0.0
    %2520 = vmatprep.subr.mxu0 0.0
    %2521 = vmatpush1.msra.mxu0 0.0
    %2522 = vmatprep.subr.mxu0 0.0
    %2523 = vmatpush1.msra.mxu0 0.0
    %2524 = vmatprep.subr.mxu0 0.0
    %2525 = vmatpush1.msra.mxu0 0.0
    %2526 = vmatprep.subr.mxu0 0.0
    %2527 = vmatpush1.msra.mxu0 0.0
    %2528 = vmatprep.subr.mxu0 0.0
    %2529 = vmatpush1.msra.mxu0 0.0
    %2530 = vmatprep.subr.mxu0 0.0
    %2531 = vmatpush1.msra.mxu0 0.0
    %2532 = vmatprep.subr.mxu0 0.0
    %2533 = vmatpush1.msra.mxu0 0.0
    %2534 = vmatprep.subr.mxu0 0.0
    %2535 = vmatpush1.msra.mxu0 0.0
    %2536 = vmatprep.subr.mxu0 0.0
    %2537 = vmatpush1.msra.mxu0 0.0
    %2538 = vmatprep.subr.mxu0 0.0
    %2539 = vmatpush1.msra.mxu0 0.0
    %2540 = vmatprep.mubr.f32.mxu0 0.0
    %2541 = vmatmul.mubr.f32.gmra.mrb[0].mxu0 %v2399
    %v2542 = vpop.f32.mrb[0].mxu0
    %v2543 = vadd.f32 0.0, %v2542
    %v2544 = vpop.f32.mrb[0].mxu0
    %v2545 = vadd.f32 0.0, %v2544
    %2546 = vdwg.mxu0
    %v2547 = vadd.f32 %v2401, %v2472
    %v2548 = vadd.f32 %v2402, %v2474
    %v2549 = vadd.f32 %v2403, %v2543
    %v2550 = vadd.f32 %v2404, %v2545
    %v2551 = vxor.u32 %v2547, 2147483648
    %v2552 = vmul.f32 %v2551, 1.442695
    %v2553 = vpow.pop %v2552
    %v2554 = vadd.f32 %v2553, 1.0
    %v2555 = vrcp.pop %v2554
    %v2556 = vmul.f32 1.0, %v2555
    %v2557 = vxor.u32 %v2548, 2147483648
    %v2558 = vmul.f32 %v2557, 1.442695
    %v2559 = vpow.pop %v2558
    %v2560 = vadd.f32 %v2559, 1.0
    %v2561 = vrcp.pop %v2560
    %v2562 = vmul.f32 1.0, %v2561
    %v2563 = vtanh.pop %v2549
    %v2564 = vxor.u32 %v2550, 2147483648
    %v2565 = vmul.f32 %v2564, 1.442695
    %v2566 = vpow.pop %v2565
    %v2567 = vadd.f32 %v2566, 1.0
    %v2568 = vrcp.pop %v2567
    %v2569 = vmul.f32 1.0, %v2568
    %v2570 = vmul.f32 %v2562, %v2400
    %v2571 = vmul.f32 %v2556, %v2563
    %v2572 = vadd.f32 %v2570, %v2571
    %v2573 = vtanh.pop %v2572
    %v2574 = vmul.f32 %v2569, %v2573
    %2575 = vst [vmem:[#allocation4] sm:$0xff] %v2574
    %2576 = vst [vmem:[#allocation5] sm:$0xff] %v2572
    %v2577 = vld [vmem:[#allocation4] sm:$0xff]
    %v2578 = vld [vmem:[#allocation5] sm:$0xff]
    %v2579 = vld [vmem:[%s704] sm:$0xff]
    %v2580 = vld [vmem:[%s704 + $0x8] sm:$0xff]
    %v2581 = vld [vmem:[%s704 + $0x10] sm:$0xff]
    %v2582 = vld [vmem:[%s704 + $0x18] sm:$0xff]
    %2583 = vmatprep.subr.mxu0 %v2046
    %2584 = vmatpush1.msra.mxu0 %v2045
    %2585 = vmatprep.subr.mxu0 %v2050
    %2586 = vmatpush1.msra.mxu0 %v2049
    %2587 = vmatprep.subr.mxu0 %v2054
    %2588 = vmatpush1.msra.mxu0 %v2053
    %2589 = vmatprep.subr.mxu0 %v2058
    %2590 = vmatpush1.msra.mxu0 %v2057
    %2591 = vmatprep.subr.mxu0 %v2062
    %2592 = vmatpush1.msra.mxu0 %v2061
    %2593 = vmatprep.subr.mxu0 %v2066
    %2594 = vmatpush1.msra.mxu0 %v2065
    %2595 = vmatprep.subr.mxu0 %v2070
    %2596 = vmatpush1.msra.mxu0 %v2069
    %2597 = vmatprep.subr.mxu0 %v2074
    %2598 = vmatpush1.msra.mxu0 %v2073
    %2599 = vmatprep.subr.mxu0 %v2078
    %2600 = vmatpush1.msra.mxu0 %v2077
    %2601 = vmatprep.subr.mxu0 %v2082
    %2602 = vmatpush1.msra.mxu0 %v2081
    %2603 = vmatprep.subr.mxu0 %v2086
    %2604 = vmatpush1.msra.mxu0 %v2085
    %2605 = vmatprep.subr.mxu0 %v2090
    %2606 = vmatpush1.msra.mxu0 %v2089
    %2607 = vmatprep.subr.mxu0 %v2094
    %2608 = vmatpush1.msra.mxu0 %v2093
    %2609 = vmatprep.subr.mxu0 %v2098
    %2610 = vmatpush1.msra.mxu0 %v2097
    %2611 = vmatprep.subr.mxu0 %v2102
    %2612 = vmatpush1.msra.mxu0 %v2101
    %2613 = vmatprep.subr.mxu0 %v2106
    %2614 = vmatpush1.msra.mxu0 %v2105
    %2615 = vmatprep.subr.mxu0 0.0
    %2616 = vmatpush1.msra.mxu0 0.0
    %2617 = vmatprep.subr.mxu0 0.0
    %2618 = vmatpush1.msra.mxu0 0.0
    %2619 = vmatprep.subr.mxu0 0.0
    %2620 = vmatpush1.msra.mxu0 0.0
    %2621 = vmatprep.subr.mxu0 0.0
    %2622 = vmatpush1.msra.mxu0 0.0
    %2623 = vmatprep.subr.mxu0 0.0
    %2624 = vmatpush1.msra.mxu0 0.0
    %2625 = vmatprep.subr.mxu0 0.0
    %2626 = vmatpush1.msra.mxu0 0.0
    %2627 = vmatprep.subr.mxu0 0.0
    %2628 = vmatpush1.msra.mxu0 0.0
    %2629 = vmatprep.subr.mxu0 0.0
    %2630 = vmatpush1.msra.mxu0 0.0
    %2631 = vmatprep.subr.mxu0 0.0
    %2632 = vmatpush1.msra.mxu0 0.0
    %2633 = vmatprep.subr.mxu0 0.0
    %2634 = vmatpush1.msra.mxu0 0.0
    %2635 = vmatprep.subr.mxu0 0.0
    %2636 = vmatpush1.msra.mxu0 0.0
    %2637 = vmatprep.subr.mxu0 0.0
    %2638 = vmatpush1.msra.mxu0 0.0
    %2639 = vmatprep.subr.mxu0 0.0
    %2640 = vmatpush1.msra.mxu0 0.0
    %2641 = vmatprep.subr.mxu0 0.0
    %2642 = vmatpush1.msra.mxu0 0.0
    %2643 = vmatprep.subr.mxu0 0.0
    %2644 = vmatpush1.msra.mxu0 0.0
    %2645 = vmatprep.subr.mxu0 0.0
    %2646 = vmatpush1.msra.mxu0 0.0
    %2647 = vmatprep.mubr.f32.mxu0 0.0
    %2648 = vmatmul.mubr.f32.gmra.mrb[0].mxu0 %v2577
    %v2649 = vpop.f32.mrb[0].mxu0
    %v2650 = vadd.f32 0.0, %v2649
    %v2651 = vpop.f32.mrb[0].mxu0
    %v2652 = vadd.f32 0.0, %v2651
    %2653 = vdwg.mxu0
    %2654 = vmatprep.subr.mxu0 %v2048
    %2655 = vmatpush1.msra.mxu0 %v2047
    %2656 = vmatprep.subr.mxu0 %v2052
    %2657 = vmatpush1.msra.mxu0 %v2051
    %2658 = vmatprep.subr.mxu0 %v2056
    %2659 = vmatpush1.msra.mxu0 %v2055
    %2660 = vmatprep.subr.mxu0 %v2060
    %2661 = vmatpush1.msra.mxu0 %v2059
    %2662 = vmatprep.subr.mxu0 %v2064
    %2663 = vmatpush1.msra.mxu0 %v2063
    %2664 = vmatprep.subr.mxu0 %v2068
    %2665 = vmatpush1.msra.mxu0 %v2067
    %2666 = vmatprep.subr.mxu0 %v2072
    %2667 = vmatpush1.msra.mxu0 %v2071
    %2668 = vmatprep.subr.mxu0 %v2076
    %2669 = vmatpush1.msra.mxu0 %v2075
    %2670 = vmatprep.subr.mxu0 %v2080
    %2671 = vmatpush1.msra.mxu0 %v2079
    %2672 = vmatprep.subr.mxu0 %v2084
    %2673 = vmatpush1.msra.mxu0 %v2083
    %2674 = vmatprep.subr.mxu0 %v2088
    %2675 = vmatpush1.msra.mxu0 %v2087
    %2676 = vmatprep.subr.mxu0 %v2092
    %2677 = vmatpush1.msra.mxu0 %v2091
    %2678 = vmatprep.subr.mxu0 %v2096
    %2679 = vmatpush1.msra.mxu0 %v2095
    %2680 = vmatprep.subr.mxu0 %v2100
    %2681 = vmatpush1.msra.mxu0 %v2099
    %2682 = vmatprep.subr.mxu0 %v2104
    %2683 = vmatpush1.msra.mxu0 %v2103
    %2684 = vmatprep.subr.mxu0 %v2108
    %2685 = vmatpush1.msra.mxu0 %v2107
    %2686 = vmatprep.subr.mxu0 0.0
    %2687 = vmatpush1.msra.mxu0 0.0
    %2688 = vmatprep.subr.mxu0 0.0
    %2689 = vmatpush1.msra.mxu0 0.0
    %2690 = vmatprep.subr.mxu0 0.0
    %2691 = vmatpush1.msra.mxu0 0.0
    %2692 = vmatprep.subr.mxu0 0.0
    %2693 = vmatpush1.msra.mxu0 0.0
    %2694 = vmatprep.subr.mxu0 0.0
    %2695 = vmatpush1.msra.mxu0 0.0
    %2696 = vmatprep.subr.mxu0 0.0
    %2697 = vmatpush1.msra.mxu0 0.0
    %2698 = vmatprep.subr.mxu0 0.0
    %2699 = vmatpush1.msra.mxu0 0.0
    %2700 = vmatprep.subr.mxu0 0.0
    %2701 = vmatpush1.msra.mxu0 0.0
    %2702 = vmatprep.subr.mxu0 0.0
    %2703 = vmatpush1.msra.mxu0 0.0
    %2704 = vmatprep.subr.mxu0 0.0
    %2705 = vmatpush1.msra.mxu0 0.0
    %2706 = vmatprep.subr.mxu0 0.0
    %2707 = vmatpush1.msra.mxu0 0.0
    %2708 = vmatprep.subr.mxu0 0.0
    %2709 = vmatpush1.msra.mxu0 0.0
    %2710 = vmatprep.subr.mxu0 0.0
    %2711 = vmatpush1.msra.mxu0 0.0
    %2712 = vmatprep.subr.mxu0 0.0
    %2713 = vmatpush1.msra.mxu0 0.0
    %2714 = vmatprep.subr.mxu0 0.0
    %2715 = vmatpush1.msra.mxu0 0.0
    %2716 = vmatprep.subr.mxu0 0.0
    %2717 = vmatpush1.msra.mxu0 0.0
    %2718 = vmatprep.mubr.f32.mxu0 0.0
    %2719 = vmatmul.mubr.f32.gmra.mrb[0].mxu0 %v2577
    %v2720 = vpop.f32.mrb[0].mxu0
    %v2721 = vadd.f32 0.0, %v2720
    %v2722 = vpop.f32.mrb[0].mxu0
    %v2723 = vadd.f32 0.0, %v2722
    %2724 = vdwg.mxu0
    %v2725 = vadd.f32 %v2579, %v2650
    %v2726 = vadd.f32 %v2580, %v2652
    %v2727 = vadd.f32 %v2581, %v2721
    %v2728 = vadd.f32 %v2582, %v2723
    %v2729 = vxor.u32 %v2725, 2147483648
    %v2730 = vmul.f32 %v2729, 1.442695
    %v2731 = vpow.pop %v2730
    %v2732 = vadd.f32 %v2731, 1.0
    %v2733 = vrcp.pop %v2732
    %v2734 = vmul.f32 1.0, %v2733
    %v2735 = vxor.u32 %v2726, 2147483648
    %v2736 = vmul.f32 %v2735, 1.442695
    %v2737 = vpow.pop %v2736
    %v2738 = vadd.f32 %v2737, 1.0
    %v2739 = vrcp.pop %v2738
    %v2740 = vmul.f32 1.0, %v2739
    %v2741 = vtanh.pop %v2727
    %v2742 = vxor.u32 %v2728, 2147483648
    %v2743 = vmul.f32 %v2742, 1.442695
    %v2744 = vpow.pop %v2743
    %v2745 = vadd.f32 %v2744, 1.0
    %v2746 = vrcp.pop %v2745
    %v2747 = vmul.f32 1.0, %v2746
    %v2748 = vmul.f32 %v2740, %v2578
    %v2749 = vmul.f32 %v2734, %v2741
    %v2750 = vadd.f32 %v2748, %v2749
    %v2751 = vtanh.pop %v2750
    %v2752 = vmul.f32 %v2747, %v2751
    %2753 = vst [vmem:[#allocation4] sm:$0xff] %v2752
    %2754 = vst [vmem:[#allocation5] sm:$0xff] %v2750
    %v2755 = vld [vmem:[#allocation4] sm:$0xff]
    %v2756 = vld [vmem:[#allocation5] sm:$0xff]
    %v2757 = vld [vmem:[%s887] sm:$0xff]
    %v2758 = vld [vmem:[%s887 + $0x8] sm:$0xff]
    %v2759 = vld [vmem:[%s887 + $0x10] sm:$0xff]
    %v2760 = vld [vmem:[%s887 + $0x18] sm:$0xff]
    %2761 = vmatprep.subr.mxu0 %v2046
    %2762 = vmatpush1.msra.mxu0 %v2045
    %2763 = vmatprep.subr.mxu0 %v2050
    %2764 = vmatpush1.msra.mxu0 %v2049
    %2765 = vmatprep.subr.mxu0 %v2054
    %2766 = vmatpush1.msra.mxu0 %v2053
    %2767 = vmatprep.subr.mxu0 %v2058
    %2768 = vmatpush1.msra.mxu0 %v2057
    %2769 = vmatprep.subr.mxu0 %v2062
    %2770 = vmatpush1.msra.mxu0 %v2061
    %2771 = vmatprep.subr.mxu0 %v2066
    %2772 = vmatpush1.msra.mxu0 %v2065
    %2773 = vmatprep.subr.mxu0 %v2070
    %2774 = vmatpush1.msra.mxu0 %v2069
    %2775 = vmatprep.subr.mxu0 %v2074
    %2776 = vmatpush1.msra.mxu0 %v2073
    %2777 = vmatprep.subr.mxu0 %v2078
    %2778 = vmatpush1.msra.mxu0 %v2077
    %2779 = vmatprep.subr.mxu0 %v2082
    %2780 = vmatpush1.msra.mxu0 %v2081
    %2781 = vmatprep.subr.mxu0 %v2086
    %2782 = vmatpush1.msra.mxu0 %v2085
    %2783 = vmatprep.subr.mxu0 %v2090
    %2784 = vmatpush1.msra.mxu0 %v2089
    %2785 = vmatprep.subr.mxu0 %v2094
    %2786 = vmatpush1.msra.mxu0 %v2093
    %2787 = vmatprep.subr.mxu0 %v2098
    %2788 = vmatpush1.msra.mxu0 %v2097
    %2789 = vmatprep.subr.mxu0 %v2102
    %2790 = vmatpush1.msra.mxu0 %v2101
    %2791 = vmatprep.subr.mxu0 %v2106
    %2792 = vmatpush1.msra.mxu0 %v2105
    %2793 = vmatprep.subr.mxu0 0.0
    %2794 = vmatpush1.msra.mxu0 0.0
    %2795 = vmatprep.subr.mxu0 0.0
    %2796 = vmatpush1.msra.mxu0 0.0
    %2797 = vmatprep.subr.mxu0 0.0
    %2798 = vmatpush1.msra.mxu0 0.0
    %2799 = vmatprep.subr.mxu0 0.0
    %2800 = vmatpush1.msra.mxu0 0.0
    %2801 = vmatprep.subr.mxu0 0.0
    %2802 = vmatpush1.msra.mxu0 0.0
    %2803 = vmatprep.subr.mxu0 0.0
    %2804 = vmatpush1.msra.mxu0 0.0
    %2805 = vmatprep.subr.mxu0 0.0
    %2806 = vmatpush1.msra.mxu0 0.0
    %2807 = vmatprep.subr.mxu0 0.0
    %2808 = vmatpush1.msra.mxu0 0.0
    %2809 = vmatprep.subr.mxu0 0.0
    %2810 = vmatpush1.msra.mxu0 0.0
    %2811 = vmatprep.subr.mxu0 0.0
    %2812 = vmatpush1.msra.mxu0 0.0
    %2813 = vmatprep.subr.mxu0 0.0
    %2814 = vmatpush1.msra.mxu0 0.0
    %2815 = vmatprep.subr.mxu0 0.0
    %2816 = vmatpush1.msra.mxu0 0.0
    %2817 = vmatprep.subr.mxu0 0.0
    %2818 = vmatpush1.msra.mxu0 0.0
    %2819 = vmatprep.subr.mxu0 0.0
    %2820 = vmatpush1.msra.mxu0 0.0
    %2821 = vmatprep.subr.mxu0 0.0
    %2822 = vmatpush1.msra.mxu0 0.0
    %2823 = vmatprep.subr.mxu0 0.0
    %2824 = vmatpush1.msra.mxu0 0.0
    %2825 = vmatprep.mubr.f32.mxu0 0.0
    %2826 = vmatmul.mubr.f32.gmra.mrb[0].mxu0 %v2755
    %v2827 = vpop.f32.mrb[0].mxu0
    %v2828 = vadd.f32 0.0, %v2827
    %v2829 = vpop.f32.mrb[0].mxu0
    %v2830 = vadd.f32 0.0, %v2829
    %2831 = vdwg.mxu0
    %2832 = vmatprep.subr.mxu0 %v2048
    %2833 = vmatpush1.msra.mxu0 %v2047
    %2834 = vmatprep.subr.mxu0 %v2052
    %2835 = vmatpush1.msra.mxu0 %v2051
    %2836 = vmatprep.subr.mxu0 %v2056
    %2837 = vmatpush1.msra.mxu0 %v2055
    %2838 = vmatprep.subr.mxu0 %v2060
    %2839 = vmatpush1.msra.mxu0 %v2059
    %2840 = vmatprep.subr.mxu0 %v2064
    %2841 = vmatpush1.msra.mxu0 %v2063
    %2842 = vmatprep.subr.mxu0 %v2068
    %2843 = vmatpush1.msra.mxu0 %v2067
    %2844 = vmatprep.subr.mxu0 %v2072
    %2845 = vmatpush1.msra.mxu0 %v2071
    %2846 = vmatprep.subr.mxu0 %v2076
    %2847 = vmatpush1.msra.mxu0 %v2075
    %2848 = vmatprep.subr.mxu0 %v2080
    %2849 = vmatpush1.msra.mxu0 %v2079
    %2850 = vmatprep.subr.mxu0 %v2084
    %2851 = vmatpush1.msra.mxu0 %v2083
    %2852 = vmatprep.subr.mxu0 %v2088
    %2853 = vmatpush1.msra.mxu0 %v2087
    %2854 = vmatprep.subr.mxu0 %v2092
    %2855 = vmatpush1.msra.mxu0 %v2091
    %2856 = vmatprep.subr.mxu0 %v2096
    %2857 = vmatpush1.msra.mxu0 %v2095
    %2858 = vmatprep.subr.mxu0 %v2100
    %2859 = vmatpush1.msra.mxu0 %v2099
    %2860 = vmatprep.subr.mxu0 %v2104
    %2861 = vmatpush1.msra.mxu0 %v2103
    %2862 = vmatprep.subr.mxu0 %v2108
    %2863 = vmatpush1.msra.mxu0 %v2107
    %2864 = vmatprep.subr.mxu0 0.0
    %2865 = vmatpush1.msra.mxu0 0.0
    %2866 = vmatprep.subr.mxu0 0.0
    %2867 = vmatpush1.msra.mxu0 0.0
    %2868 = vmatprep.subr.mxu0 0.0
    %2869 = vmatpush1.msra.mxu0 0.0
    %2870 = vmatprep.subr.mxu0 0.0
    %2871 = vmatpush1.msra.mxu0 0.0
    %2872 = vmatprep.subr.mxu0 0.0
    %2873 = vmatpush1.msra.mxu0 0.0
    %2874 = vmatprep.subr.mxu0 0.0
    %2875 = vmatpush1.msra.mxu0 0.0
    %2876 = vmatprep.subr.mxu0 0.0
    %2877 = vmatpush1.msra.mxu0 0.0
    %2878 = vmatprep.subr.mxu0 0.0
    %2879 = vmatpush1.msra.mxu0 0.0
    %2880 = vmatprep.subr.mxu0 0.0
    %2881 = vmatpush1.msra.mxu0 0.0
    %2882 = vmatprep.subr.mxu0 0.0
    %2883 = vmatpush1.msra.mxu0 0.0
    %2884 = vmatprep.subr.mxu0 0.0
    %2885 = vmatpush1.msra.mxu0 0.0
    %2886 = vmatprep.subr.mxu0 0.0
    %2887 = vmatpush1.msra.mxu0 0.0
    %2888 = vmatprep.subr.mxu0 0.0
    %2889 = vmatpush1.msra.mxu0 0.0
    %2890 = vmatprep.subr.mxu0 0.0
    %2891 = vmatpush1.msra.mxu0 0.0
    %2892 = vmatprep.subr.mxu0 0.0
    %2893 = vmatpush1.msra.mxu0 0.0
    %2894 = vmatprep.subr.mxu0 0.0
    %2895 = vmatpush1.msra.mxu0 0.0
    %2896 = vmatprep.mubr.f32.mxu0 0.0
    %2897 = vmatmul.mubr.f32.gmra.mrb[0].mxu0 %v2755
    %v2898 = vpop.f32.mrb[0].mxu0
    %v2899 = vadd.f32 0.0, %v2898
    %v2900 = vpop.f32.mrb[0].mxu0
    %v2901 = vadd.f32 0.0, %v2900
    %2902 = vdwg.mxu0
    %v2903 = vadd.f32 %v2757, %v2828
    %v2904 = vadd.f32 %v2758, %v2830
    %v2905 = vadd.f32 %v2759, %v2899
    %v2906 = vadd.f32 %v2760, %v2901
    %v2907 = vxor.u32 %v2903, 2147483648
    %v2908 = vmul.f32 %v2907, 1.442695
    %v2909 = vpow.pop %v2908
    %v2910 = vadd.f32 %v2909, 1.0
    %v2911 = vrcp.pop %v2910
    %v2912 = vmul.f32 1.0, %v2911
    %v2913 = vxor.u32 %v2904, 2147483648
    %v2914 = vmul.f32 %v2913, 1.442695
    %v2915 = vpow.pop %v2914
    %v2916 = vadd.f32 %v2915, 1.0
    %v2917 = vrcp.pop %v2916
    %v2918 = vmul.f32 1.0, %v2917
    %v2919 = vtanh.pop %v2905
    %v2920 = vxor.u32 %v2906, 2147483648
    %v2921 = vmul.f32 %v2920, 1.442695
    %v2922 = vpow.pop %v2921
    %v2923 = vadd.f32 %v2922, 1.0
    %v2924 = vrcp.pop %v2923
    %v2925 = vmul.f32 1.0, %v2924
    %v2926 = vmul.f32 %v2918, %v2756
    %v2927 = vmul.f32 %v2912, %v2919
    %v2928 = vadd.f32 %v2926, %v2927
    %v2929 = vtanh.pop %v2928
    %v2930 = vmul.f32 %v2925, %v2929
    %2931 = vst [vmem:[#allocation4] sm:$0xff] %v2930
    %2932 = vst [vmem:[#allocation5] sm:$0xff] %v2928
    %v2933 = vld [vmem:[#allocation4] sm:$0xff]
    %v2934 = vld [vmem:[#allocation5] sm:$0xff]
    %v2935 = vld [vmem:[%s1070] sm:$0xff]
    %v2936 = vld [vmem:[%s1070 + $0x8] sm:$0xff]
    %v2937 = vld [vmem:[%s1070 + $0x10] sm:$0xff]
    %v2938 = vld [vmem:[%s1070 + $0x18] sm:$0xff]
    %2939 = vmatprep.subr.mxu0 %v2046
    %2940 = vmatpush1.msra.mxu0 %v2045
    %2941 = vmatprep.subr.mxu0 %v2050
    %2942 = vmatpush1.msra.mxu0 %v2049
    %2943 = vmatprep.subr.mxu0 %v2054
    %2944 = vmatpush1.msra.mxu0 %v2053
    %2945 = vmatprep.subr.mxu0 %v2058
    %2946 = vmatpush1.msra.mxu0 %v2057
    %2947 = vmatprep.subr.mxu0 %v2062
    %2948 = vmatpush1.msra.mxu0 %v2061
    %2949 = vmatprep.subr.mxu0 %v2066
    %2950 = vmatpush1.msra.mxu0 %v2065
    %2951 = vmatprep.subr.mxu0 %v2070
    %2952 = vmatpush1.msra.mxu0 %v2069
    %2953 = vmatprep.subr.mxu0 %v2074
    %2954 = vmatpush1.msra.mxu0 %v2073
    %2955 = vmatprep.subr.mxu0 %v2078
    %2956 = vmatpush1.msra.mxu0 %v2077
    %2957 = vmatprep.subr.mxu0 %v2082
    %2958 = vmatpush1.msra.mxu0 %v2081
    %2959 = vmatprep.subr.mxu0 %v2086
    %2960 = vmatpush1.msra.mxu0 %v2085
    %2961 = vmatprep.subr.mxu0 %v2090
    %2962 = vmatpush1.msra.mxu0 %v2089
    %2963 = vmatprep.subr.mxu0 %v2094
    %2964 = vmatpush1.msra.mxu0 %v2093
    %2965 = vmatprep.subr.mxu0 %v2098
    %2966 = vmatpush1.msra.mxu0 %v2097
    %2967 = vmatprep.subr.mxu0 %v2102
    %2968 = vmatpush1.msra.mxu0 %v2101
    %2969 = vmatprep.subr.mxu0 %v2106
    %2970 = vmatpush1.msra.mxu0 %v2105
    %2971 = vmatprep.subr.mxu0 0.0
    %2972 = vmatpush1.msra.mxu0 0.0
    %2973 = vmatprep.subr.mxu0 0.0
    %2974 = vmatpush1.msra.mxu0 0.0
    %2975 = vmatprep.subr.mxu0 0.0
    %2976 = vmatpush1.msra.mxu0 0.0
    %2977 = vmatprep.subr.mxu0 0.0
    %2978 = vmatpush1.msra.mxu0 0.0
    %2979 = vmatprep.subr.mxu0 0.0
    %2980 = vmatpush1.msra.mxu0 0.0
    %2981 = vmatprep.subr.mxu0 0.0
    %2982 = vmatpush1.msra.mxu0 0.0
    %2983 = vmatprep.subr.mxu0 0.0
    %2984 = vmatpush1.msra.mxu0 0.0
    %2985 = vmatprep.subr.mxu0 0.0
    %2986 = vmatpush1.msra.mxu0 0.0
    %2987 = vmatprep.subr.mxu0 0.0
    %2988 = vmatpush1.msra.mxu0 0.0
    %2989 = vmatprep.subr.mxu0 0.0
    %2990 = vmatpush1.msra.mxu0 0.0
    %2991 = vmatprep.subr.mxu0 0.0
    %2992 = vmatpush1.msra.mxu0 0.0
    %2993 = vmatprep.subr.mxu0 0.0
    %2994 = vmatpush1.msra.mxu0 0.0
    %2995 = vmatprep.subr.mxu0 0.0
    %2996 = vmatpush1.msra.mxu0 0.0
    %2997 = vmatprep.subr.mxu0 0.0
    %2998 = vmatpush1.msra.mxu0 0.0
    %2999 = vmatprep.subr.mxu0 0.0
    %3000 = vmatpush1.msra.mxu0 0.0
    %3001 = vmatprep.subr.mxu0 0.0
    %3002 = vmatpush1.msra.mxu0 0.0
    %3003 = vmatprep.mubr.f32.mxu0 0.0
    %3004 = vmatmul.mubr.f32.gmra.mrb[0].mxu0 %v2933
    %v3005 = vpop.f32.mrb[0].mxu0
    %v3006 = vadd.f32 0.0, %v3005
    %v3007 = vpop.f32.mrb[0].mxu0
    %v3008 = vadd.f32 0.0, %v3007
    %3009 = vdwg.mxu0
    %3010 = vmatprep.subr.mxu0 %v2048
    %3011 = vmatpush1.msra.mxu0 %v2047
    %3012 = vmatprep.subr.mxu0 %v2052
    %3013 = vmatpush1.msra.mxu0 %v2051
    %3014 = vmatprep.subr.mxu0 %v2056
    %3015 = vmatpush1.msra.mxu0 %v2055
    %3016 = vmatprep.subr.mxu0 %v2060
    %3017 = vmatpush1.msra.mxu0 %v2059
    %3018 = vmatprep.subr.mxu0 %v2064
    %3019 = vmatpush1.msra.mxu0 %v2063
    %3020 = vmatprep.subr.mxu0 %v2068
    %3021 = vmatpush1.msra.mxu0 %v2067
    %3022 = vmatprep.subr.mxu0 %v2072
    %3023 = vmatpush1.msra.mxu0 %v2071
    %3024 = vmatprep.subr.mxu0 %v2076
    %3025 = vmatpush1.msra.mxu0 %v2075
    %3026 = vmatprep.subr.mxu0 %v2080
    %3027 = vmatpush1.msra.mxu0 %v2079
    %3028 = vmatprep.subr.mxu0 %v2084
    %3029 = vmatpush1.msra.mxu0 %v2083
    %3030 = vmatprep.subr.mxu0 %v2088
    %3031 = vmatpush1.msra.mxu0 %v2087
    %3032 = vmatprep.subr.mxu0 %v2092
    %3033 = vmatpush1.msra.mxu0 %v2091
    %3034 = vmatprep.subr.mxu0 %v2096
    %3035 = vmatpush1.msra.mxu0 %v2095
    %3036 = vmatprep.subr.mxu0 %v2100
    %3037 = vmatpush1.msra.mxu0 %v2099
    %3038 = vmatprep.subr.mxu0 %v2104
    %3039 = vmatpush1.msra.mxu0 %v2103
    %3040 = vmatprep.subr.mxu0 %v2108
    %3041 = vmatpush1.msra.mxu0 %v2107
    %3042 = vmatprep.subr.mxu0 0.0
    %3043 = vmatpush1.msra.mxu0 0.0
    %3044 = vmatprep.subr.mxu0 0.0
    %3045 = vmatpush1.msra.mxu0 0.0
    %3046 = vmatprep.subr.mxu0 0.0
    %3047 = vmatpush1.msra.mxu0 0.0
    %3048 = vmatprep.subr.mxu0 0.0
    %3049 = vmatpush1.msra.mxu0 0.0
    %3050 = vmatprep.subr.mxu0 0.0
    %3051 = vmatpush1.msra.mxu0 0.0
    %3052 = vmatprep.subr.mxu0 0.0
    %3053 = vmatpush1.msra.mxu0 0.0
    %3054 = vmatprep.subr.mxu0 0.0
    %3055 = vmatpush1.msra.mxu0 0.0
    %3056 = vmatprep.subr.mxu0 0.0
    %3057 = vmatpush1.msra.mxu0 0.0
    %3058 = vmatprep.subr.mxu0 0.0
    %3059 = vmatpush1.msra.mxu0 0.0
    %3060 = vmatprep.subr.mxu0 0.0
    %3061 = vmatpush1.msra.mxu0 0.0
    %3062 = vmatprep.subr.mxu0 0.0
    %3063 = vmatpush1.msra.mxu0 0.0
    %3064 = vmatprep.subr.mxu0 0.0
    %3065 = vmatpush1.msra.mxu0 0.0
    %3066 = vmatprep.subr.mxu0 0.0
    %3067 = vmatpush1.msra.mxu0 0.0
    %3068 = vmatprep.subr.mxu0 0.0
    %3069 = vmatpush1.msra.mxu0 0.0
    %3070 = vmatprep.subr.mxu0 0.0
    %3071 = vmatpush1.msra.mxu0 0.0
    %3072 = vmatprep.subr.mxu0 0.0
    %3073 = vmatpush1.msra.mxu0 0.0
    %3074 = vmatprep.mubr.f32.mxu0 0.0
    %3075 = vmatmul.mubr.f32.gmra.mrb[0].mxu0 %v2933
    %v3076 = vpop.f32.mrb[0].mxu0
    %v3077 = vadd.f32 0.0, %v3076
    %v3078 = vpop.f32.mrb[0].mxu0
    %v3079 = vadd.f32 0.0, %v3078
    %3080 = vdwg.mxu0
    %v3081 = vadd.f32 %v2935, %v3006
    %v3082 = vadd.f32 %v2936, %v3008
    %v3083 = vadd.f32 %v2937, %v3077
    %v3084 = vadd.f32 %v2938, %v3079
    %v3085 = vxor.u32 %v3081, 2147483648
    %v3086 = vmul.f32 %v3085, 1.442695
    %v3087 = vpow.pop %v3086
    %v3088 = vadd.f32 %v3087, 1.0
    %v3089 = vrcp.pop %v3088
    %v3090 = vmul.f32 1.0, %v3089
    %v3091 = vxor.u32 %v3082, 2147483648
    %v3092 = vmul.f32 %v3091, 1.442695
    %v3093 = vpow.pop %v3092
    %v3094 = vadd.f32 %v3093, 1.0
    %v3095 = vrcp.pop %v3094
    %v3096 = vmul.f32 1.0, %v3095
    %v3097 = vtanh.pop %v3083
    %v3098 = vxor.u32 %v3084, 2147483648
    %v3099 = vmul.f32 %v3098, 1.442695
    %v3100 = vpow.pop %v3099
    %v3101 = vadd.f32 %v3100, 1.0
    %v3102 = vrcp.pop %v3101
    %v3103 = vmul.f32 1.0, %v3102
    %v3104 = vmul.f32 %v3096, %v2934
    %v3105 = vmul.f32 %v3090, %v3097
    %v3106 = vadd.f32 %v3104, %v3105
    %v3107 = vtanh.pop %v3106
    %v3108 = vmul.f32 %v3103, %v3107
    %3109 = vst [vmem:[#allocation4] sm:$0xff] %v3108
    %3110 = vst [vmem:[#allocation5] sm:$0xff] %v3106
    %v3111 = vld [vmem:[#allocation4] sm:$0xff]
    %v3112 = vld [vmem:[#allocation5] sm:$0xff]
    %v3113 = vld [vmem:[%s1253] sm:$0xff]
    %v3114 = vld [vmem:[%s1253 + $0x8] sm:$0xff]
    %v3115 = vld [vmem:[%s1253 + $0x10] sm:$0xff]
    %v3116 = vld [vmem:[%s1253 + $0x18] sm:$0xff]
    %3117 = vmatprep.subr.mxu0 %v2046
    %3118 = vmatpush1.msra.mxu0 %v2045
    %3119 = vmatprep.subr.mxu0 %v2050
    %3120 = vmatpush1.msra.mxu0 %v2049
    %3121 = vmatprep.subr.mxu0 %v2054
    %3122 = vmatpush1.msra.mxu0 %v2053
    %3123 = vmatprep.subr.mxu0 %v2058
    %3124 = vmatpush1.msra.mxu0 %v2057
    %3125 = vmatprep.subr.mxu0 %v2062
    %3126 = vmatpush1.msra.mxu0 %v2061
    %3127 = vmatprep.subr.mxu0 %v2066
    %3128 = vmatpush1.msra.mxu0 %v2065
    %3129 = vmatprep.subr.mxu0 %v2070
    %3130 = vmatpush1.msra.mxu0 %v2069
    %3131 = vmatprep.subr.mxu0 %v2074
    %3132 = vmatpush1.msra.mxu0 %v2073
    %3133 = vmatprep.subr.mxu0 %v2078
    %3134 = vmatpush1.msra.mxu0 %v2077
    %3135 = vmatprep.subr.mxu0 %v2082
    %3136 = vmatpush1.msra.mxu0 %v2081
    %3137 = vmatprep.subr.mxu0 %v2086
    %3138 = vmatpush1.msra.mxu0 %v2085
    %3139 = vmatprep.subr.mxu0 %v2090
    %3140 = vmatpush1.msra.mxu0 %v2089
    %3141 = vmatprep.subr.mxu0 %v2094
    %3142 = vmatpush1.msra.mxu0 %v2093
    %3143 = vmatprep.subr.mxu0 %v2098
    %3144 = vmatpush1.msra.mxu0 %v2097
    %3145 = vmatprep.subr.mxu0 %v2102
    %3146 = vmatpush1.msra.mxu0 %v2101
    %3147 = vmatprep.subr.mxu0 %v2106
    %3148 = vmatpush1.msra.mxu0 %v2105
    %3149 = vmatprep.subr.mxu0 0.0
    %3150 = vmatpush1.msra.mxu0 0.0
    %3151 = vmatprep.subr.mxu0 0.0
    %3152 = vmatpush1.msra.mxu0 0.0
    %3153 = vmatprep.subr.mxu0 0.0
    %3154 = vmatpush1.msra.mxu0 0.0
    %3155 = vmatprep.subr.mxu0 0.0
    %3156 = vmatpush1.msra.mxu0 0.0
    %3157 = vmatprep.subr.mxu0 0.0
    %3158 = vmatpush1.msra.mxu0 0.0
    %3159 = vmatprep.subr.mxu0 0.0
    %3160 = vmatpush1.msra.mxu0 0.0
    %3161 = vmatprep.subr.mxu0 0.0
    %3162 = vmatpush1.msra.mxu0 0.0
    %3163 = vmatprep.subr.mxu0 0.0
    %3164 = vmatpush1.msra.mxu0 0.0
    %3165 = vmatprep.subr.mxu0 0.0
    %3166 = vmatpush1.msra.mxu0 0.0
    %3167 = vmatprep.subr.mxu0 0.0
    %3168 = vmatpush1.msra.mxu0 0.0
    %3169 = vmatprep.subr.mxu0 0.0
    %3170 = vmatpush1.msra.mxu0 0.0
    %3171 = vmatprep.subr.mxu0 0.0
    %3172 = vmatpush1.msra.mxu0 0.0
    %3173 = vmatprep.subr.mxu0 0.0
    %3174 = vmatpush1.msra.mxu0 0.0
    %3175 = vmatprep.subr.mxu0 0.0
    %3176 = vmatpush1.msra.mxu0 0.0
    %3177 = vmatprep.subr.mxu0 0.0
    %3178 = vmatpush1.msra.mxu0 0.0
    %3179 = vmatprep.subr.mxu0 0.0
    %3180 = vmatpush1.msra.mxu0 0.0
    %3181 = vmatprep.mubr.f32.mxu0 0.0
    %3182 = vmatmul.mubr.f32.gmra.mrb[0].mxu0 %v3111
    %v3183 = vpop.f32.mrb[0].mxu0
    %v3184 = vadd.f32 0.0, %v3183
    %v3185 = vpop.f32.mrb[0].mxu0
    %v3186 = vadd.f32 0.0, %v3185
    %3187 = vdwg.mxu0
    %3188 = vmatprep.subr.mxu0 %v2048
    %3189 = vmatpush1.msra.mxu0 %v2047
    %3190 = vmatprep.subr.mxu0 %v2052
    %3191 = vmatpush1.msra.mxu0 %v2051
    %3192 = vmatprep.subr.mxu0 %v2056
    %3193 = vmatpush1.msra.mxu0 %v2055
    %3194 = vmatprep.subr.mxu0 %v2060
    %3195 = vmatpush1.msra.mxu0 %v2059
    %3196 = vmatprep.subr.mxu0 %v2064
    %3197 = vmatpush1.msra.mxu0 %v2063
    %3198 = vmatprep.subr.mxu0 %v2068
    %3199 = vmatpush1.msra.mxu0 %v2067
    %3200 = vmatprep.subr.mxu0 %v2072
    %3201 = vmatpush1.msra.mxu0 %v2071
    %3202 = vmatprep.subr.mxu0 %v2076
    %3203 = vmatpush1.msra.mxu0 %v2075
    %3204 = vmatprep.subr.mxu0 %v2080
    %3205 = vmatpush1.msra.mxu0 %v2079
    %3206 = vmatprep.subr.mxu0 %v2084
    %3207 = vmatpush1.msra.mxu0 %v2083
    %3208 = vmatprep.subr.mxu0 %v2088
    %3209 = vmatpush1.msra.mxu0 %v2087
    %3210 = vmatprep.subr.mxu0 %v2092
    %3211 = vmatpush1.msra.mxu0 %v2091
    %3212 = vmatprep.subr.mxu0 %v2096
    %3213 = vmatpush1.msra.mxu0 %v2095
    %3214 = vmatprep.subr.mxu0 %v2100
    %3215 = vmatpush1.msra.mxu0 %v2099
    %3216 = vmatprep.subr.mxu0 %v2104
    %3217 = vmatpush1.msra.mxu0 %v2103
    %3218 = vmatprep.subr.mxu0 %v2108
    %3219 = vmatpush1.msra.mxu0 %v2107
    %3220 = vmatprep.subr.mxu0 0.0
    %3221 = vmatpush1.msra.mxu0 0.0
    %3222 = vmatprep.subr.mxu0 0.0
    %3223 = vmatpush1.msra.mxu0 0.0
    %3224 = vmatprep.subr.mxu0 0.0
    %3225 = vmatpush1.msra.mxu0 0.0
    %3226 = vmatprep.subr.mxu0 0.0
    %3227 = vmatpush1.msra.mxu0 0.0
    %3228 = vmatprep.subr.mxu0 0.0
    %3229 = vmatpush1.msra.mxu0 0.0
    %3230 = vmatprep.subr.mxu0 0.0
    %3231 = vmatpush1.msra.mxu0 0.0
    %3232 = vmatprep.subr.mxu0 0.0
    %3233 = vmatpush1.msra.mxu0 0.0
    %3234 = vmatprep.subr.mxu0 0.0
    %3235 = vmatpush1.msra.mxu0 0.0
    %3236 = vmatprep.subr.mxu0 0.0
    %3237 = vmatpush1.msra.mxu0 0.0
    %3238 = vmatprep.subr.mxu0 0.0
    %3239 = vmatpush1.msra.mxu0 0.0
    %3240 = vmatprep.subr.mxu0 0.0
    %3241 = vmatpush1.msra.mxu0 0.0
    %3242 = vmatprep.subr.mxu0 0.0
    %3243 = vmatpush1.msra.mxu0 0.0
    %3244 = vmatprep.subr.mxu0 0.0
    %3245 = vmatpush1.msra.mxu0 0.0
    %3246 = vmatprep.subr.mxu0 0.0
    %3247 = vmatpush1.msra.mxu0 0.0
    %3248 = vmatprep.subr.mxu0 0.0
    %3249 = vmatpush1.msra.mxu0 0.0
    %3250 = vmatprep.subr.mxu0 0.0
    %3251 = vmatpush1.msra.mxu0 0.0
    %3252 = vmatprep.mubr.f32.mxu0 0.0
    %3253 = vmatmul.mubr.f32.gmra.mrb[0].mxu0 %v3111
    %v3254 = vpop.f32.mrb[0].mxu0
    %v3255 = vadd.f32 0.0, %v3254
    %v3256 = vpop.f32.mrb[0].mxu0
    %v3257 = vadd.f32 0.0, %v3256
    %3258 = vdwg.mxu0
    %v3259 = vadd.f32 %v3113, %v3184
    %v3260 = vadd.f32 %v3114, %v3186
    %v3261 = vadd.f32 %v3115, %v3255
    %v3262 = vadd.f32 %v3116, %v3257
    %v3263 = vxor.u32 %v3259, 2147483648
    %v3264 = vmul.f32 %v3263, 1.442695
    %v3265 = vpow.pop %v3264
    %v3266 = vadd.f32 %v3265, 1.0
    %v3267 = vrcp.pop %v3266
    %v3268 = vmul.f32 1.0, %v3267
    %v3269 = vxor.u32 %v3260, 2147483648
    %v3270 = vmul.f32 %v3269, 1.442695
    %v3271 = vpow.pop %v3270
    %v3272 = vadd.f32 %v3271, 1.0
    %v3273 = vrcp.pop %v3272
    %v3274 = vmul.f32 1.0, %v3273
    %v3275 = vtanh.pop %v3261
    %v3276 = vxor.u32 %v3262, 2147483648
    %v3277 = vmul.f32 %v3276, 1.442695
    %v3278 = vpow.pop %v3277
    %v3279 = vadd.f32 %v3278, 1.0
    %v3280 = vrcp.pop %v3279
    %v3281 = vmul.f32 1.0, %v3280
    %v3282 = vmul.f32 %v3274, %v3112
    %v3283 = vmul.f32 %v3268, %v3275
    %v3284 = vadd.f32 %v3282, %v3283
    %v3285 = vtanh.pop %v3284
    %v3286 = vmul.f32 %v3281, %v3285
    %3287 = vst [vmem:[#allocation4] sm:$0xff] %v3286
    %3288 = vst [vmem:[#allocation5] sm:$0xff] %v3284
    %v3289 = vld [vmem:[#allocation4] sm:$0xff]
    %v3290 = vld [vmem:[#allocation5] sm:$0xff]
    %v3291 = vld [vmem:[%s1436] sm:$0xff]
    %v3292 = vld [vmem:[%s1436 + $0x8] sm:$0xff]
    %v3293 = vld [vmem:[%s1436 + $0x10] sm:$0xff]
    %v3294 = vld [vmem:[%s1436 + $0x18] sm:$0xff]
    %3295 = vmatprep.subr.mxu0 %v2046
    %3296 = vmatpush1.msra.mxu0 %v2045
    %3297 = vmatprep.subr.mxu0 %v2050
    %3298 = vmatpush1.msra.mxu0 %v2049
    %3299 = vmatprep.subr.mxu0 %v2054
    %3300 = vmatpush1.msra.mxu0 %v2053
    %3301 = vmatprep.subr.mxu0 %v2058
    %3302 = vmatpush1.msra.mxu0 %v2057
    %3303 = vmatprep.subr.mxu0 %v2062
    %3304 = vmatpush1.msra.mxu0 %v2061
    %3305 = vmatprep.subr.mxu0 %v2066
    %3306 = vmatpush1.msra.mxu0 %v2065
    %3307 = vmatprep.subr.mxu0 %v2070
    %3308 = vmatpush1.msra.mxu0 %v2069
    %3309 = vmatprep.subr.mxu0 %v2074
    %3310 = vmatpush1.msra.mxu0 %v2073
    %3311 = vmatprep.subr.mxu0 %v2078
    %3312 = vmatpush1.msra.mxu0 %v2077
    %3313 = vmatprep.subr.mxu0 %v2082
    %3314 = vmatpush1.msra.mxu0 %v2081
    %3315 = vmatprep.subr.mxu0 %v2086
    %3316 = vmatpush1.msra.mxu0 %v2085
    %3317 = vmatprep.subr.mxu0 %v2090
    %3318 = vmatpush1.msra.mxu0 %v2089
    %3319 = vmatprep.subr.mxu0 %v2094
    %3320 = vmatpush1.msra.mxu0 %v2093
    %3321 = vmatprep.subr.mxu0 %v2098
    %3322 = vmatpush1.msra.mxu0 %v2097
    %3323 = vmatprep.subr.mxu0 %v2102
    %3324 = vmatpush1.msra.mxu0 %v2101
    %3325 = vmatprep.subr.mxu0 %v2106
    %3326 = vmatpush1.msra.mxu0 %v2105
    %3327 = vmatprep.subr.mxu0 0.0
    %3328 = vmatpush1.msra.mxu0 0.0
    %3329 = vmatprep.subr.mxu0 0.0
    %3330 = vmatpush1.msra.mxu0 0.0
    %3331 = vmatprep.subr.mxu0 0.0
    %3332 = vmatpush1.msra.mxu0 0.0
    %3333 = vmatprep.subr.mxu0 0.0
    %3334 = vmatpush1.msra.mxu0 0.0
    %3335 = vmatprep.subr.mxu0 0.0
    %3336 = vmatpush1.msra.mxu0 0.0
    %3337 = vmatprep.subr.mxu0 0.0
    %3338 = vmatpush1.msra.mxu0 0.0
    %3339 = vmatprep.subr.mxu0 0.0
    %3340 = vmatpush1.msra.mxu0 0.0
    %3341 = vmatprep.subr.mxu0 0.0
    %3342 = vmatpush1.msra.mxu0 0.0
    %3343 = vmatprep.subr.mxu0 0.0
    %3344 = vmatpush1.msra.mxu0 0.0
    %3345 = vmatprep.subr.mxu0 0.0
    %3346 = vmatpush1.msra.mxu0 0.0
    %3347 = vmatprep.subr.mxu0 0.0
    %3348 = vmatpush1.msra.mxu0 0.0
    %3349 = vmatprep.subr.mxu0 0.0
    %3350 = vmatpush1.msra.mxu0 0.0
    %3351 = vmatprep.subr.mxu0 0.0
    %3352 = vmatpush1.msra.mxu0 0.0
    %3353 = vmatprep.subr.mxu0 0.0
    %3354 = vmatpush1.msra.mxu0 0.0
    %3355 = vmatprep.subr.mxu0 0.0
    %3356 = vmatpush1.msra.mxu0 0.0
    %3357 = vmatprep.subr.mxu0 0.0
    %3358 = vmatpush1.msra.mxu0 0.0
    %3359 = vmatprep.mubr.f32.mxu0 0.0
    %3360 = vmatmul.mubr.f32.gmra.mrb[0].mxu0 %v3289
    %v3361 = vpop.f32.mrb[0].mxu0
    %v3362 = vadd.f32 0.0, %v3361
    %v3363 = vpop.f32.mrb[0].mxu0
    %v3364 = vadd.f32 0.0, %v3363
    %3365 = vdwg.mxu0
    %3366 = vmatprep.subr.mxu0 %v2048
    %3367 = vmatpush1.msra.mxu0 %v2047
    %3368 = vmatprep.subr.mxu0 %v2052
    %3369 = vmatpush1.msra.mxu0 %v2051
    %3370 = vmatprep.subr.mxu0 %v2056
    %3371 = vmatpush1.msra.mxu0 %v2055
    %3372 = vmatprep.subr.mxu0 %v2060
    %3373 = vmatpush1.msra.mxu0 %v2059
    %3374 = vmatprep.subr.mxu0 %v2064
    %3375 = vmatpush1.msra.mxu0 %v2063
    %3376 = vmatprep.subr.mxu0 %v2068
    %3377 = vmatpush1.msra.mxu0 %v2067
    %3378 = vmatprep.subr.mxu0 %v2072
    %3379 = vmatpush1.msra.mxu0 %v2071
    %3380 = vmatprep.subr.mxu0 %v2076
    %3381 = vmatpush1.msra.mxu0 %v2075
    %3382 = vmatprep.subr.mxu0 %v2080
    %3383 = vmatpush1.msra.mxu0 %v2079
    %3384 = vmatprep.subr.mxu0 %v2084
    %3385 = vmatpush1.msra.mxu0 %v2083
    %3386 = vmatprep.subr.mxu0 %v2088
    %3387 = vmatpush1.msra.mxu0 %v2087
    %3388 = vmatprep.subr.mxu0 %v2092
    %3389 = vmatpush1.msra.mxu0 %v2091
    %3390 = vmatprep.subr.mxu0 %v2096
    %3391 = vmatpush1.msra.mxu0 %v2095
    %3392 = vmatprep.subr.mxu0 %v2100
    %3393 = vmatpush1.msra.mxu0 %v2099
    %3394 = vmatprep.subr.mxu0 %v2104
    %3395 = vmatpush1.msra.mxu0 %v2103
    %3396 = vmatprep.subr.mxu0 %v2108
    %3397 = vmatpush1.msra.mxu0 %v2107
    %3398 = vmatprep.subr.mxu0 0.0
    %3399 = vmatpush1.msra.mxu0 0.0
    %3400 = vmatprep.subr.mxu0 0.0
    %3401 = vmatpush1.msra.mxu0 0.0
    %3402 = vmatprep.subr.mxu0 0.0
    %3403 = vmatpush1.msra.mxu0 0.0
    %3404 = vmatprep.subr.mxu0 0.0
    %3405 = vmatpush1.msra.mxu0 0.0
    %3406 = vmatprep.subr.mxu0 0.0
    %3407 = vmatpush1.msra.mxu0 0.0
    %3408 = vmatprep.subr.mxu0 0.0
    %3409 = vmatpush1.msra.mxu0 0.0
    %3410 = vmatprep.subr.mxu0 0.0
    %3411 = vmatpush1.msra.mxu0 0.0
    %3412 = vmatprep.subr.mxu0 0.0
    %3413 = vmatpush1.msra.mxu0 0.0
    %3414 = vmatprep.subr.mxu0 0.0
    %3415 = vmatpush1.msra.mxu0 0.0
    %3416 = vmatprep.subr.mxu0 0.0
    %3417 = vmatpush1.msra.mxu0 0.0
    %3418 = vmatprep.subr.mxu0 0.0
    %3419 = vmatpush1.msra.mxu0 0.0
    %3420 = vmatprep.subr.mxu0 0.0
    %3421 = vmatpush1.msra.mxu0 0.0
    %3422 = vmatprep.subr.mxu0 0.0
    %3423 = vmatpush1.msra.mxu0 0.0
    %3424 = vmatprep.subr.mxu0 0.0
    %3425 = vmatpush1.msra.mxu0 0.0
    %3426 = vmatprep.subr.mxu0 0.0
    %3427 = vmatpush1.msra.mxu0 0.0
    %3428 = vmatprep.subr.mxu0 0.0
    %3429 = vmatpush1.msra.mxu0 0.0
    %3430 = vmatprep.mubr.f32.mxu0 0.0
    %3431 = vmatmul.mubr.f32.gmra.mrb[0].mxu0 %v3289
    %v3432 = vpop.f32.mrb[0].mxu0
    %v3433 = vadd.f32 0.0, %v3432
    %v3434 = vpop.f32.mrb[0].mxu0
    %v3435 = vadd.f32 0.0, %v3434
    %3436 = vdwg.mxu0
    %v3437 = vadd.f32 %v3291, %v3362
    %v3438 = vadd.f32 %v3292, %v3364
    %v3439 = vadd.f32 %v3293, %v3433
    %v3440 = vadd.f32 %v3294, %v3435
    %v3441 = vxor.u32 %v3437, 2147483648
    %v3442 = vmul.f32 %v3441, 1.442695
    %v3443 = vpow.pop %v3442
    %v3444 = vadd.f32 %v3443, 1.0
    %v3445 = vrcp.pop %v3444
    %v3446 = vmul.f32 1.0, %v3445
    %v3447 = vxor.u32 %v3438, 2147483648
    %v3448 = vmul.f32 %v3447, 1.442695
    %v3449 = vpow.pop %v3448
    %v3450 = vadd.f32 %v3449, 1.0
    %v3451 = vrcp.pop %v3450
    %v3452 = vmul.f32 1.0, %v3451
    %v3453 = vtanh.pop %v3439
    %v3454 = vxor.u32 %v3440, 2147483648
    %v3455 = vmul.f32 %v3454, 1.442695
    %v3456 = vpow.pop %v3455
    %v3457 = vadd.f32 %v3456, 1.0
    %v3458 = vrcp.pop %v3457
    %v3459 = vmul.f32 1.0, %v3458
    %v3460 = vmul.f32 %v3452, %v3290
    %v3461 = vmul.f32 %v3446, %v3453
    %v3462 = vadd.f32 %v3460, %v3461
    %v3463 = vtanh.pop %v3462
    %v3464 = vmul.f32 %v3459, %v3463
    %3465 = vst [vmem:[#allocation4] sm:$0xff] %v3464
    %3466 = vst [vmem:[#allocation5] sm:$0xff] %v3462
    %v3467 = vld [vmem:[#allocation4] sm:$0xff]
    %v3468 = vld [vmem:[#allocation5] sm:$0xff]
    %v3469 = vld [vmem:[%s1619] sm:$0xff]
    %v3470 = vld [vmem:[%s1619 + $0x8] sm:$0xff]
    %v3471 = vld [vmem:[%s1619 + $0x10] sm:$0xff]
    %v3472 = vld [vmem:[%s1619 + $0x18] sm:$0xff]
    %3473 = vmatprep.subr.mxu0 %v2046
    %3474 = vmatpush1.msra.mxu0 %v2045
    %3475 = vmatprep.subr.mxu0 %v2050
    %3476 = vmatpush1.msra.mxu0 %v2049
    %3477 = vmatprep.subr.mxu0 %v2054
    %3478 = vmatpush1.msra.mxu0 %v2053
    %3479 = vmatprep.subr.mxu0 %v2058
    %3480 = vmatpush1.msra.mxu0 %v2057
    %3481 = vmatprep.subr.mxu0 %v2062
    %3482 = vmatpush1.msra.mxu0 %v2061
    %3483 = vmatprep.subr.mxu0 %v2066
    %3484 = vmatpush1.msra.mxu0 %v2065
    %3485 = vmatprep.subr.mxu0 %v2070
    %3486 = vmatpush1.msra.mxu0 %v2069
    %3487 = vmatprep.subr.mxu0 %v2074
    %3488 = vmatpush1.msra.mxu0 %v2073
    %3489 = vmatprep.subr.mxu0 %v2078
    %3490 = vmatpush1.msra.mxu0 %v2077
    %3491 = vmatprep.subr.mxu0 %v2082
    %3492 = vmatpush1.msra.mxu0 %v2081
    %3493 = vmatprep.subr.mxu0 %v2086
    %3494 = vmatpush1.msra.mxu0 %v2085
    %3495 = vmatprep.subr.mxu0 %v2090
    %3496 = vmatpush1.msra.mxu0 %v2089
    %3497 = vmatprep.subr.mxu0 %v2094
    %3498 = vmatpush1.msra.mxu0 %v2093
    %3499 = vmatprep.subr.mxu0 %v2098
    %3500 = vmatpush1.msra.mxu0 %v2097
    %3501 = vmatprep.subr.mxu0 %v2102
    %3502 = vmatpush1.msra.mxu0 %v2101
    %3503 = vmatprep.subr.mxu0 %v2106
    %3504 = vmatpush1.msra.mxu0 %v2105
    %3505 = vmatprep.subr.mxu0 0.0
    %3506 = vmatpush1.msra.mxu0 0.0
    %3507 = vmatprep.subr.mxu0 0.0
    %3508 = vmatpush1.msra.mxu0 0.0
    %3509 = vmatprep.subr.mxu0 0.0
    %3510 = vmatpush1.msra.mxu0 0.0
    %3511 = vmatprep.subr.mxu0 0.0
    %3512 = vmatpush1.msra.mxu0 0.0
    %3513 = vmatprep.subr.mxu0 0.0
    %3514 = vmatpush1.msra.mxu0 0.0
    %3515 = vmatprep.subr.mxu0 0.0
    %3516 = vmatpush1.msra.mxu0 0.0
    %3517 = vmatprep.subr.mxu0 0.0
    %3518 = vmatpush1.msra.mxu0 0.0
    %3519 = vmatprep.subr.mxu0 0.0
    %3520 = vmatpush1.msra.mxu0 0.0
    %3521 = vmatprep.subr.mxu0 0.0
    %3522 = vmatpush1.msra.mxu0 0.0
    %3523 = vmatprep.subr.mxu0 0.0
    %3524 = vmatpush1.msra.mxu0 0.0
    %3525 = vmatprep.subr.mxu0 0.0
    %3526 = vmatpush1.msra.mxu0 0.0
    %3527 = vmatprep.subr.mxu0 0.0
    %3528 = vmatpush1.msra.mxu0 0.0
    %3529 = vmatprep.subr.mxu0 0.0
    %3530 = vmatpush1.msra.mxu0 0.0
    %3531 = vmatprep.subr.mxu0 0.0
    %3532 = vmatpush1.msra.mxu0 0.0
    %3533 = vmatprep.subr.mxu0 0.0
    %3534 = vmatpush1.msra.mxu0 0.0
    %3535 = vmatprep.subr.mxu0 0.0
    %3536 = vmatpush1.msra.mxu0 0.0
    %3537 = vmatprep.mubr.f32.mxu0 0.0
    %3538 = vmatmul.mubr.f32.gmra.mrb[0].mxu0 %v3467
    %v3539 = vpop.f32.mrb[0].mxu0
    %v3540 = vadd.f32 0.0, %v3539
    %v3541 = vpop.f32.mrb[0].mxu0
    %v3542 = vadd.f32 0.0, %v3541
    %3543 = vdwg.mxu0
    %3544 = vmatprep.subr.mxu0 %v2048
    %3545 = vmatpush1.msra.mxu0 %v2047
    %3546 = vmatprep.subr.mxu0 %v2052
    %3547 = vmatpush1.msra.mxu0 %v2051
    %3548 = vmatprep.subr.mxu0 %v2056
    %3549 = vmatpush1.msra.mxu0 %v2055
    %3550 = vmatprep.subr.mxu0 %v2060
    %3551 = vmatpush1.msra.mxu0 %v2059
    %3552 = vmatprep.subr.mxu0 %v2064
    %3553 = vmatpush1.msra.mxu0 %v2063
    %3554 = vmatprep.subr.mxu0 %v2068
    %3555 = vmatpush1.msra.mxu0 %v2067
    %3556 = vmatprep.subr.mxu0 %v2072
    %3557 = vmatpush1.msra.mxu0 %v2071
    %3558 = vmatprep.subr.mxu0 %v2076
    %3559 = vmatpush1.msra.mxu0 %v2075
    %3560 = vmatprep.subr.mxu0 %v2080
    %3561 = vmatpush1.msra.mxu0 %v2079
    %3562 = vmatprep.subr.mxu0 %v2084
    %3563 = vmatpush1.msra.mxu0 %v2083
    %3564 = vmatprep.subr.mxu0 %v2088
    %3565 = vmatpush1.msra.mxu0 %v2087
    %3566 = vmatprep.subr.mxu0 %v2092
    %3567 = vmatpush1.msra.mxu0 %v2091
    %3568 = vmatprep.subr.mxu0 %v2096
    %3569 = vmatpush1.msra.mxu0 %v2095
    %3570 = vmatprep.subr.mxu0 %v2100
    %3571 = vmatpush1.msra.mxu0 %v2099
    %3572 = vmatprep.subr.mxu0 %v2104
    %3573 = vmatpush1.msra.mxu0 %v2103
    %3574 = vmatprep.subr.mxu0 %v2108
    %3575 = vmatpush1.msra.mxu0 %v2107
    %3576 = vmatprep.subr.mxu0 0.0
    %3577 = vmatpush1.msra.mxu0 0.0
    %3578 = vmatprep.subr.mxu0 0.0
    %3579 = vmatpush1.msra.mxu0 0.0
    %3580 = vmatprep.subr.mxu0 0.0
    %3581 = vmatpush1.msra.mxu0 0.0
    %3582 = vmatprep.subr.mxu0 0.0
    %3583 = vmatpush1.msra.mxu0 0.0
    %3584 = vmatprep.subr.mxu0 0.0
    %3585 = vmatpush1.msra.mxu0 0.0
    %3586 = vmatprep.subr.mxu0 0.0
    %3587 = vmatpush1.msra.mxu0 0.0
    %3588 = vmatprep.subr.mxu0 0.0
    %3589 = vmatpush1.msra.mxu0 0.0
    %3590 = vmatprep.subr.mxu0 0.0
    %3591 = vmatpush1.msra.mxu0 0.0
    %3592 = vmatprep.subr.mxu0 0.0
    %3593 = vmatpush1.msra.mxu0 0.0
    %3594 = vmatprep.subr.mxu0 0.0
    %3595 = vmatpush1.msra.mxu0 0.0
    %3596 = vmatprep.subr.mxu0 0.0
    %3597 = vmatpush1.msra.mxu0 0.0
    %3598 = vmatprep.subr.mxu0 0.0
    %3599 = vmatpush1.msra.mxu0 0.0
    %3600 = vmatprep.subr.mxu0 0.0
    %3601 = vmatpush1.msra.mxu0 0.0
    %3602 = vmatprep.subr.mxu0 0.0
    %3603 = vmatpush1.msra.mxu0 0.0
    %3604 = vmatprep.subr.mxu0 0.0
    %3605 = vmatpush1.msra.mxu0 0.0
    %3606 = vmatprep.subr.mxu0 0.0
    %3607 = vmatpush1.msra.mxu0 0.0
    %3608 = vmatprep.mubr.f32.mxu0 0.0
    %3609 = vmatmul.mubr.f32.gmra.mrb[0].mxu0 %v3467
    %v3610 = vpop.f32.mrb[0].mxu0
    %v3611 = vadd.f32 0.0, %v3610
    %v3612 = vpop.f32.mrb[0].mxu0
    %v3613 = vadd.f32 0.0, %v3612
    %3614 = vdwg.mxu0
    %v3615 = vadd.f32 %v3469, %v3540
    %v3616 = vadd.f32 %v3470, %v3542
    %v3617 = vadd.f32 %v3471, %v3611
    %v3618 = vadd.f32 %v3472, %v3613
    %v3619 = vxor.u32 %v3615, 2147483648
    %v3620 = vmul.f32 %v3619, 1.442695
    %v3621 = vpow.pop %v3620
    %v3622 = vadd.f32 %v3621, 1.0
    %v3623 = vrcp.pop %v3622
    %v3624 = vmul.f32 1.0, %v3623
    %v3625 = vxor.u32 %v3616, 2147483648
    %v3626 = vmul.f32 %v3625, 1.442695
    %v3627 = vpow.pop %v3626
    %v3628 = vadd.f32 %v3627, 1.0
    %v3629 = vrcp.pop %v3628
    %v3630 = vmul.f32 1.0, %v3629
    %v3631 = vtanh.pop %v3617
    %v3632 = vxor.u32 %v3618, 2147483648
    %v3633 = vmul.f32 %v3632, 1.442695
    %v3634 = vpow.pop %v3633
    %v3635 = vadd.f32 %v3634, 1.0
    %v3636 = vrcp.pop %v3635
    %v3637 = vmul.f32 1.0, %v3636
    %v3638 = vmul.f32 %v3630, %v3468
    %v3639 = vmul.f32 %v3624, %v3631
    %v3640 = vadd.f32 %v3638, %v3639
    %v3641 = vtanh.pop %v3640
    %v3642 = vmul.f32 %v3637, %v3641
    %3643 = vst [vmem:[#allocation4] sm:$0xff] %v3642
    %3644 = vst [vmem:[#allocation5] sm:$0xff] %v3640
    %v3645 = vld [vmem:[#allocation4] sm:$0xff]
    %v3646 = vld [vmem:[#allocation5] sm:$0xff]
    %v3647 = vld [vmem:[%s1802] sm:$0xff]
    %v3648 = vld [vmem:[%s1802 + $0x8] sm:$0xff]
    %v3649 = vld [vmem:[%s1802 + $0x10] sm:$0xff]
    %v3650 = vld [vmem:[%s1802 + $0x18] sm:$0xff]
    %3651 = vmatprep.subr.mxu0 %v2046
    %3652 = vmatpush1.msra.mxu0 %v2045
    %3653 = vmatprep.subr.mxu0 %v2050
    %3654 = vmatpush1.msra.mxu0 %v2049
    %3655 = vmatprep.subr.mxu0 %v2054
    %3656 = vmatpush1.msra.mxu0 %v2053
    %3657 = vmatprep.subr.mxu0 %v2058
    %3658 = vmatpush1.msra.mxu0 %v2057
    %3659 = vmatprep.subr.mxu0 %v2062
    %3660 = vmatpush1.msra.mxu0 %v2061
    %3661 = vmatprep.subr.mxu0 %v2066
    %3662 = vmatpush1.msra.mxu0 %v2065
    %3663 = vmatprep.subr.mxu0 %v2070
    %3664 = vmatpush1.msra.mxu0 %v2069
    %3665 = vmatprep.subr.mxu0 %v2074
    %3666 = vmatpush1.msra.mxu0 %v2073
    %3667 = vmatprep.subr.mxu0 %v2078
    %3668 = vmatpush1.msra.mxu0 %v2077
    %3669 = vmatprep.subr.mxu0 %v2082
    %3670 = vmatpush1.msra.mxu0 %v2081
    %3671 = vmatprep.subr.mxu0 %v2086
    %3672 = vmatpush1.msra.mxu0 %v2085
    %3673 = vmatprep.subr.mxu0 %v2090
    %3674 = vmatpush1.msra.mxu0 %v2089
    %3675 = vmatprep.subr.mxu0 %v2094
    %3676 = vmatpush1.msra.mxu0 %v2093
    %3677 = vmatprep.subr.mxu0 %v2098
    %3678 = vmatpush1.msra.mxu0 %v2097
    %3679 = vmatprep.subr.mxu0 %v2102
    %3680 = vmatpush1.msra.mxu0 %v2101
    %3681 = vmatprep.subr.mxu0 %v2106
    %3682 = vmatpush1.msra.mxu0 %v2105
    %3683 = vmatprep.subr.mxu0 0.0
    %3684 = vmatpush1.msra.mxu0 0.0
    %3685 = vmatprep.subr.mxu0 0.0
    %3686 = vmatpush1.msra.mxu0 0.0
    %3687 = vmatprep.subr.mxu0 0.0
    %3688 = vmatpush1.msra.mxu0 0.0
    %3689 = vmatprep.subr.mxu0 0.0
    %3690 = vmatpush1.msra.mxu0 0.0
    %3691 = vmatprep.subr.mxu0 0.0
    %3692 = vmatpush1.msra.mxu0 0.0
    %3693 = vmatprep.subr.mxu0 0.0
    %3694 = vmatpush1.msra.mxu0 0.0
    %3695 = vmatprep.subr.mxu0 0.0
    %3696 = vmatpush1.msra.mxu0 0.0
    %3697 = vmatprep.subr.mxu0 0.0
    %3698 = vmatpush1.msra.mxu0 0.0
    %3699 = vmatprep.subr.mxu0 0.0
    %3700 = vmatpush1.msra.mxu0 0.0
    %3701 = vmatprep.subr.mxu0 0.0
    %3702 = vmatpush1.msra.mxu0 0.0
    %3703 = vmatprep.subr.mxu0 0.0
    %3704 = vmatpush1.msra.mxu0 0.0
    %3705 = vmatprep.subr.mxu0 0.0
    %3706 = vmatpush1.msra.mxu0 0.0
    %3707 = vmatprep.subr.mxu0 0.0
    %3708 = vmatpush1.msra.mxu0 0.0
    %3709 = vmatprep.subr.mxu0 0.0
    %3710 = vmatpush1.msra.mxu0 0.0
    %3711 = vmatprep.subr.mxu0 0.0
    %3712 = vmatpush1.msra.mxu0 0.0
    %3713 = vmatprep.subr.mxu0 0.0
    %3714 = vmatpush1.msra.mxu0 0.0
    %3715 = vmatprep.mubr.f32.mxu0 0.0
    %3716 = vmatmul.mubr.f32.gmra.mrb[0].mxu0 %v3645
    %v3717 = vpop.f32.mrb[0].mxu0
    %v3718 = vadd.f32 0.0, %v3717
    %v3719 = vpop.f32.mrb[0].mxu0
    %v3720 = vadd.f32 0.0, %v3719
    %3721 = vdwg.mxu0
    %3722 = vmatprep.subr.mxu0 %v2048
    %3723 = vmatpush1.msra.mxu0 %v2047
    %3724 = vmatprep.subr.mxu0 %v2052
    %3725 = vmatpush1.msra.mxu0 %v2051
    %3726 = vmatprep.subr.mxu0 %v2056
    %3727 = vmatpush1.msra.mxu0 %v2055
    %3728 = vmatprep.subr.mxu0 %v2060
    %3729 = vmatpush1.msra.mxu0 %v2059
    %3730 = vmatprep.subr.mxu0 %v2064
    %3731 = vmatpush1.msra.mxu0 %v2063
    %3732 = vmatprep.subr.mxu0 %v2068
    %3733 = vmatpush1.msra.mxu0 %v2067
    %3734 = vmatprep.subr.mxu0 %v2072
    %3735 = vmatpush1.msra.mxu0 %v2071
    %3736 = vmatprep.subr.mxu0 %v2076
    %3737 = vmatpush1.msra.mxu0 %v2075
    %3738 = vmatprep.subr.mxu0 %v2080
    %3739 = vmatpush1.msra.mxu0 %v2079
    %3740 = vmatprep.subr.mxu0 %v2084
    %3741 = vmatpush1.msra.mxu0 %v2083
    %3742 = vmatprep.subr.mxu0 %v2088
    %3743 = vmatpush1.msra.mxu0 %v2087
    %3744 = vmatprep.subr.mxu0 %v2092
    %3745 = vmatpush1.msra.mxu0 %v2091
    %3746 = vmatprep.subr.mxu0 %v2096
    %3747 = vmatpush1.msra.mxu0 %v2095
    %3748 = vmatprep.subr.mxu0 %v2100
    %3749 = vmatpush1.msra.mxu0 %v2099
    %3750 = vmatprep.subr.mxu0 %v2104
    %3751 = vmatpush1.msra.mxu0 %v2103
    %3752 = vmatprep.subr.mxu0 %v2108
    %3753 = vmatpush1.msra.mxu0 %v2107
    %3754 = vmatprep.subr.mxu0 0.0
    %3755 = vmatpush1.msra.mxu0 0.0
    %3756 = vmatprep.subr.mxu0 0.0
    %3757 = vmatpush1.msra.mxu0 0.0
    %3758 = vmatprep.subr.mxu0 0.0
    %3759 = vmatpush1.msra.mxu0 0.0
    %3760 = vmatprep.subr.mxu0 0.0
    %3761 = vmatpush1.msra.mxu0 0.0
    %3762 = vmatprep.subr.mxu0 0.0
    %3763 = vmatpush1.msra.mxu0 0.0
    %3764 = vmatprep.subr.mxu0 0.0
    %3765 = vmatpush1.msra.mxu0 0.0
    %3766 = vmatprep.subr.mxu0 0.0
    %3767 = vmatpush1.msra.mxu0 0.0
    %3768 = vmatprep.subr.mxu0 0.0
    %3769 = vmatpush1.msra.mxu0 0.0
    %3770 = vmatprep.subr.mxu0 0.0
    %3771 = vmatpush1.msra.mxu0 0.0
    %3772 = vmatprep.subr.mxu0 0.0
    %3773 = vmatpush1.msra.mxu0 0.0
    %3774 = vmatprep.subr.mxu0 0.0
    %3775 = vmatpush1.msra.mxu0 0.0
    %3776 = vmatprep.subr.mxu0 0.0
    %3777 = vmatpush1.msra.mxu0 0.0
    %3778 = vmatprep.subr.mxu0 0.0
    %3779 = vmatpush1.msra.mxu0 0.0
    %3780 = vmatprep.subr.mxu0 0.0
    %3781 = vmatpush1.msra.mxu0 0.0
    %3782 = vmatprep.subr.mxu0 0.0
    %3783 = vmatpush1.msra.mxu0 0.0
    %3784 = vmatprep.subr.mxu0 0.0
    %3785 = vmatpush1.msra.mxu0 0.0
    %3786 = vmatprep.mubr.f32.mxu0 0.0
    %3787 = vmatmul.mubr.f32.gmra.mrb[0].mxu0 %v3645
    %v3788 = vpop.f32.mrb[0].mxu0
    %v3789 = vadd.f32 0.0, %v3788
    %v3790 = vpop.f32.mrb[0].mxu0
    %v3791 = vadd.f32 0.0, %v3790
    %3792 = vdwg.mxu0
    %v3793 = vadd.f32 %v3647, %v3718
    %v3794 = vadd.f32 %v3648, %v3720
    %v3795 = vadd.f32 %v3649, %v3789
    %v3796 = vadd.f32 %v3650, %v3791
    %v3797 = vxor.u32 %v3793, 2147483648
    %v3798 = vmul.f32 %v3797, 1.442695
    %v3799 = vpow.pop %v3798
    %v3800 = vadd.f32 %v3799, 1.0
    %v3801 = vrcp.pop %v3800
    %v3802 = vmul.f32 1.0, %v3801
    %v3803 = vxor.u32 %v3794, 2147483648
    %v3804 = vmul.f32 %v3803, 1.442695
    %v3805 = vpow.pop %v3804
    %v3806 = vadd.f32 %v3805, 1.0
    %v3807 = vrcp.pop %v3806
    %v3808 = vmul.f32 1.0, %v3807
    %v3809 = vtanh.pop %v3795
    %v3810 = vxor.u32 %v3796, 2147483648
    %v3811 = vmul.f32 %v3810, 1.442695
    %v3812 = vpow.pop %v3811
    %v3813 = vadd.f32 %v3812, 1.0
    %v3814 = vrcp.pop %v3813
    %v3815 = vmul.f32 1.0, %v3814
    %v3816 = vmul.f32 %v3808, %v3646
    %v3817 = vmul.f32 %v3802, %v3809
    %v3818 = vadd.f32 %v3816, %v3817
    %v3819 = vtanh.pop %v3818
    %v3820 = vmul.f32 %v3815, %v3819
    %3821 = vst [vmem:[#allocation4] sm:$0xff] %v3820
    %3822 = vst [vmem:[#allocation5] sm:$0xff] %v3818
    %v3823 = vld [vmem:[#allocation4] sm:$0xff]
    %v3824 = vld [vmem:[#allocation13] sm:$0xff]
    %v3825 = vld [vmem:[#allocation13 + $0x8] sm:$0xff]
    %v3826 = vld [vmem:[#allocation13 + $0x10] sm:$0xff]
    %v3827 = vld [vmem:[#allocation13 + $0x18] sm:$0xff]
    %v3828 = vld [vmem:[#allocation13 + $0x20] sm:$0xff]
    %v3829 = vld [vmem:[#allocation13 + $0x28] sm:$0xff]
    %v3830 = vld [vmem:[#allocation13 + $0x30] sm:$0xff]
    %v3831 = vld [vmem:[#allocation13 + $0x38] sm:$0xff]
    %v3832 = vld [vmem:[#allocation13 + $0x40] sm:$0xff]
    %v3833 = vld [vmem:[#allocation13 + $0x48] sm:$0xff]
    %v3834 = vld [vmem:[#allocation13 + $0x50] sm:$0xff]
    %v3835 = vld [vmem:[#allocation13 + $0x58] sm:$0xff]
    %v3836 = vld [vmem:[#allocation13 + $0x60] sm:$0xff]
    %v3837 = vld [vmem:[#allocation13 + $0x68] sm:$0xff]
    %v3838 = vld [vmem:[#allocation13 + $0x70] sm:$0xff]
    %v3839 = vld [vmem:[#allocation13 + $0x78] sm:$0xff]
    %v3840 = vld [vmem:[%s8] sm:$0x1]
    %v3842 = vlaneseq
    %v3843 = vshrl.u32 %v3842, 7
    %v3844 = vsub.s32 0, %v3843
    %v3845 = vrot.slane %v3840, %v3844
    %3847 = vmatprep.subr.mxu0 0.0
    %3848 = vmatpush1.msra.mxu0 %v3824
    %3849 = vmatprep.subr.mxu0 0.0
    %3850 = vmatpush1.msra.mxu0 %v3825
    %3851 = vmatprep.subr.mxu0 0.0
    %3852 = vmatpush1.msra.mxu0 %v3826
    %3853 = vmatprep.subr.mxu0 0.0
    %3854 = vmatpush1.msra.mxu0 %v3827
    %3855 = vmatprep.subr.mxu0 0.0
    %3856 = vmatpush1.msra.mxu0 %v3828
    %3857 = vmatprep.subr.mxu0 0.0
    %3858 = vmatpush1.msra.mxu0 %v3829
    %3859 = vmatprep.subr.mxu0 0.0
    %3860 = vmatpush1.msra.mxu0 %v3830
    %3861 = vmatprep.subr.mxu0 0.0
    %3862 = vmatpush1.msra.mxu0 %v3831
    %3863 = vmatprep.subr.mxu0 0.0
    %3864 = vmatpush1.msra.mxu0 %v3832
    %3865 = vmatprep.subr.mxu0 0.0
    %3866 = vmatpush1.msra.mxu0 %v3833
    %3867 = vmatprep.subr.mxu0 0.0
    %3868 = vmatpush1.msra.mxu0 %v3834
    %3869 = vmatprep.subr.mxu0 0.0
    %3870 = vmatpush1.msra.mxu0 %v3835
    %3871 = vmatprep.subr.mxu0 0.0
    %3872 = vmatpush1.msra.mxu0 %v3836
    %3873 = vmatprep.subr.mxu0 0.0
    %3874 = vmatpush1.msra.mxu0 %v3837
    %3875 = vmatprep.subr.mxu0 0.0
    %3876 = vmatpush1.msra.mxu0 %v3838
    %3877 = vmatprep.subr.mxu0 0.0
    %3878 = vmatpush1.msra.mxu0 %v3839
    %3879 = vmatprep.subr.mxu0 0.0
    %3880 = vmatpush1.msra.mxu0 0.0
    %3881 = vmatprep.subr.mxu0 0.0
    %3882 = vmatpush1.msra.mxu0 0.0
    %3883 = vmatprep.subr.mxu0 0.0
    %3884 = vmatpush1.msra.mxu0 0.0
    %3885 = vmatprep.subr.mxu0 0.0
    %3886 = vmatpush1.msra.mxu0 0.0
    %3887 = vmatprep.subr.mxu0 0.0
    %3888 = vmatpush1.msra.mxu0 0.0
    %3889 = vmatprep.subr.mxu0 0.0
    %3890 = vmatpush1.msra.mxu0 0.0
    %3891 = vmatprep.subr.mxu0 0.0
    %3892 = vmatpush1.msra.mxu0 0.0
    %3893 = vmatprep.subr.mxu0 0.0
    %3894 = vmatpush1.msra.mxu0 0.0
    %3895 = vmatprep.subr.mxu0 0.0
    %3896 = vmatpush1.msra.mxu0 0.0
    %3897 = vmatprep.subr.mxu0 0.0
    %3898 = vmatpush1.msra.mxu0 0.0
    %3899 = vmatprep.subr.mxu0 0.0
    %3900 = vmatpush1.msra.mxu0 0.0
    %3901 = vmatprep.subr.mxu0 0.0
    %3902 = vmatpush1.msra.mxu0 0.0
    %3903 = vmatprep.subr.mxu0 0.0
    %3904 = vmatpush1.msra.mxu0 0.0
    %3905 = vmatprep.subr.mxu0 0.0
    %3906 = vmatpush1.msra.mxu0 0.0
    %3907 = vmatprep.subr.mxu0 0.0
    %3908 = vmatpush1.msra.mxu0 0.0
    %3909 = vmatprep.subr.mxu0 0.0
    %3910 = vmatpush1.msra.mxu0 0.0
    %3911 = vmatprep.mubr.f32.mxu0 0.0
    %3912 = vmatmul.mubr.f32.gmra.mrb[0].mxu0 %v3823
    %v3913 = vpop.f32.mrb[0].mxu0
    %v3914 = vadd.f32 %v3845, %v3913
    %v3915 = vpop.f32.mrb[0].mxu0
    %3916 = vdwg.mxu0
    %3917 = vst [vmem:[%s9] sm:$0xff] %v3914
    // Predicated region
    $region58: #{lstm_classifier_forward.1} parent=1 // pred_check
      _
    $region59: #{lstm_classifier_forward.1} parent=1 // pred_check_branch
      %3919 = sbr.rel (0) target = $region61
    $region60: #{lstm_classifier_forward.1} parent=1 // pred_region
      _
    $region61: #{lstm_classifier_forward.1} parent=1 // pred_fallthru
      _
    // Predicated region
    $region62: #{lstm_classifier_forward.1} parent=1 // pred_check
      _
    $region63: #{lstm_classifier_forward.1} parent=1 // pred_check_branch
      %3921 = sbr.rel (0) target = $region65
    $region64: #{lstm_classifier_forward.1} parent=1 // pred_region
      _
    $region65: #{lstm_classifier_forward.1} parent=1 // pred_fallthru
      _
    %3922 = vsyncpa [#allocation7], 1
    %3923 = vsyncpa [#allocation9], 1
    %3924 = vsyncpa [#allocation12], 1

</llo_original>
